<compile_context>
chip_gen: v7x
topology: tpu7x:2x2x1
jax: 0.10.0
libtpu: 0.0.40
codegen_flags: <defaults>
</compile_context>

<pallas_src>
import functools

import numpy as np
import jax
import jax.numpy as jnp
from jax.experimental import pallas as pl
from jax.experimental.pallas import tpu as pltpu


# Set to jnp.bfloat16 on v6e/v7x for higher MXU throughput (f32 accumulation is kept).
# Left at float32 so the numerics match the PyTorch reference.
MXU_DTYPE = jnp.float32
# Explicit scoped-VMEM cap (safe on v5e/v6e/v7x; demo shapes need far less).
VMEM_LIMIT_BYTES = 32 * 1024 * 1024


def _mm(a, b):
    """MXU matmul with f32 accumulation (optionally bf16 operands via MXU_DTYPE)."""
    return jnp.dot(a.astype(MXU_DTYPE), b.astype(MXU_DTYPE),
                   preferred_element_type=jnp.float32)


def _ln(x, g, b, eps=1e-5):
    """LayerNorm over the channel (last) dim.  g, b broadcast from (1, C)."""
    mu = jnp.mean(x, axis=-1, keepdims=True)
    var = jnp.mean((x - mu) ** 2, axis=-1, keepdims=True)
    return (x - mu) * jax.lax.rsqrt(var + eps) * g + b


# ----------------------------------------------------------------------------------
# Kernel 1: 1x1 conv (token-wise matmul) + BatchNorm batch statistics
# ----------------------------------------------------------------------------------
def _conv_stats_kernel(x_ref, w_ref, b_ref, y_ref, sum_ref, ssq_ref):
    # x_ref: (1, T, Cs)  w_ref: (Cs, C)  b_ref: (1, C)
    # y_ref: (1, T, C)   sum_ref/ssq_ref: (1, C) accumulated over the batch grid axis.
    x = x_ref[0].astype(jnp.float32)                    # (T, Cs)
    y = _mm(x, w_ref[...]) + b_ref[...]                 # (T, C)
    y_ref[...] = y[None].astype(y_ref.dtype)

    @pl.when(pl.program_id(0) == 0)
    def _init():
        sum_ref[...] = jnp.zeros_like(sum_ref)
        ssq_ref[...] = jnp.zeros_like(ssq_ref)

    sum_ref[...] += jnp.sum(y, axis=0, keepdims=True)
    ssq_ref[...] += jnp.sum(y * y, axis=0, keepdims=True)


# ----------------------------------------------------------------------------------
# Kernel 2: fused BN-apply + ReLU + pos-embed + attention + out-proj + LN + FFN + LN
# ----------------------------------------------------------------------------------
def _proj_block_kernel(y_ref, bns_ref, bnsh_ref, pos_ref, qry_ref,
                       qw_ref, qb_ref, kvw_ref, kvb_ref, pw_ref, pb_ref,
                       ln1g_ref, ln1b_ref, f1w_ref, f1b_ref, f2w_ref, f2b_ref,
                       ln2g_ref, ln2b_ref, o_ref, *, num_heads, attn_scale):
    y = y_ref[0].astype(jnp.float32)                    # (T, C) conv output tokens
    T, C = y.shape
    hd = C // num_heads

    # BatchNorm (precomputed per-channel scale/shift) + ReLU + positional embedding.
    pred = jnp.maximum(y * bns_ref[...] + bnsh_ref[...], 0.0) + pos_ref[...]   # (T, C)

    # q from the (batch-independent) learned query tokens; k/v from pred with one
    # fused (C, 2C) matmul to feed the MXU a wider N.
    q = _mm(qry_ref[...], qw_ref[...]) + qb_ref[...]    # (T, C)
    kv = _mm(pred, kvw_ref[...]) + kvb_ref[...]         # (T, 2C)
    k = kv[:, :C]
    v = kv[:, C:]

    # Multi-head attention; heads split in VMEM with static slices (no HBM transposes).
    # attn_scale (= head_dim**-0.5 * softmax_scale) is folded into q (smaller operand).
    head_outs = []
    for h in range(num_heads):          # static unroll
        sl = slice(h * hd, (h + 1) * hd)
        qh = q[:, sl] * attn_scale                      # (T, hd)
        kh = k[:, sl]
        vh = v[:, sl]
        s = _mm(qh, kh.T)                               # (T, T)
        s = s - jnp.max(s, axis=-1, keepdims=True)
        e = jnp.exp(s)
        p = e * pl.reciprocal(jnp.sum(e, axis=-1, keepdims=True), approx=True)
        head_outs.append(_mm(p, vh))                    # (T, hd)
    attn = jnp.concatenate(head_outs, axis=1)           # (T, C)

    # Output projection + residual (residual is pred_s_token, per the reference).
    fea = _mm(attn, pw_ref[...]) + pb_ref[...] + pred   # (T, C)

    # norm -> FFN (fc1+ReLU, fc2) with residual on the *normed* input -> norm_2.
    h1 = _ln(fea, ln1g_ref[...], ln1b_ref[...])
    f1 = jnp.maximum(_mm(h1, f1w_ref[...]) + f1b_ref[...], 0.0)
    f2 = _mm(f1, f2w_ref[...]) + f2b_ref[...]
    out = _ln(h1 + f2, ln2g_ref[...], ln2b_ref[...])

    o_ref[...] = out[None].astype(o_ref.dtype)


# ----------------------------------------------------------------------------------
# Kernel 3: (optional DC removal) + normalize-along-C + SSE + cosine accumulation
# ----------------------------------------------------------------------------------
def _loss_kernel(s_ref, t_ref, sse_ref, cos_ref, *, remove_dc, eps):
    s = s_ref[0].astype(jnp.float32)                    # (T, C)
    t = t_ref[0].astype(jnp.float32)
    if remove_dc:
        # == DCT2 -> zero (0,0) coefficient -> inverse DCT2 (exact; see __main__ check).
        s = s - jnp.mean(s, axis=0, keepdims=True)
        t = t - jnp.mean(t, axis=0, keepdims=True)
    sn = jnp.sqrt(jnp.sum(s * s, axis=-1, keepdims=True))
    tn = jnp.sqrt(jnp.sum(t * t, axis=-1, keepdims=True))
    shat = s / jnp.maximum(sn, eps)                     # F.normalize(dim=channel)
    that = t / jnp.maximum(tn, eps)
    d = shat - that

    @pl.when(pl.program_id(0) == 0)
    def _init():
        sse_ref[...] = jnp.zeros_like(sse_ref)
        cos_ref[...] = jnp.zeros_like(cos_ref)

    sse_ref[...] += jnp.sum(d * d).reshape(1, 1)
    cos_ref[...] += jnp.sum(shat * that).reshape(1, 1)


# ----------------------------------------------------------------------------------
# AttentionProjector forward: 2 fused pallas_calls + tiny (C,)-sized BN glue
# ----------------------------------------------------------------------------------
def attention_projector(params, x_tok, num_heads, softmax_scale):
    """x_tok: (B, T, Cs) student tokens -> (B, T, C) projected tokens."""
    B, T, Cs = x_tok.shape
    C = params["conv_w"].shape[1]
    F_dim = params["fc1_w"].shape[1]
    hd = C // num_heads

    # ---- K1: 1x1 conv + BatchNorm batch statistics (accumulated over the grid) ----
    y, ch_sum, ch_ssq = pl.pallas_call(
        _conv_stats_kernel,
        out_shape=(jax.ShapeDtypeStruct((B, T, C), jnp.float32),
                   jax.ShapeDtypeStruct((1, C), jnp.float32),
                   jax.ShapeDtypeStruct((1, C), jnp.float32)),
        grid=(B,),
        in_specs=[
            pl.BlockSpec((1, T, Cs), lambda b: (b, 0, 0)),
            pl.BlockSpec((Cs, C), lambda b: (0, 0)),
            pl.BlockSpec((1, C), lambda b: (0, 0)),
        ],
        out_specs=(pl.BlockSpec((1, T, C), lambda b: (b, 0, 0)),
                   pl.BlockSpec((1, C), lambda b: (0, 0)),
                   pl.BlockSpec((1, C), lambda b: (0, 0))),
        compiler_params=pltpu.CompilerParams(
            dimension_semantics=("arbitrary",),          # stats accumulate across b
            vmem_limit_bytes=VMEM_LIMIT_BYTES),
    )(x_tok, params["conv_w"], params["conv_b"].reshape(1, C))

    # ---- BN batch stats -> per-channel scale/shift (C-sized, plain-JAX glue) ----
    M = B * T
    mean = ch_sum[0] / M
    var = jnp.maximum(ch_ssq[0] / M - mean * mean, 0.0)  # biased var (training mode)
    inv = params["bn_gamma"] * jax.lax.rsqrt(var + 1e-5)
    bn_scale = inv.reshape(1, C)
    bn_shift = (params["bn_beta"] - mean * inv).reshape(1, C)

    # Fused k/v weights -> one (C, 2C) matmul inside the kernel.
    kv_w = jnp.concatenate([params["k_w"], params["v_w"]], axis=1)
    kv_b = jnp.concatenate([params["k_b"], params["v_b"]]).reshape(1, 2 * C)

    attn_scale = float(hd ** -0.5) * float(softmax_scale)

    tok = lambda b: (b, 0, 0)
    row = lambda b: (0, 0)

    # TODO(synk): for production channel counts (C ~ 1024, ffn ~ 4096) tile the fc1/fc2 and
    # q/kv/proj weights over K/N (and single-buffer the grid-invariant weight blocks) so the
    # per-step VMEM footprint stays inside v7x's 64 MiB.
    out = pl.pallas_call(
        functools.partial(_proj_block_kernel,
                          num_heads=num_heads, attn_scale=attn_scale),
        out_shape=jax.ShapeDtypeStruct((B, T, C), jnp.float32),
        grid=(B,),
        in_specs=[
            pl.BlockSpec((1, T, C), tok),        # y (conv output tokens)
            pl.BlockSpec((1, C), row),           # bn_scale
            pl.BlockSpec((1, C), row),           # bn_shift
            pl.BlockSpec((T, C), row),           # pos_embed
            pl.BlockSpec((T, C), row),           # query weight (self-query tokens)
            pl.BlockSpec((C, C), row),           # q_w
            pl.BlockSpec((1, C), row),           # q_b
            pl.BlockSpec((C, 2 * C), row),       # kv_w
            pl.BlockSpec((1, 2 * C), row),       # kv_b
            pl.BlockSpec((C, C), row),           # proj_w
            pl.BlockSpec((1, C), row),           # proj_b
            pl.BlockSpec((1, C), row),           # ln1_g
            pl.BlockSpec((1, C), row),           # ln1_b
            pl.BlockSpec((C, F_dim), row),       # fc1_w
            pl.BlockSpec((1, F_dim), row),       # fc1_b
            pl.BlockSpec((F_dim, C), row),       # fc2_w
            pl.BlockSpec((1, C), row),           # fc2_b
            pl.BlockSpec((1, C), row),           # ln2_g
            pl.BlockSpec((1, C), row),           # ln2_b
        ],
        out_specs=pl.BlockSpec((1, T, C), tok),
        compiler_params=pltpu.CompilerParams(
            dimension_semantics=("parallel",),
            vmem_limit_bytes=VMEM_LIMIT_BYTES),
    )(y, bn_scale, bn_shift, params["pos_embed"], params["query_w"],
      params["q_w"], params["q_b"].reshape(1, C), kv_w, kv_b,
      params["proj_w"], params["proj_b"].reshape(1, C),
      params["ln1_g"].reshape(1, C), params["ln1_b"].reshape(1, C),
      params["fc1_w"], params["fc1_b"].reshape(1, F_dim),
      params["fc2_w"], params["fc2_b"].reshape(1, C),
      params["ln2_g"].reshape(1, C), params["ln2_b"].reshape(1, C))
    return out


# ----------------------------------------------------------------------------------
# Loss wrapper (accumulating SSE + cosine over per-batch blocks)
# ----------------------------------------------------------------------------------
def norm_mse_cos_pallas(s_tok, t_tok, remove_dc, eps=1e-12):
    """s_tok, t_tok: (B, T, C) -> (sum-squared-error, mean-cosine-similarity)."""
    B, T, C = s_tok.shape
    sse, cos = pl.pallas_call(
        functools.partial(_loss_kernel, remove_dc=remove_dc, eps=eps),
        out_shape=(jax.ShapeDtypeStruct((1, 1), jnp.float32),
                   jax.ShapeDtypeStruct((1, 1), jnp.float32)),
        grid=(B,),
        in_specs=[pl.BlockSpec((1, T, C), lambda b: (b, 0, 0)),
                  pl.BlockSpec((1, T, C), lambda b: (b, 0, 0))],
        out_specs=(pl.BlockSpec((1, 1), lambda b: (0, 0)),
                   pl.BlockSpec((1, 1), lambda b: (0, 0))),
        compiler_params=pltpu.CompilerParams(
            dimension_semantics=("arbitrary",),
            vmem_limit_bytes=VMEM_LIMIT_BYTES),
    )(s_tok, t_tok)
    return sse[0, 0], cos[0, 0] / (B * T)


# ----------------------------------------------------------------------------------
# ScaleKD forward
# ----------------------------------------------------------------------------------
def scalekd_forward(p0, p1, preds_S, preds_T, alpha, softmax_scale, num_heads):
    B, Ct, H, W = preds_T.shape
    T = H * W

    # Single NCHW -> (B, T, C) layout conversion for student and teacher (reused twice).
    x_tok = preds_S.transpose(0, 2, 3, 1).reshape(B, T, preds_S.shape[1])
    t_tok = preds_T.transpose(0, 2, 3, 1).reshape(B, T, Ct)

    s_spat = attention_projector(p0, x_tok, num_heads, softmax_scale[0])   # (B, T, Ct)
    s_freq = attention_projector(p1, x_tok, num_heads, softmax_scale[1])   # (B, T, Ct)

    # Spatial loss: normalize along C, sum-MSE / B * alpha0, mean cosine.
    sse_s, cos_s = norm_mse_cos_pallas(s_spat, t_tok, remove_dc=False)
    # Frequency loss: DCT -> zero DC -> IDCT == subtract per-(b,c) spatial mean (fused).
    sse_f, cos_f = norm_mse_cos_pallas(s_freq, t_tok, remove_dc=True)

    spat_loss = sse_s / B * alpha[0]
    freq_loss = sse_f / B * alpha[1]
    return {
        "spatial_loss": spat_loss,
        "frequency_loss": freq_loss,
        "spatial_similarity": cos_s,
        "frequency_similarity": cos_f,
        "loss": spat_loss + freq_loss,
    }


# ----------------------------------------------------------------------------------
# Deterministic synthetic parameter init
# ----------------------------------------------------------------------------------
def init_projector_params(key, Cs, C, T, ffn_dim):
    ks = jax.random.split(key, 10)

    def w(k, shape, std=0.02):
        return jax.random.normal(k, shape, jnp.float32) * std

    return dict(
        conv_w=w(ks[0], (Cs, C)), conv_b=jnp.zeros((C,), jnp.float32),
        bn_gamma=jnp.ones((C,), jnp.float32), bn_beta=jnp.zeros((C,), jnp.float32),
        pos_embed=w(ks[1], (T, C), 0.02),          # trunc_normal(std=0.02) analogue
        query_w=w(ks[2], (T, C), 1.0),             # nn.Embedding default N(0, 1)
        q_w=w(ks[3], (C, C)), q_b=jnp.zeros((C,), jnp.float32),
        k_w=w(ks[4], (C, C)), k_b=jnp.zeros((C,), jnp.float32),
        v_w=w(ks[5], (C, C)), v_b=jnp.zeros((C,), jnp.float32),
        proj_w=w(ks[6], (C, C)), proj_b=jnp.zeros((C,), jnp.float32),
        fc1_w=w(ks[7], (C, ffn_dim)), fc1_b=jnp.zeros((ffn_dim,), jnp.float32),
        fc2_w=w(ks[8], (ffn_dim, C)), fc2_b=jnp.zeros((C,), jnp.float32),
        ln1_g=jnp.ones((C,), jnp.float32), ln1_b=jnp.zeros((C,), jnp.float32),
        ln2_g=jnp.ones((C,), jnp.float32), ln2_b=jnp.zeros((C,), jnp.float32),
    )


def _verify_dc_removal_equivalence(H, W):
    """Check (in float64 numpy) that zeroing the (0,0) coefficient of the reference
    DCT-II and inverting equals subtracting the spatial mean."""
    assert H == W
    n = np.arange(H); k = np.arange(H)
    D = 2.0 * np.cos(np.pi * np.outer(2 * n + 1, k) / (2.0 * H))              # (n, k)
    wgt = np.ones(H); wgt[0] = 0.5
    Dinv = (np.cos(np.pi * np.outer(k, 2 * n + 1) / (2.0 * H)) * wgt[:, None]) / H
    assert np.allclose(D @ Dinv, np.eye(H), atol=1e-8)

    def dct2(x, M):  # transform along W then H, like the reference DCT.forward/inverse
        y = x @ M
        return (y.swapaxes(-1, -2) @ M).swapaxes(-1, -2)

    rng = np.random.RandomState(0)
    x = rng.randn(H, W)
    F = dct2(x, D)
    F[0, 0] = 0.0
    x_rec = dct2(F, Dinv)
    assert np.allclose(x_rec, x - x.mean(), atol=1e-8)


if __name__ == "__main__":
    # Small config consistent with the module: student (B, Cs, H, W), teacher (B, Ct, H, W),
    # query_hw = pos_hw = (H, W), pos_dims = teacher_dims.
    B, Cs, Ct, H, W = 2, 16, 32, 8, 8
    num_heads = 4                       # head_dim = 8
    alpha = (0.08, 0.06)
    softmax_scale = (1.0, 1.0)

    # Verify the DC-removal simplification used in the frequency-loss kernel.
    _verify_dc_removal_equivalence(H, W)

    key = jax.random.PRNGKey(0)
    k_p0, k_p1, k_s, k_t = jax.random.split(key, 4)
    p0 = init_projector_params(k_p0, Cs, Ct, H * W, 4 * Ct)
    p1 = init_projector_params(k_p1, Cs, Ct, H * W, 4 * Ct)

    preds_S = jax.random.normal(k_s, (B, Cs, H, W), jnp.float32)
    preds_T = jax.random.normal(k_t, (B, Ct, H, W), jnp.float32)

    forward = jax.jit(scalekd_forward,
                      static_argnames=("alpha", "softmax_scale", "num_heads"))
    out = forward(p0, p1, preds_S, preds_T,
                  alpha=alpha, softmax_scale=softmax_scale, num_heads=num_heads)
    out = jax.tree_util.tree_map(jax.block_until_ready, out)

    for name, v in out.items():
        assert jnp.isfinite(v).all(), name
    print("KERNEL_OK")
</pallas_src>

<mosaic_0001>
module attributes {stable_mosaic.version = 11 : i64} {
  func.func @_conv_stats_kernel(%arg0: i32, %arg1: memref<1x64x16xf32, #tpu.memory_space<vmem>>, %arg2: memref<16x32xf32, #tpu.memory_space<vmem>>, %arg3: memref<1x32xf32, #tpu.memory_space<vmem>>, %arg4: memref<1x64x32xf32, #tpu.memory_space<vmem>>, %arg5: memref<1x32xf32, #tpu.memory_space<vmem>>, %arg6: memref<1x32xf32, #tpu.memory_space<vmem>>) attributes {dimension_semantics = [#tpu.dimension_semantics<arbitrary>], iteration_bounds = array<i64: 2>, scalar_prefetch = 0 : i64, scratch_operands = 0 : i64, tpu.core_type = #tpu.core_type<tc>, window_params = [{transform_indices = @transform_0, window_bounds = array<i64: 1, 64, 16>}, {pipeline_mode = #tpu.pipeline_mode<synchronous>, transform_indices = @transform_1, window_bounds = array<i64: 16, 32>}, {pipeline_mode = #tpu.pipeline_mode<synchronous>, transform_indices = @transform_2, window_bounds = array<i64: 1, 32>}, {transform_indices = @transform_3, window_bounds = array<i64: 1, 64, 32>}, {pipeline_mode = #tpu.pipeline_mode<synchronous>, transform_indices = @transform_4, window_bounds = array<i64: 1, 32>}, {pipeline_mode = #tpu.pipeline_mode<synchronous>, transform_indices = @transform_5, window_bounds = array<i64: 1, 32>}]} {
    %c0 = arith.constant 0 : index
    %c0_0 = arith.constant 0 : index
    %c0_1 = arith.constant 0 : index
    %0 = vector.load %arg1[%c0, %c0_0, %c0_1] : memref<1x64x16xf32, #tpu.memory_space<vmem>>, vector<1x64x16xf32>
    %1 = vector.shape_cast %0 : vector<1x64x16xf32> to vector<64x16xf32>
    %c0_2 = arith.constant 0 : index
    %c0_3 = arith.constant 0 : index
    %2 = vector.load %arg2[%c0_2, %c0_3] : memref<16x32xf32, #tpu.memory_space<vmem>>, vector<16x32xf32>
    %cst = arith.constant dense<0.000000e+00> : vector<64x32xf32>
    %3 = tpu.matmul %1, %2, %cst {dimension_numbers = #tpu.dot_dimension_numbers<[1], [0], [0], [1], [0, 0, 1, 1], [], []>} : vector<64x16xf32>, vector<16x32xf32>, vector<64x32xf32> -> vector<64x32xf32>
    %c0_4 = arith.constant 0 : index
    %c0_5 = arith.constant 0 : index
    %4 = vector.load %arg3[%c0_4, %c0_5] : memref<1x32xf32, #tpu.memory_space<vmem>>, vector<1x32xf32>
    %5 = vector.broadcast %4 : vector<1x32xf32> to vector<64x32xf32>
    %6 = arith.addf %3, %5 : vector<64x32xf32>
    %7 = vector.shape_cast %6 : vector<64x32xf32> to vector<1x64x32xf32>
    %c0_6 = arith.constant 0 : index
    %c0_7 = arith.constant 0 : index
    %c0_8 = arith.constant 0 : index
    %8 = vector.load %arg4[%c0_6, %c0_7, %c0_8] : memref<1x64x32xf32, #tpu.memory_space<vmem>>, vector<1x64x32xf32>
    tpu.vector_store %arg4[%c0_6, %c0_7, %c0_8], %7 {strides = array<i32>} : memref<1x64x32xf32, #tpu.memory_space<vmem>>, vector<1x64x32xf32>,
    %c0_i32 = arith.constant 0 : i32
    %9 = arith.cmpi eq, %arg0, %c0_i32 : i32
    %10 = arith.extui %9 : i1 to i32
    %c0_i32_9 = arith.constant 0 : i32
    %11 = arith.cmpi ne, %10, %c0_i32_9 : i32
    scf.if %11 {
      %cst_20 = arith.constant 0.000000e+00 : f32
      %23 = vector.broadcast %cst_20 : f32 to vector<1x32xf32>
      %c0_21 = arith.constant 0 : index
      %c0_22 = arith.constant 0 : index
      %24 = vector.load %arg5[%c0_21, %c0_22] : memref<1x32xf32, #tpu.memory_space<vmem>>, vector<1x32xf32>
      tpu.vector_store %arg5[%c0_21, %c0_22], %23 {strides = array<i32>} : memref<1x32xf32, #tpu.memory_space<vmem>>, vector<1x32xf32>,
      %cst_23 = arith.constant 0.000000e+00 : f32
      %25 = vector.broadcast %cst_23 : f32 to vector<1x32xf32>
      %c0_24 = arith.constant 0 : index
      %c0_25 = arith.constant 0 : index
      %26 = vector.load %arg6[%c0_24, %c0_25] : memref<1x32xf32, #tpu.memory_space<vmem>>, vector<1x32xf32>
      tpu.vector_store %arg6[%c0_24, %c0_25], %25 {strides = array<i32>} : memref<1x32xf32, #tpu.memory_space<vmem>>, vector<1x32xf32>,
    } else {
    }
    %c0_10 = arith.constant 0 : index
    %c0_11 = arith.constant 0 : index
    %12 = vector.load %arg5[%c0_10, %c0_11] : memref<1x32xf32, #tpu.memory_space<vmem>>, vector<1x32xf32>
    %cst_12 = arith.constant dense<0.000000e+00> : vector<32xf32>
    %13 = vector.multi_reduction <add>, %6, %cst_12 [0] : vector<64x32xf32> to vector<32xf32>
    %14 = vector.shape_cast %13 : vector<32xf32> to vector<1x32xf32>
    %15 = arith.addf %12, %14 : vector<1x32xf32>
    %c0_13 = arith.constant 0 : index
    %c0_14 = arith.constant 0 : index
    %16 = vector.load %arg5[%c0_13, %c0_14] : memref<1x32xf32, #tpu.memory_space<vmem>>, vector<1x32xf32>
    tpu.vector_store %arg5[%c0_13, %c0_14], %15 {strides = array<i32>} : memref<1x32xf32, #tpu.memory_space<vmem>>, vector<1x32xf32>,
    %c0_15 = arith.constant 0 : index
    %c0_16 = arith.constant 0 : index
    %17 = vector.load %arg6[%c0_15, %c0_16] : memref<1x32xf32, #tpu.memory_space<vmem>>, vector<1x32xf32>
    %18 = arith.mulf %6, %6 : vector<64x32xf32>
    %cst_17 = arith.constant dense<0.000000e+00> : vector<32xf32>
    %19 = vector.multi_reduction <add>, %18, %cst_17 [0] : vector<64x32xf32> to vector<32xf32>
    %20 = vector.shape_cast %19 : vector<32xf32> to vector<1x32xf32>
    %21 = arith.addf %17, %20 : vector<1x32xf32>
    %c0_18 = arith.constant 0 : index
    %c0_19 = arith.constant 0 : index
    %22 = vector.load %arg6[%c0_18, %c0_19] : memref<1x32xf32, #tpu.memory_space<vmem>>, vector<1x32xf32>
    tpu.vector_store %arg6[%c0_18, %c0_19], %21 {strides = array<i32>} : memref<1x32xf32, #tpu.memory_space<vmem>>, vector<1x32xf32>,
    return
  }
  func.func @transform_0(%arg0: i32) -> (i32, i32, i32) {
    %c0_i32 = arith.constant 0 : i32
    %c0_i32_0 = arith.constant 0 : i32
    %c0_i32_1 = arith.constant 0 : i32
    return %arg0, %c0_i32, %c0_i32_0 : i32, i32, i32
  }
  func.func @transform_1(%arg0: i32) -> (i32, i32) {
    %c0_i32 = arith.constant 0 : i32
    %c0_i32_0 = arith.constant 0 : i32
    %c0_i32_1 = arith.constant 0 : i32
    return %c0_i32, %c0_i32_0 : i32, i32
  }
  func.func @transform_2(%arg0: i32) -> (i32, i32) {
    %c0_i32 = arith.constant 0 : i32
    %c0_i32_0 = arith.constant 0 : i32
    %c0_i32_1 = arith.constant 0 : i32
    return %c0_i32, %c0_i32_0 : i32, i32
  }
  func.func @transform_3(%arg0: i32) -> (i32, i32, i32) {
    %c0_i32 = arith.constant 0 : i32
    %c0_i32_0 = arith.constant 0 : i32
    %c0_i32_1 = arith.constant 0 : i32
    return %arg0, %c0_i32, %c0_i32_0 : i32, i32, i32
  }
  func.func @transform_4(%arg0: i32) -> (i32, i32) {
    %c0_i32 = arith.constant 0 : i32
    %c0_i32_0 = arith.constant 0 : i32
    %c0_i32_1 = arith.constant 0 : i32
    return %c0_i32, %c0_i32_0 : i32, i32
  }
  func.func @transform_5(%arg0: i32) -> (i32, i32) {
    %c0_i32 = arith.constant 0 : i32
    %c0_i32_0 = arith.constant 0 : i32
    %c0_i32_1 = arith.constant 0 : i32
    return %c0_i32, %c0_i32_0 : i32, i32
  }
}

module attributes {stable_mosaic.version = 11 : i64} {
  func.func @_loss_kernel(%arg0: i32, %arg1: memref<1x64x32xf32, #tpu.memory_space<vmem>>, %arg2: memref<1x64x32xf32, #tpu.memory_space<vmem>>, %arg3: memref<1x1xf32, #tpu.memory_space<vmem>>, %arg4: memref<1x1xf32, #tpu.memory_space<vmem>>) attributes {dimension_semantics = [#tpu.dimension_semantics<arbitrary>], iteration_bounds = array<i64: 2>, scalar_prefetch = 0 : i64, scratch_operands = 0 : i64, tpu.core_type = #tpu.core_type<tc>, window_params = [{transform_indices = @transform_0, window_bounds = array<i64: 1, 64, 32>}, {transform_indices = @transform_1, window_bounds = array<i64: 1, 64, 32>}, {pipeline_mode = #tpu.pipeline_mode<synchronous>, transform_indices = @transform_2, window_bounds = array<i64: 1, 1>}, {pipeline_mode = #tpu.pipeline_mode<synchronous>, transform_indices = @transform_3, window_bounds = array<i64: 1, 1>}]} {
    %c0 = arith.constant 0 : index
    %c0_0 = arith.constant 0 : index
    %c0_1 = arith.constant 0 : index
    %0 = vector.load %arg1[%c0, %c0_0, %c0_1] : memref<1x64x32xf32, #tpu.memory_space<vmem>>, vector<1x64x32xf32>
    %1 = vector.shape_cast %0 : vector<1x64x32xf32> to vector<64x32xf32>
    %c0_2 = arith.constant 0 : index
    %c0_3 = arith.constant 0 : index
    %c0_4 = arith.constant 0 : index
    %2 = vector.load %arg2[%c0_2, %c0_3, %c0_4] : memref<1x64x32xf32, #tpu.memory_space<vmem>>, vector<1x64x32xf32>
    %3 = vector.shape_cast %2 : vector<1x64x32xf32> to vector<64x32xf32>
    %cst = arith.constant dense<0.000000e+00> : vector<32xf32>
    %4 = vector.multi_reduction <add>, %1, %cst [0] : vector<64x32xf32> to vector<32xf32>
    %5 = vector.shape_cast %4 : vector<32xf32> to vector<1x32xf32>
    %cst_5 = arith.constant 6.400000e+01 : f32
    %6 = vector.broadcast %cst_5 : f32 to vector<1x32xf32>
    %7 = arith.divf %5, %6 : vector<1x32xf32>
    %8 = vector.broadcast %7 : vector<1x32xf32> to vector<64x32xf32>
    %9 = arith.subf %1, %8 : vector<64x32xf32>
    %cst_6 = arith.constant dense<0.000000e+00> : vector<32xf32>
    %10 = vector.multi_reduction <add>, %3, %cst_6 [0] : vector<64x32xf32> to vector<32xf32>
    %11 = vector.shape_cast %10 : vector<32xf32> to vector<1x32xf32>
    %cst_7 = arith.constant 6.400000e+01 : f32
    %12 = vector.broadcast %cst_7 : f32 to vector<1x32xf32>
    %13 = arith.divf %11, %12 : vector<1x32xf32>
    %14 = vector.broadcast %13 : vector<1x32xf32> to vector<64x32xf32>
    %15 = arith.subf %3, %14 : vector<64x32xf32>
    %16 = arith.mulf %9, %9 : vector<64x32xf32>
    %cst_8 = arith.constant dense<0.000000e+00> : vector<64xf32>
    %17 = vector.multi_reduction <add>, %16, %cst_8 [1] : vector<64x32xf32> to vector<64xf32>
    %18 = vector.shape_cast %17 : vector<64xf32> to vector<64x1xf32>
    %19 = math.sqrt %18 : vector<64x1xf32>
    %20 = arith.mulf %15, %15 : vector<64x32xf32>
    %cst_9 = arith.constant dense<0.000000e+00> : vector<64xf32>
    %21 = vector.multi_reduction <add>, %20, %cst_9 [1] : vector<64x32xf32> to vector<64xf32>
    %22 = vector.shape_cast %21 : vector<64xf32> to vector<64x1xf32>
    %23 = math.sqrt %22 : vector<64x1xf32>
    %cst_10 = arith.constant 9.99999996E-13 : f32
    %24 = vector.broadcast %cst_10 : f32 to vector<64x1xf32>
    %25 = arith.maximumf %19, %24 : vector<64x1xf32>
    %26 = vector.broadcast %25 : vector<64x1xf32> to vector<64x32xf32>
    %27 = arith.divf %9, %26 : vector<64x32xf32>
    %cst_11 = arith.constant 9.99999996E-13 : f32
    %28 = vector.broadcast %cst_11 : f32 to vector<64x1xf32>
    %29 = arith.maximumf %23, %28 : vector<64x1xf32>
    %30 = vector.broadcast %29 : vector<64x1xf32> to vector<64x32xf32>
    %31 = arith.divf %15, %30 : vector<64x32xf32>
    %32 = arith.subf %27, %31 : vector<64x32xf32>
    %c0_i32 = arith.constant 0 : i32
    %33 = arith.cmpi eq, %arg0, %c0_i32 : i32
    %34 = arith.extui %33 : i1 to i32
    %c0_i32_12 = arith.constant 0 : i32
    %35 = arith.cmpi ne, %34, %c0_i32_12 : i32
    scf.if %35 {
      %cst_23 = arith.constant 0.000000e+00 : f32
      %54 = vector.broadcast %cst_23 : f32 to vector<1x1xf32>
      %c0_24 = arith.constant 0 : index
      %c0_25 = arith.constant 0 : index
      %55 = vector.load %arg3[%c0_24, %c0_25] : memref<1x1xf32, #tpu.memory_space<vmem>>, vector<1x1xf32>
      tpu.vector_store %arg3[%c0_24, %c0_25], %54 {strides = array<i32>} : memref<1x1xf32, #tpu.memory_space<vmem>>, vector<1x1xf32>,
      %cst_26 = arith.constant 0.000000e+00 : f32
      %56 = vector.broadcast %cst_26 : f32 to vector<1x1xf32>
      %c0_27 = arith.constant 0 : index
      %c0_28 = arith.constant 0 : index
      %57 = vector.load %arg4[%c0_27, %c0_28] : memref<1x1xf32, #tpu.memory_space<vmem>>, vector<1x1xf32>
      tpu.vector_store %arg4[%c0_27, %c0_28], %56 {strides = array<i32>} : memref<1x1xf32, #tpu.memory_space<vmem>>, vector<1x1xf32>,
    } else {
    }
    %c0_13 = arith.constant 0 : index
    %c0_14 = arith.constant 0 : index
    %36 = vector.load %arg3[%c0_13, %c0_14] : memref<1x1xf32, #tpu.memory_space<vmem>>, vector<1x1xf32>
    %37 = arith.mulf %32, %32 : vector<64x32xf32>
    %38 = vector.shape_cast %37 : vector<64x32xf32> to vector<1x64x32xf32>
    %cst_15 = arith.constant dense<0.000000e+00> : vector<1xf32>
    %39 = vector.multi_reduction <add>, %38, %cst_15 [1, 2] : vector<1x64x32xf32> to vector<1xf32>
    %40 = vector.shape_cast %39 : vector<1xf32> to vector<1x1x1xf32>
    %41 = vector.extract %40[0, 0, 0] : f32 from vector<1x1x1xf32>
    %42 = vector.broadcast %41 : f32 to vector<1x1xf32>
    %43 = arith.addf %36, %42 : vector<1x1xf32>
    %c0_16 = arith.constant 0 : index
    %c0_17 = arith.constant 0 : index
    %44 = vector.load %arg3[%c0_16, %c0_17] : memref<1x1xf32, #tpu.memory_space<vmem>>, vector<1x1xf32>
    tpu.vector_store %arg3[%c0_16, %c0_17], %43 {strides = array<i32>} : memref<1x1xf32, #tpu.memory_space<vmem>>, vector<1x1xf32>,
    %c0_18 = arith.constant 0 : index
    %c0_19 = arith.constant 0 : index
    %45 = vector.load %arg4[%c0_18, %c0_19] : memref<1x1xf32, #tpu.memory_space<vmem>>, vector<1x1xf32>
    %46 = arith.mulf %27, %31 : vector<64x32xf32>
    %47 = vector.shape_cast %46 : vector<64x32xf32> to vector<1x64x32xf32>
    %cst_20 = arith.constant dense<0.000000e+00> : vector<1xf32>
    %48 = vector.multi_reduction <add>, %47, %cst_20 [1, 2] : vector<1x64x32xf32> to vector<1xf32>
    %49 = vector.shape_cast %48 : vector<1xf32> to vector<1x1x1xf32>
    %50 = vector.extract %49[0, 0, 0] : f32 from vector<1x1x1xf32>
    %51 = vector.broadcast %50 : f32 to vector<1x1xf32>
    %52 = arith.addf %45, %51 : vector<1x1xf32>
    %c0_21 = arith.constant 0 : index
    %c0_22 = arith.constant 0 : index
    %53 = vector.load %arg4[%c0_21, %c0_22] : memref<1x1xf32, #tpu.memory_space<vmem>>, vector<1x1xf32>
    tpu.vector_store %arg4[%c0_21, %c0_22], %52 {strides = array<i32>} : memref<1x1xf32, #tpu.memory_space<vmem>>, vector<1x1xf32>,
    return
  }
  func.func @transform_0(%arg0: i32) -> (i32, i32, i32) {
    %c0_i32 = arith.constant 0 : i32
    %c0_i32_0 = arith.constant 0 : i32
    %c0_i32_1 = arith.constant 0 : i32
    return %arg0, %c0_i32, %c0_i32_0 : i32, i32, i32
  }
  func.func @transform_1(%arg0: i32) -> (i32, i32, i32) {
    %c0_i32 = arith.constant 0 : i32
    %c0_i32_0 = arith.constant 0 : i32
    %c0_i32_1 = arith.constant 0 : i32
    return %arg0, %c0_i32, %c0_i32_0 : i32, i32, i32
  }
  func.func @transform_2(%arg0: i32) -> (i32, i32) {
    %c0_i32 = arith.constant 0 : i32
    %c0_i32_0 = arith.constant 0 : i32
    %c0_i32_1 = arith.constant 0 : i32
    return %c0_i32, %c0_i32_0 : i32, i32
  }
  func.func @transform_3(%arg0: i32) -> (i32, i32) {
    %c0_i32 = arith.constant 0 : i32
    %c0_i32_0 = arith.constant 0 : i32
    %c0_i32_1 = arith.constant 0 : i32
    return %c0_i32, %c0_i32_0 : i32, i32
  }
}

module attributes {stable_mosaic.version = 11 : i64} {
  func.func @_loss_kernel(%arg0: i32, %arg1: memref<1x64x32xf32, #tpu.memory_space<vmem>>, %arg2: memref<1x64x32xf32, #tpu.memory_space<vmem>>, %arg3: memref<1x1xf32, #tpu.memory_space<vmem>>, %arg4: memref<1x1xf32, #tpu.memory_space<vmem>>) attributes {dimension_semantics = [#tpu.dimension_semantics<arbitrary>], iteration_bounds = array<i64: 2>, scalar_prefetch = 0 : i64, scratch_operands = 0 : i64, tpu.core_type = #tpu.core_type<tc>, window_params = [{transform_indices = @transform_0, window_bounds = array<i64: 1, 64, 32>}, {transform_indices = @transform_1, window_bounds = array<i64: 1, 64, 32>}, {pipeline_mode = #tpu.pipeline_mode<synchronous>, transform_indices = @transform_2, window_bounds = array<i64: 1, 1>}, {pipeline_mode = #tpu.pipeline_mode<synchronous>, transform_indices = @transform_3, window_bounds = array<i64: 1, 1>}]} {
    %c0 = arith.constant 0 : index
    %c0_0 = arith.constant 0 : index
    %c0_1 = arith.constant 0 : index
    %0 = vector.load %arg1[%c0, %c0_0, %c0_1] : memref<1x64x32xf32, #tpu.memory_space<vmem>>, vector<1x64x32xf32>
    %1 = vector.shape_cast %0 : vector<1x64x32xf32> to vector<64x32xf32>
    %c0_2 = arith.constant 0 : index
    %c0_3 = arith.constant 0 : index
    %c0_4 = arith.constant 0 : index
    %2 = vector.load %arg2[%c0_2, %c0_3, %c0_4] : memref<1x64x32xf32, #tpu.memory_space<vmem>>, vector<1x64x32xf32>
    %3 = vector.shape_cast %2 : vector<1x64x32xf32> to vector<64x32xf32>
    %4 = arith.mulf %1, %1 : vector<64x32xf32>
    %cst = arith.constant dense<0.000000e+00> : vector<64xf32>
    %5 = vector.multi_reduction <add>, %4, %cst [1] : vector<64x32xf32> to vector<64xf32>
    %6 = vector.shape_cast %5 : vector<64xf32> to vector<64x1xf32>
    %7 = math.sqrt %6 : vector<64x1xf32>
    %8 = arith.mulf %3, %3 : vector<64x32xf32>
    %cst_5 = arith.constant dense<0.000000e+00> : vector<64xf32>
    %9 = vector.multi_reduction <add>, %8, %cst_5 [1] : vector<64x32xf32> to vector<64xf32>
    %10 = vector.shape_cast %9 : vector<64xf32> to vector<64x1xf32>
    %11 = math.sqrt %10 : vector<64x1xf32>
    %cst_6 = arith.constant 9.99999996E-13 : f32
    %12 = vector.broadcast %cst_6 : f32 to vector<64x1xf32>
    %13 = arith.maximumf %7, %12 : vector<64x1xf32>
    %14 = vector.broadcast %13 : vector<64x1xf32> to vector<64x32xf32>
    %15 = arith.divf %1, %14 : vector<64x32xf32>
    %cst_7 = arith.constant 9.99999996E-13 : f32
    %16 = vector.broadcast %cst_7 : f32 to vector<64x1xf32>
    %17 = arith.maximumf %11, %16 : vector<64x1xf32>
    %18 = vector.broadcast %17 : vector<64x1xf32> to vector<64x32xf32>
    %19 = arith.divf %3, %18 : vector<64x32xf32>
    %20 = arith.subf %15, %19 : vector<64x32xf32>
    %c0_i32 = arith.constant 0 : i32
    %21 = arith.cmpi eq, %arg0, %c0_i32 : i32
    %22 = arith.extui %21 : i1 to i32
    %c0_i32_8 = arith.constant 0 : i32
    %23 = arith.cmpi ne, %22, %c0_i32_8 : i32
    scf.if %23 {
      %cst_19 = arith.constant 0.000000e+00 : f32
      %42 = vector.broadcast %cst_19 : f32 to vector<1x1xf32>
      %c0_20 = arith.constant 0 : index
      %c0_21 = arith.constant 0 : index
      %43 = vector.load %arg3[%c0_20, %c0_21] : memref<1x1xf32, #tpu.memory_space<vmem>>, vector<1x1xf32>
      tpu.vector_store %arg3[%c0_20, %c0_21], %42 {strides = array<i32>} : memref<1x1xf32, #tpu.memory_space<vmem>>, vector<1x1xf32>,
      %cst_22 = arith.constant 0.000000e+00 : f32
      %44 = vector.broadcast %cst_22 : f32 to vector<1x1xf32>
      %c0_23 = arith.constant 0 : index
      %c0_24 = arith.constant 0 : index
      %45 = vector.load %arg4[%c0_23, %c0_24] : memref<1x1xf32, #tpu.memory_space<vmem>>, vector<1x1xf32>
      tpu.vector_store %arg4[%c0_23, %c0_24], %44 {strides = array<i32>} : memref<1x1xf32, #tpu.memory_space<vmem>>, vector<1x1xf32>,
    } else {
    }
    %c0_9 = arith.constant 0 : index
    %c0_10 = arith.constant 0 : index
    %24 = vector.load %arg3[%c0_9, %c0_10] : memref<1x1xf32, #tpu.memory_space<vmem>>, vector<1x1xf32>
    %25 = arith.mulf %20, %20 : vector<64x32xf32>
    %26 = vector.shape_cast %25 : vector<64x32xf32> to vector<1x64x32xf32>
    %cst_11 = arith.constant dense<0.000000e+00> : vector<1xf32>
    %27 = vector.multi_reduction <add>, %26, %cst_11 [1, 2] : vector<1x64x32xf32> to vector<1xf32>
    %28 = vector.shape_cast %27 : vector<1xf32> to vector<1x1x1xf32>
    %29 = vector.extract %28[0, 0, 0] : f32 from vector<1x1x1xf32>
    %30 = vector.broadcast %29 : f32 to vector<1x1xf32>
    %31 = arith.addf %24, %30 : vector<1x1xf32>
    %c0_12 = arith.constant 0 : index
    %c0_13 = arith.constant 0 : index
    %32 = vector.load %arg3[%c0_12, %c0_13] : memref<1x1xf32, #tpu.memory_space<vmem>>, vector<1x1xf32>
    tpu.vector_store %arg3[%c0_12, %c0_13], %31 {strides = array<i32>} : memref<1x1xf32, #tpu.memory_space<vmem>>, vector<1x1xf32>,
    %c0_14 = arith.constant 0 : index
    %c0_15 = arith.constant 0 : index
    %33 = vector.load %arg4[%c0_14, %c0_15] : memref<1x1xf32, #tpu.memory_space<vmem>>, vector<1x1xf32>
    %34 = arith.mulf %15, %19 : vector<64x32xf32>
    %35 = vector.shape_cast %34 : vector<64x32xf32> to vector<1x64x32xf32>
    %cst_16 = arith.constant dense<0.000000e+00> : vector<1xf32>
    %36 = vector.multi_reduction <add>, %35, %cst_16 [1, 2] : vector<1x64x32xf32> to vector<1xf32>
    %37 = vector.shape_cast %36 : vector<1xf32> to vector<1x1x1xf32>
    %38 = vector.extract %37[0, 0, 0] : f32 from vector<1x1x1xf32>
    %39 = vector.broadcast %38 : f32 to vector<1x1xf32>
    %40 = arith.addf %33, %39 : vector<1x1xf32>
    %c0_17 = arith.constant 0 : index
    %c0_18 = arith.constant 0 : index
    %41 = vector.load %arg4[%c0_17, %c0_18] : memref<1x1xf32, #tpu.memory_space<vmem>>, vector<1x1xf32>
    tpu.vector_store %arg4[%c0_17, %c0_18], %40 {strides = array<i32>} : memref<1x1xf32, #tpu.memory_space<vmem>>, vector<1x1xf32>,
    return
  }
  func.func @transform_0(%arg0: i32) -> (i32, i32, i32) {
    %c0_i32 = arith.constant 0 : i32
    %c0_i32_0 = arith.constant 0 : i32
    %c0_i32_1 = arith.constant 0 : i32
    return %arg0, %c0_i32, %c0_i32_0 : i32, i32, i32
  }
  func.func @transform_1(%arg0: i32) -> (i32, i32, i32) {
    %c0_i32 = arith.constant 0 : i32
    %c0_i32_0 = arith.constant 0 : i32
    %c0_i32_1 = arith.constant 0 : i32
    return %arg0, %c0_i32, %c0_i32_0 : i32, i32, i32
  }
  func.func @transform_2(%arg0: i32) -> (i32, i32) {
    %c0_i32 = arith.constant 0 : i32
    %c0_i32_0 = arith.constant 0 : i32
    %c0_i32_1 = arith.constant 0 : i32
    return %c0_i32, %c0_i32_0 : i32, i32
  }
  func.func @transform_3(%arg0: i32) -> (i32, i32) {
    %c0_i32 = arith.constant 0 : i32
    %c0_i32_0 = arith.constant 0 : i32
    %c0_i32_1 = arith.constant 0 : i32
    return %c0_i32, %c0_i32_0 : i32, i32
  }
}

module attributes {stable_mosaic.version = 11 : i64} {
  func.func @_proj_block_kernel(%arg0: i32, %arg1: memref<1x64x32xf32, #tpu.memory_space<vmem>>, %arg2: memref<1x32xf32, #tpu.memory_space<vmem>>, %arg3: memref<1x32xf32, #tpu.memory_space<vmem>>, %arg4: memref<64x32xf32, #tpu.memory_space<vmem>>, %arg5: memref<64x32xf32, #tpu.memory_space<vmem>>, %arg6: memref<32x32xf32, #tpu.memory_space<vmem>>, %arg7: memref<1x32xf32, #tpu.memory_space<vmem>>, %arg8: memref<32x64xf32, #tpu.memory_space<vmem>>, %arg9: memref<1x64xf32, #tpu.memory_space<vmem>>, %arg10: memref<32x32xf32, #tpu.memory_space<vmem>>, %arg11: memref<1x32xf32, #tpu.memory_space<vmem>>, %arg12: memref<1x32xf32, #tpu.memory_space<vmem>>, %arg13: memref<1x32xf32, #tpu.memory_space<vmem>>, %arg14: memref<32x128xf32, #tpu.memory_space<vmem>>, %arg15: memref<1x128xf32, #tpu.memory_space<vmem>>, %arg16: memref<128x32xf32, #tpu.memory_space<vmem>>, %arg17: memref<1x32xf32, #tpu.memory_space<vmem>>, %arg18: memref<1x32xf32, #tpu.memory_space<vmem>>, %arg19: memref<1x32xf32, #tpu.memory_space<vmem>>, %arg20: memref<1x64x32xf32, #tpu.memory_space<vmem>>) attributes {dimension_semantics = [#tpu.dimension_semantics<parallel>], iteration_bounds = array<i64: 2>, scalar_prefetch = 0 : i64, scratch_operands = 0 : i64, tpu.core_type = #tpu.core_type<tc>, window_params = [{transform_indices = @transform_0, window_bounds = array<i64: 1, 64, 32>}, {pipeline_mode = #tpu.pipeline_mode<synchronous>, transform_indices = @transform_1, window_bounds = array<i64: 1, 32>}, {pipeline_mode = #tpu.pipeline_mode<synchronous>, transform_indices = @transform_2, window_bounds = array<i64: 1, 32>}, {pipeline_mode = #tpu.pipeline_mode<synchronous>, transform_indices = @transform_3, window_bounds = array<i64: 64, 32>}, {pipeline_mode = #tpu.pipeline_mode<synchronous>, transform_indices = @transform_4, window_bounds = array<i64: 64, 32>}, {pipeline_mode = #tpu.pipeline_mode<synchronous>, transform_indices = @transform_5, window_bounds = array<i64: 32, 32>}, {pipeline_mode = #tpu.pipeline_mode<synchronous>, transform_indices = @transform_6, window_bounds = array<i64: 1, 32>}, {pipeline_mode = #tpu.pipeline_mode<synchronous>, transform_indices = @transform_7, window_bounds = array<i64: 32, 64>}, {pipeline_mode = #tpu.pipeline_mode<synchronous>, transform_indices = @transform_8, window_bounds = array<i64: 1, 64>}, {pipeline_mode = #tpu.pipeline_mode<synchronous>, transform_indices = @transform_9, window_bounds = array<i64: 32, 32>}, {pipeline_mode = #tpu.pipeline_mode<synchronous>, transform_indices = @transform_10, window_bounds = array<i64: 1, 32>}, {pipeline_mode = #tpu.pipeline_mode<synchronous>, transform_indices = @transform_11, window_bounds = array<i64: 1, 32>}, {pipeline_mode = #tpu.pipeline_mode<synchronous>, transform_indices = @transform_12, window_bounds = array<i64: 1, 32>}, {pipeline_mode = #tpu.pipeline_mode<synchronous>, transform_indices = @transform_13, window_bounds = array<i64: 32, 128>}, {pipeline_mode = #tpu.pipeline_mode<synchronous>, transform_indices = @transform_14, window_bounds = array<i64: 1, 128>}, {pipeline_mode = #tpu.pipeline_mode<synchronous>, transform_indices = @transform_15, window_bounds = array<i64: 128, 32>}, {pipeline_mode = #tpu.pipeline_mode<synchronous>, transform_indices = @transform_16, window_bounds = array<i64: 1, 32>}, {pipeline_mode = #tpu.pipeline_mode<synchronous>, transform_indices = @transform_17, window_bounds = array<i64: 1, 32>}, {pipeline_mode = #tpu.pipeline_mode<synchronous>, transform_indices = @transform_18, window_bounds = array<i64: 1, 32>}, {transform_indices = @transform_19, window_bounds = array<i64: 1, 64, 32>}]} {
    %c0 = arith.constant 0 : index
    %c0_0 = arith.constant 0 : index
    %c0_1 = arith.constant 0 : index
    %0 = vector.load %arg1[%c0, %c0_0, %c0_1] : memref<1x64x32xf32, #tpu.memory_space<vmem>>, vector<1x64x32xf32>
    %1 = vector.shape_cast %0 : vector<1x64x32xf32> to vector<64x32xf32>
    %c0_2 = arith.constant 0 : index
    %c0_3 = arith.constant 0 : index
    %2 = vector.load %arg2[%c0_2, %c0_3] : memref<1x32xf32, #tpu.memory_space<vmem>>, vector<1x32xf32>
    %3 = vector.broadcast %2 : vector<1x32xf32> to vector<64x32xf32>
    %4 = arith.mulf %1, %3 : vector<64x32xf32>
    %c0_4 = arith.constant 0 : index
    %c0_5 = arith.constant 0 : index
    %5 = vector.load %arg3[%c0_4, %c0_5] : memref<1x32xf32, #tpu.memory_space<vmem>>, vector<1x32xf32>
    %6 = vector.broadcast %5 : vector<1x32xf32> to vector<64x32xf32>
    %7 = arith.addf %4, %6 : vector<64x32xf32>
    %cst = arith.constant 0.000000e+00 : f32
    %8 = vector.broadcast %cst : f32 to vector<64x32xf32>
    %9 = arith.maximumf %7, %8 : vector<64x32xf32>
    %c0_6 = arith.constant 0 : index
    %c0_7 = arith.constant 0 : index
    %10 = vector.load %arg4[%c0_6, %c0_7] : memref<64x32xf32, #tpu.memory_space<vmem>>, vector<64x32xf32>
    %11 = arith.addf %9, %10 : vector<64x32xf32>
    %c0_8 = arith.constant 0 : index
    %c0_9 = arith.constant 0 : index
    %12 = vector.load %arg5[%c0_8, %c0_9] : memref<64x32xf32, #tpu.memory_space<vmem>>, vector<64x32xf32>
    %c0_10 = arith.constant 0 : index
    %c0_11 = arith.constant 0 : index
    %13 = vector.load %arg6[%c0_10, %c0_11] : memref<32x32xf32, #tpu.memory_space<vmem>>, vector<32x32xf32>
    %cst_12 = arith.constant dense<0.000000e+00> : vector<64x32xf32>
    %14 = tpu.matmul %12, %13, %cst_12 {dimension_numbers = #tpu.dot_dimension_numbers<[1], [0], [0], [1], [0, 0, 1, 1], [], []>} : vector<64x32xf32>, vector<32x32xf32>, vector<64x32xf32> -> vector<64x32xf32>
    %c0_13 = arith.constant 0 : index
    %c0_14 = arith.constant 0 : index
    %15 = vector.load %arg7[%c0_13, %c0_14] : memref<1x32xf32, #tpu.memory_space<vmem>>, vector<1x32xf32>
    %16 = vector.broadcast %15 : vector<1x32xf32> to vector<64x32xf32>
    %17 = arith.addf %14, %16 : vector<64x32xf32>
    %c0_15 = arith.constant 0 : index
    %c0_16 = arith.constant 0 : index
    %18 = vector.load %arg8[%c0_15, %c0_16] : memref<32x64xf32, #tpu.memory_space<vmem>>, vector<32x64xf32>
    %cst_17 = arith.constant dense<0.000000e+00> : vector<64x64xf32>
    %19 = tpu.matmul %11, %18, %cst_17 {dimension_numbers = #tpu.dot_dimension_numbers<[1], [0], [0], [1], [0, 0, 1, 1], [], []>} : vector<64x32xf32>, vector<32x64xf32>, vector<64x64xf32> -> vector<64x64xf32>
    %c0_18 = arith.constant 0 : index
    %c0_19 = arith.constant 0 : index
    %20 = vector.load %arg9[%c0_18, %c0_19] : memref<1x64xf32, #tpu.memory_space<vmem>>, vector<1x64xf32>
    %21 = vector.broadcast %20 : vector<1x64xf32> to vector<64x64xf32>
    %22 = arith.addf %19, %21 : vector<64x64xf32>
    %23 = vector.extract_strided_slice %22 {offsets = [0, 0], sizes = [64, 32], strides = [1, 1]} : vector<64x64xf32> to vector<64x32xf32>
    %24 = vector.extract_strided_slice %22 {offsets = [0, 32], sizes = [64, 32], strides = [1, 1]} : vector<64x64xf32> to vector<64x32xf32>
    %25 = vector.extract_strided_slice %17 {offsets = [0, 0], sizes = [64, 8], strides = [1, 1]} : vector<64x32xf32> to vector<64x8xf32>
    %cst_20 = arith.constant 0.353553385 : f32
    %26 = vector.broadcast %cst_20 : f32 to vector<64x8xf32>
    %27 = arith.mulf %25, %26 : vector<64x8xf32>
    %28 = vector.extract_strided_slice %23 {offsets = [0, 0], sizes = [64, 8], strides = [1, 1]} : vector<64x32xf32> to vector<64x8xf32>
    %29 = vector.extract_strided_slice %24 {offsets = [0, 0], sizes = [64, 8], strides = [1, 1]} : vector<64x32xf32> to vector<64x8xf32>
    %30 = tpu.transpose %28, [1, 0] : vector<64x8xf32> -> vector<8x64xf32>
    %cst_21 = arith.constant dense<0.000000e+00> : vector<64x64xf32>
    %31 = tpu.matmul %27, %30, %cst_21 {dimension_numbers = #tpu.dot_dimension_numbers<[1], [0], [0], [1], [0, 0, 1, 1], [], []>} : vector<64x8xf32>, vector<8x64xf32>, vector<64x64xf32> -> vector<64x64xf32>
    %cst_22 = arith.constant dense<0xFF800000> : vector<64xf32>
    %32 = vector.multi_reduction <maximumf>, %31, %cst_22 [1] : vector<64x64xf32> to vector<64xf32>
    %33 = vector.shape_cast %32 : vector<64xf32> to vector<64x1xf32>
    %34 = vector.broadcast %33 : vector<64x1xf32> to vector<64x64xf32>
    %35 = arith.subf %31, %34 : vector<64x64xf32>
    %36 = math.exp %35 : vector<64x64xf32>
    %cst_23 = arith.constant dense<0.000000e+00> : vector<64xf32>
    %37 = vector.multi_reduction <add>, %36, %cst_23 [1] : vector<64x64xf32> to vector<64xf32>
    %38 = vector.shape_cast %37 : vector<64xf32> to vector<64x1xf32>
    %39 = tpu.reciprocal %38 {approx = true} : vector<64x1xf32> -> vector<64x1xf32>
    %40 = vector.broadcast %39 : vector<64x1xf32> to vector<64x64xf32>
    %41 = arith.mulf %36, %40 : vector<64x64xf32>
    %cst_24 = arith.constant dense<0.000000e+00> : vector<64x8xf32>
    %42 = tpu.matmul %41, %29, %cst_24 {dimension_numbers = #tpu.dot_dimension_numbers<[1], [0], [0], [1], [0, 0, 1, 1], [], []>} : vector<64x64xf32>, vector<64x8xf32>, vector<64x8xf32> -> vector<64x8xf32>
    %43 = vector.extract_strided_slice %17 {offsets = [0, 8], sizes = [64, 8], strides = [1, 1]} : vector<64x32xf32> to vector<64x8xf32>
    %cst_25 = arith.constant 0.353553385 : f32
    %44 = vector.broadcast %cst_25 : f32 to vector<64x8xf32>
    %45 = arith.mulf %43, %44 : vector<64x8xf32>
    %46 = vector.extract_strided_slice %23 {offsets = [0, 8], sizes = [64, 8], strides = [1, 1]} : vector<64x32xf32> to vector<64x8xf32>
    %47 = vector.extract_strided_slice %24 {offsets = [0, 8], sizes = [64, 8], strides = [1, 1]} : vector<64x32xf32> to vector<64x8xf32>
    %48 = tpu.transpose %46, [1, 0] : vector<64x8xf32> -> vector<8x64xf32>
    %cst_26 = arith.constant dense<0.000000e+00> : vector<64x64xf32>
    %49 = tpu.matmul %45, %48, %cst_26 {dimension_numbers = #tpu.dot_dimension_numbers<[1], [0], [0], [1], [0, 0, 1, 1], [], []>} : vector<64x8xf32>, vector<8x64xf32>, vector<64x64xf32> -> vector<64x64xf32>
    %cst_27 = arith.constant dense<0xFF800000> : vector<64xf32>
    %50 = vector.multi_reduction <maximumf>, %49, %cst_27 [1] : vector<64x64xf32> to vector<64xf32>
    %51 = vector.shape_cast %50 : vector<64xf32> to vector<64x1xf32>
    %52 = vector.broadcast %51 : vector<64x1xf32> to vector<64x64xf32>
    %53 = arith.subf %49, %52 : vector<64x64xf32>
    %54 = math.exp %53 : vector<64x64xf32>
    %cst_28 = arith.constant dense<0.000000e+00> : vector<64xf32>
    %55 = vector.multi_reduction <add>, %54, %cst_28 [1] : vector<64x64xf32> to vector<64xf32>
    %56 = vector.shape_cast %55 : vector<64xf32> to vector<64x1xf32>
    %57 = tpu.reciprocal %56 {approx = true} : vector<64x1xf32> -> vector<64x1xf32>
    %58 = vector.broadcast %57 : vector<64x1xf32> to vector<64x64xf32>
    %59 = arith.mulf %54, %58 : vector<64x64xf32>
    %cst_29 = arith.constant dense<0.000000e+00> : vector<64x8xf32>
    %60 = tpu.matmul %59, %47, %cst_29 {dimension_numbers = #tpu.dot_dimension_numbers<[1], [0], [0], [1], [0, 0, 1, 1], [], []>} : vector<64x64xf32>, vector<64x8xf32>, vector<64x8xf32> -> vector<64x8xf32>
    %61 = vector.extract_strided_slice %17 {offsets = [0, 16], sizes = [64, 8], strides = [1, 1]} : vector<64x32xf32> to vector<64x8xf32>
    %cst_30 = arith.constant 0.353553385 : f32
    %62 = vector.broadcast %cst_30 : f32 to vector<64x8xf32>
    %63 = arith.mulf %61, %62 : vector<64x8xf32>
    %64 = vector.extract_strided_slice %23 {offsets = [0, 16], sizes = [64, 8], strides = [1, 1]} : vector<64x32xf32> to vector<64x8xf32>
    %65 = vector.extract_strided_slice %24 {offsets = [0, 16], sizes = [64, 8], strides = [1, 1]} : vector<64x32xf32> to vector<64x8xf32>
    %66 = tpu.transpose %64, [1, 0] : vector<64x8xf32> -> vector<8x64xf32>
    %cst_31 = arith.constant dense<0.000000e+00> : vector<64x64xf32>
    %67 = tpu.matmul %63, %66, %cst_31 {dimension_numbers = #tpu.dot_dimension_numbers<[1], [0], [0], [1], [0, 0, 1, 1], [], []>} : vector<64x8xf32>, vector<8x64xf32>, vector<64x64xf32> -> vector<64x64xf32>
    %cst_32 = arith.constant dense<0xFF800000> : vector<64xf32>
    %68 = vector.multi_reduction <maximumf>, %67, %cst_32 [1] : vector<64x64xf32> to vector<64xf32>
    %69 = vector.shape_cast %68 : vector<64xf32> to vector<64x1xf32>
    %70 = vector.broadcast %69 : vector<64x1xf32> to vector<64x64xf32>
    %71 = arith.subf %67, %70 : vector<64x64xf32>
    %72 = math.exp %71 : vector<64x64xf32>
    %cst_33 = arith.constant dense<0.000000e+00> : vector<64xf32>
    %73 = vector.multi_reduction <add>, %72, %cst_33 [1] : vector<64x64xf32> to vector<64xf32>
    %74 = vector.shape_cast %73 : vector<64xf32> to vector<64x1xf32>
    %75 = tpu.reciprocal %74 {approx = true} : vector<64x1xf32> -> vector<64x1xf32>
    %76 = vector.broadcast %75 : vector<64x1xf32> to vector<64x64xf32>
    %77 = arith.mulf %72, %76 : vector<64x64xf32>
    %cst_34 = arith.constant dense<0.000000e+00> : vector<64x8xf32>
    %78 = tpu.matmul %77, %65, %cst_34 {dimension_numbers = #tpu.dot_dimension_numbers<[1], [0], [0], [1], [0, 0, 1, 1], [], []>} : vector<64x64xf32>, vector<64x8xf32>, vector<64x8xf32> -> vector<64x8xf32>
    %79 = vector.extract_strided_slice %17 {offsets = [0, 24], sizes = [64, 8], strides = [1, 1]} : vector<64x32xf32> to vector<64x8xf32>
    %cst_35 = arith.constant 0.353553385 : f32
    %80 = vector.broadcast %cst_35 : f32 to vector<64x8xf32>
    %81 = arith.mulf %79, %80 : vector<64x8xf32>
    %82 = vector.extract_strided_slice %23 {offsets = [0, 24], sizes = [64, 8], strides = [1, 1]} : vector<64x32xf32> to vector<64x8xf32>
    %83 = vector.extract_strided_slice %24 {offsets = [0, 24], sizes = [64, 8], strides = [1, 1]} : vector<64x32xf32> to vector<64x8xf32>
    %84 = tpu.transpose %82, [1, 0] : vector<64x8xf32> -> vector<8x64xf32>
    %cst_36 = arith.constant dense<0.000000e+00> : vector<64x64xf32>
    %85 = tpu.matmul %81, %84, %cst_36 {dimension_numbers = #tpu.dot_dimension_numbers<[1], [0], [0], [1], [0, 0, 1, 1], [], []>} : vector<64x8xf32>, vector<8x64xf32>, vector<64x64xf32> -> vector<64x64xf32>
    %cst_37 = arith.constant dense<0xFF800000> : vector<64xf32>
    %86 = vector.multi_reduction <maximumf>, %85, %cst_37 [1] : vector<64x64xf32> to vector<64xf32>
    %87 = vector.shape_cast %86 : vector<64xf32> to vector<64x1xf32>
    %88 = vector.broadcast %87 : vector<64x1xf32> to vector<64x64xf32>
    %89 = arith.subf %85, %88 : vector<64x64xf32>
    %90 = math.exp %89 : vector<64x64xf32>
    %cst_38 = arith.constant dense<0.000000e+00> : vector<64xf32>
    %91 = vector.multi_reduction <add>, %90, %cst_38 [1] : vector<64x64xf32> to vector<64xf32>
    %92 = vector.shape_cast %91 : vector<64xf32> to vector<64x1xf32>
    %93 = tpu.reciprocal %92 {approx = true} : vector<64x1xf32> -> vector<64x1xf32>
    %94 = vector.broadcast %93 : vector<64x1xf32> to vector<64x64xf32>
    %95 = arith.mulf %90, %94 : vector<64x64xf32>
    %cst_39 = arith.constant dense<0.000000e+00> : vector<64x8xf32>
    %96 = tpu.matmul %95, %83, %cst_39 {dimension_numbers = #tpu.dot_dimension_numbers<[1], [0], [0], [1], [0, 0, 1, 1], [], []>} : vector<64x64xf32>, vector<64x8xf32>, vector<64x8xf32> -> vector<64x8xf32>
    %97 = tpu.concatenate %42, %60, %78, %96 in 1 : vector<64x8xf32>, vector<64x8xf32>, vector<64x8xf32>, vector<64x8xf32> -> vector<64x32xf32>
    %c0_40 = arith.constant 0 : index
    %c0_41 = arith.constant 0 : index
    %98 = vector.load %arg10[%c0_40, %c0_41] : memref<32x32xf32, #tpu.memory_space<vmem>>, vector<32x32xf32>
    %cst_42 = arith.constant dense<0.000000e+00> : vector<64x32xf32>
    %99 = tpu.matmul %97, %98, %cst_42 {dimension_numbers = #tpu.dot_dimension_numbers<[1], [0], [0], [1], [0, 0, 1, 1], [], []>} : vector<64x32xf32>, vector<32x32xf32>, vector<64x32xf32> -> vector<64x32xf32>
    %c0_43 = arith.constant 0 : index
    %c0_44 = arith.constant 0 : index
    %100 = vector.load %arg11[%c0_43, %c0_44] : memref<1x32xf32, #tpu.memory_space<vmem>>, vector<1x32xf32>
    %101 = vector.broadcast %100 : vector<1x32xf32> to vector<64x32xf32>
    %102 = arith.addf %99, %101 : vector<64x32xf32>
    %103 = arith.addf %102, %11 : vector<64x32xf32>
    %c0_45 = arith.constant 0 : index
    %c0_46 = arith.constant 0 : index
    %104 = vector.load %arg12[%c0_45, %c0_46] : memref<1x32xf32, #tpu.memory_space<vmem>>, vector<1x32xf32>
    %c0_47 = arith.constant 0 : index
    %c0_48 = arith.constant 0 : index
    %105 = vector.load %arg13[%c0_47, %c0_48] : memref<1x32xf32, #tpu.memory_space<vmem>>, vector<1x32xf32>
    %cst_49 = arith.constant dense<0.000000e+00> : vector<64xf32>
    %106 = vector.multi_reduction <add>, %103, %cst_49 [1] : vector<64x32xf32> to vector<64xf32>
    %107 = vector.shape_cast %106 : vector<64xf32> to vector<64x1xf32>
    %cst_50 = arith.constant 3.200000e+01 : f32
    %108 = vector.broadcast %cst_50 : f32 to vector<64x1xf32>
    %109 = arith.divf %107, %108 : vector<64x1xf32>
    %110 = vector.broadcast %109 : vector<64x1xf32> to vector<64x32xf32>
    %111 = arith.subf %103, %110 : vector<64x32xf32>
    %112 = arith.mulf %111, %111 : vector<64x32xf32>
    %cst_51 = arith.constant dense<0.000000e+00> : vector<64xf32>
    %113 = vector.multi_reduction <add>, %112, %cst_51 [1] : vector<64x32xf32> to vector<64xf32>
    %114 = vector.shape_cast %113 : vector<64xf32> to vector<64x1xf32>
    %cst_52 = arith.constant 3.200000e+01 : f32
    %115 = vector.broadcast %cst_52 : f32 to vector<64x1xf32>
    %116 = arith.divf %114, %115 : vector<64x1xf32>
    %117 = vector.broadcast %109 : vector<64x1xf32> to vector<64x32xf32>
    %118 = arith.subf %103, %117 : vector<64x32xf32>
    %cst_53 = arith.constant 9.99999974E-6 : f32
    %119 = vector.broadcast %cst_53 : f32 to vector<64x1xf32>
    %120 = arith.addf %116, %119 : vector<64x1xf32>
    %121 = math.rsqrt %120 : vector<64x1xf32>
    %122 = vector.broadcast %121 : vector<64x1xf32> to vector<64x32xf32>
    %123 = arith.mulf %118, %122 : vector<64x32xf32>
    %124 = vector.broadcast %104 : vector<1x32xf32> to vector<64x32xf32>
    %125 = arith.mulf %123, %124 : vector<64x32xf32>
    %126 = vector.broadcast %105 : vector<1x32xf32> to vector<64x32xf32>
    %127 = arith.addf %125, %126 : vector<64x32xf32>
    %c0_54 = arith.constant 0 : index
    %c0_55 = arith.constant 0 : index
    %128 = vector.load %arg14[%c0_54, %c0_55] : memref<32x128xf32, #tpu.memory_space<vmem>>, vector<32x128xf32>
    %cst_56 = arith.constant dense<0.000000e+00> : vector<64x128xf32>
    %129 = tpu.matmul %127, %128, %cst_56 {dimension_numbers = #tpu.dot_dimension_numbers<[1], [0], [0], [1], [0, 0, 1, 1], [], []>} : vector<64x32xf32>, vector<32x128xf32>, vector<64x128xf32> -> vector<64x128xf32>
    %c0_57 = arith.constant 0 : index
    %c0_58 = arith.constant 0 : index
    %130 = vector.load %arg15[%c0_57, %c0_58] : memref<1x128xf32, #tpu.memory_space<vmem>>, vector<1x128xf32>
    %131 = vector.broadcast %130 : vector<1x128xf32> to vector<64x128xf32>
    %132 = arith.addf %129, %131 : vector<64x128xf32>
    %cst_59 = arith.constant 0.000000e+00 : f32
    %133 = vector.broadcast %cst_59 : f32 to vector<64x128xf32>
    %134 = arith.maximumf %132, %133 : vector<64x128xf32>
    %c0_60 = arith.constant 0 : index
    %c0_61 = arith.constant 0 : index
    %135 = vector.load %arg16[%c0_60, %c0_61] : memref<128x32xf32, #tpu.memory_space<vmem>>, vector<128x32xf32>
    %cst_62 = arith.constant dense<0.000000e+00> : vector<64x32xf32>
    %136 = tpu.matmul %134, %135, %cst_62 {dimension_numbers = #tpu.dot_dimension_numbers<[1], [0], [0], [1], [0, 0, 1, 1], [], []>} : vector<64x128xf32>, vector<128x32xf32>, vector<64x32xf32> -> vector<64x32xf32>
    %c0_63 = arith.constant 0 : index
    %c0_64 = arith.constant 0 : index
    %137 = vector.load %arg17[%c0_63, %c0_64] : memref<1x32xf32, #tpu.memory_space<vmem>>, vector<1x32xf32>
    %138 = vector.broadcast %137 : vector<1x32xf32> to vector<64x32xf32>
    %139 = arith.addf %136, %138 : vector<64x32xf32>
    %140 = arith.addf %127, %139 : vector<64x32xf32>
    %c0_65 = arith.constant 0 : index
    %c0_66 = arith.constant 0 : index
    %141 = vector.load %arg18[%c0_65, %c0_66] : memref<1x32xf32, #tpu.memory_space<vmem>>, vector<1x32xf32>
    %c0_67 = arith.constant 0 : index
    %c0_68 = arith.constant 0 : index
    %142 = vector.load %arg19[%c0_67, %c0_68] : memref<1x32xf32, #tpu.memory_space<vmem>>, vector<1x32xf32>
    %cst_69 = arith.constant dense<0.000000e+00> : vector<64xf32>
    %143 = vector.multi_reduction <add>, %140, %cst_69 [1] : vector<64x32xf32> to vector<64xf32>
    %144 = vector.shape_cast %143 : vector<64xf32> to vector<64x1xf32>
    %cst_70 = arith.constant 3.200000e+01 : f32
    %145 = vector.broadcast %cst_70 : f32 to vector<64x1xf32>
    %146 = arith.divf %144, %145 : vector<64x1xf32>
    %147 = vector.broadcast %146 : vector<64x1xf32> to vector<64x32xf32>
    %148 = arith.subf %140, %147 : vector<64x32xf32>
    %149 = arith.mulf %148, %148 : vector<64x32xf32>
    %cst_71 = arith.constant dense<0.000000e+00> : vector<64xf32>
    %150 = vector.multi_reduction <add>, %149, %cst_71 [1] : vector<64x32xf32> to vector<64xf32>
    %151 = vector.shape_cast %150 : vector<64xf32> to vector<64x1xf32>
    %cst_72 = arith.constant 3.200000e+01 : f32
    %152 = vector.broadcast %cst_72 : f32 to vector<64x1xf32>
    %153 = arith.divf %151, %152 : vector<64x1xf32>
    %154 = vector.broadcast %146 : vector<64x1xf32> to vector<64x32xf32>
    %155 = arith.subf %140, %154 : vector<64x32xf32>
    %cst_73 = arith.constant 9.99999974E-6 : f32
    %156 = vector.broadcast %cst_73 : f32 to vector<64x1xf32>
    %157 = arith.addf %153, %156 : vector<64x1xf32>
    %158 = math.rsqrt %157 : vector<64x1xf32>
    %159 = vector.broadcast %158 : vector<64x1xf32> to vector<64x32xf32>
    %160 = arith.mulf %155, %159 : vector<64x32xf32>
    %161 = vector.broadcast %141 : vector<1x32xf32> to vector<64x32xf32>
    %162 = arith.mulf %160, %161 : vector<64x32xf32>
    %163 = vector.broadcast %142 : vector<1x32xf32> to vector<64x32xf32>
    %164 = arith.addf %162, %163 : vector<64x32xf32>
    %165 = vector.shape_cast %164 : vector<64x32xf32> to vector<1x64x32xf32>
    %c0_74 = arith.constant 0 : index
    %c0_75 = arith.constant 0 : index
    %c0_76 = arith.constant 0 : index
    %166 = vector.load %arg20[%c0_74, %c0_75, %c0_76] : memref<1x64x32xf32, #tpu.memory_space<vmem>>, vector<1x64x32xf32>
    tpu.vector_store %arg20[%c0_74, %c0_75, %c0_76], %165 {strides = array<i32>} : memref<1x64x32xf32, #tpu.memory_space<vmem>>, vector<1x64x32xf32>,
    return
  }
  func.func @transform_0(%arg0: i32) -> (i32, i32, i32) {
    %c0_i32 = arith.constant 0 : i32
    %c0_i32_0 = arith.constant 0 : i32
    %c0_i32_1 = arith.constant 0 : i32
    return %arg0, %c0_i32, %c0_i32_0 : i32, i32, i32
  }
  func.func @transform_1(%arg0: i32) -> (i32, i32) {
    %c0_i32 = arith.constant 0 : i32
    %c0_i32_0 = arith.constant 0 : i32
    %c0_i32_1 = arith.constant 0 : i32
    return %c0_i32, %c0_i32_0 : i32, i32
  }
  func.func @transform_2(%arg0: i32) -> (i32, i32) {
    %c0_i32 = arith.constant 0 : i32
    %c0_i32_0 = arith.constant 0 : i32
    %c0_i32_1 = arith.constant 0 : i32
    return %c0_i32, %c0_i32_0 : i32, i32
  }
  func.func @transform_3(%arg0: i32) -> (i32, i32) {
    %c0_i32 = arith.constant 0 : i32
    %c0_i32_0 = arith.constant 0 : i32
    %c0_i32_1 = arith.constant 0 : i32
    return %c0_i32, %c0_i32_0 : i32, i32
  }
  func.func @transform_4(%arg0: i32) -> (i32, i32) {
    %c0_i32 = arith.constant 0 : i32
    %c0_i32_0 = arith.constant 0 : i32
    %c0_i32_1 = arith.constant 0 : i32
    return %c0_i32, %c0_i32_0 : i32, i32
  }
  func.func @transform_5(%arg0: i32) -> (i32, i32) {
    %c0_i32 = arith.constant 0 : i32
    %c0_i32_0 = arith.constant 0 : i32
    %c0_i32_1 = arith.constant 0 : i32
    return %c0_i32, %c0_i32_0 : i32, i32
  }
  func.func @transform_6(%arg0: i32) -> (i32, i32) {
    %c0_i32 = arith.constant 0 : i32
    %c0_i32_0 = arith.constant 0 : i32
    %c0_i32_1 = arith.constant 0 : i32
    return %c0_i32, %c0_i32_0 : i32, i32
  }
  func.func @transform_7(%arg0: i32) -> (i32, i32) {
    %c0_i32 = arith.constant 0 : i32
    %c0_i32_0 = arith.constant 0 : i32
    %c0_i32_1 = arith.constant 0 : i32
    return %c0_i32, %c0_i32_0 : i32, i32
  }
  func.func @transform_8(%arg0: i32) -> (i32, i32) {
    %c0_i32 = arith.constant 0 : i32
    %c0_i32_0 = arith.constant 0 : i32
    %c0_i32_1 = arith.constant 0 : i32
    return %c0_i32, %c0_i32_0 : i32, i32
  }
  func.func @transform_9(%arg0: i32) -> (i32, i32) {
    %c0_i32 = arith.constant 0 : i32
    %c0_i32_0 = arith.constant 0 : i32
    %c0_i32_1 = arith.constant 0 : i32
    return %c0_i32, %c0_i32_0 : i32, i32
  }
  func.func @transform_10(%arg0: i32) -> (i32, i32) {
    %c0_i32 = arith.constant 0 : i32
    %c0_i32_0 = arith.constant 0 : i32
    %c0_i32_1 = arith.constant 0 : i32
    return %c0_i32, %c0_i32_0 : i32, i32
  }
  func.func @transform_11(%arg0: i32) -> (i32, i32) {
    %c0_i32 = arith.constant 0 : i32
    %c0_i32_0 = arith.constant 0 : i32
    %c0_i32_1 = arith.constant 0 : i32
    return %c0_i32, %c0_i32_0 : i32, i32
  }
  func.func @transform_12(%arg0: i32) -> (i32, i32) {
    %c0_i32 = arith.constant 0 : i32
    %c0_i32_0 = arith.constant 0 : i32
    %c0_i32_1 = arith.constant 0 : i32
    return %c0_i32, %c0_i32_0 : i32, i32
  }
  func.func @transform_13(%arg0: i32) -> (i32, i32) {
    %c0_i32 = arith.constant 0 : i32
    %c0_i32_0 = arith.constant 0 : i32
    %c0_i32_1 = arith.constant 0 : i32
    return %c0_i32, %c0_i32_0 : i32, i32
  }
  func.func @transform_14(%arg0: i32) -> (i32, i32) {
    %c0_i32 = arith.constant 0 : i32
    %c0_i32_0 = arith.constant 0 : i32
    %c0_i32_1 = arith.constant 0 : i32
    return %c0_i32, %c0_i32_0 : i32, i32
  }
  func.func @transform_15(%arg0: i32) -> (i32, i32) {
    %c0_i32 = arith.constant 0 : i32
    %c0_i32_0 = arith.constant 0 : i32
    %c0_i32_1 = arith.constant 0 : i32
    return %c0_i32, %c0_i32_0 : i32, i32
  }
  func.func @transform_16(%arg0: i32) -> (i32, i32) {
    %c0_i32 = arith.constant 0 : i32
    %c0_i32_0 = arith.constant 0 : i32
    %c0_i32_1 = arith.constant 0 : i32
    return %c0_i32, %c0_i32_0 : i32, i32
  }
  func.func @transform_17(%arg0: i32) -> (i32, i32) {
    %c0_i32 = arith.constant 0 : i32
    %c0_i32_0 = arith.constant 0 : i32
    %c0_i32_1 = arith.constant 0 : i32
    return %c0_i32, %c0_i32_0 : i32, i32
  }
  func.func @transform_18(%arg0: i32) -> (i32, i32) {
    %c0_i32 = arith.constant 0 : i32
    %c0_i32_0 = arith.constant 0 : i32
    %c0_i32_1 = arith.constant 0 : i32
    return %c0_i32, %c0_i32_0 : i32, i32
  }
  func.func @transform_19(%arg0: i32) -> (i32, i32, i32) {
    %c0_i32 = arith.constant 0 : i32
    %c0_i32_0 = arith.constant 0 : i32
    %c0_i32_1 = arith.constant 0 : i32
    return %arg0, %c0_i32, %c0_i32_0 : i32, i32, i32
  }
}

</mosaic_0001>

<llo_original>
// kernel: scalekd_forward.11
$region0: #{scalekd_forward.11}
  #allocation0 [shape = 'u32[]', space=smem, size = 0x4, offset = 0x4, fixed_abs, tag = 'smem constant byte address 0x4 - core index']
  #allocation1 [shape = 'u32[144,128]{1,0:T(1,128)}', space=vmem, size = 0x12000, scoped, tag = 'internal scratch']
  %s0 = inlined_call_operand.vmem [shape: f32[2,64,32], index: 0, kind: input, shape index: {}]
  %s1 = inlined_call_operand.vmem [shape: f32[2,64,32], index: 1, kind: input, shape index: {}]
  %s2 = inlined_call_operand.hbm [shape: f32[1,1], index: 2, kind: output, shape index: {0}]
  %s3 = inlined_call_operand.hbm [shape: f32[1,1], index: 3, kind: output, shape index: {1}]
  %4 = xla_tuple %s2, %s3
  %s5 = sld [smem:[#allocation0]]
  $region53: #{scalekd_forward.11} parent=0
    _
  %s7 = ssub.s32 1, %s5
  %s8 = scalar_select 0, %s7, %s5
  $region1: #{scalekd_forward.11} parent=0
    #allocation2 [shape = 'u8[512]{0}', space=vmem, size = 0x400, scoped, tag = 'output window, operand 0, single buffered']
    #allocation3 [shape = 's32[2]{0}', space=sflag, size = 0x8, scoped, tag = 'scoped memory for scalekd_forward.11']
    #allocation4 [shape = 'u8[512]{0}', space=vmem, size = 0x400, scoped, tag = 'output window, operand 1, single buffered']
    #allocation5 [shape = 's32[1]{0}', space=sflag, size = 0x4, scoped, tag = 'scoped memory for scalekd_forward.11']
    %9 = vsyncpa [#allocation3], 0
    %10 = vsyncpa [#allocation5], 0
    loop: start=0, step=1, limit=4
    $region2: #{scalekd_forward.11} parent=1 // loop_pre_header
      _
    $region3: #{scalekd_forward.11} parent=1 // loop_header
      %s12 = sphi 0, %s16
      %p13 = scmp.ge.s32.totalorder %s12, 4
      %s22 = sphi 0, %s24
      %s25 = sphi 0, %s22
      %s26 = sphi 0, %s25
      %s42 = sphi 0, %s26
      %s48 = sphi 0, %s50
      %s51 = sphi 0, %s48
      %s52 = sphi 0, %s51
      %s68 = sphi 0, %s52
      %s72 = sphi 0, %s72
      %s74 = sphi 0, %s72
      %s75 = sphi 0, %s74
      %s89 = sphi 0, %s75
      %s93 = sphi 0, %s93
      %s95 = sphi 0, %s93
      %s96 = sphi 0, %s95
      %s110 = sphi 0, %s96
    $region4: #{scalekd_forward.11} parent=1 // loop_header_branch
      %15 = sbr.rel (%p13) target = $region8
    $region5: #{scalekd_forward.11} parent=1 // loop_body
      %s17 = ssub.s32 %s12, 1
      %s18 = ssub.s32 %s12, 2
      %s19 = sadd.s32 %s12, 1
      %s20 = ssub.s32 %s12, %s19
      %p21 = scmp.eq.s32.totalorder %s20, 0
      %s23 = sadd.s32 %s22, 1
      %s24 = scalar_select %p21, %s22, %s23
      %p27 = pneg %p21
      %p28 = scmp.eq.s32.totalorder %s12, 1
      %p29 = por %p27, %p28
      %p30 = scmp.ne.s32.totalorder %s22, %s25
      %p31 = scmp.eq.s32.totalorder %s12, 0
      %p32 = por %p30, %p31
      %p33 = scmp.ne.s32.totalorder %s22, %s25
      %p34 = scmp.eq.s32.totalorder %s17, 1
      %p35 = por %p33, %p34
      %p36 = scmp.ne.s32.totalorder %s25, %s26
      %p37 = scmp.eq.s32.totalorder %s17, 0
      %p38 = por %p36, %p37
      %p39 = scmp.ne.s32.totalorder %s25, %s26
      %p40 = scmp.eq.s32.totalorder %s18, 1
      %p41 = por %p39, %p40
      %p43 = scmp.ne.s32.totalorder %s26, %s42
      %p44 = scmp.eq.s32.totalorder %s18, 0
      %p45 = por %p43, %p44
      %s46 = ssub.s32 %s12, %s19
      %p47 = scmp.eq.s32.totalorder %s46, 0
      %s49 = sadd.s32 %s48, 1
      %s50 = scalar_select %p47, %s48, %s49
      %p53 = pneg %p47
      %p54 = scmp.eq.s32.totalorder %s12, 1
      %p55 = por %p53, %p54
      %p56 = scmp.ne.s32.totalorder %s48, %s51
      %p57 = scmp.eq.s32.totalorder %s12, 0
      %p58 = por %p56, %p57
      %p59 = scmp.ne.s32.totalorder %s48, %s51
      %p60 = scmp.eq.s32.totalorder %s17, 1
      %p61 = por %p59, %p60
      %p62 = scmp.ne.s32.totalorder %s51, %s52
      %p63 = scmp.eq.s32.totalorder %s17, 0
      %p64 = por %p62, %p63
      %p65 = scmp.ne.s32.totalorder %s51, %s52
      %p66 = scmp.eq.s32.totalorder %s18, 1
      %p67 = por %p65, %p66
      %p69 = scmp.ne.s32.totalorder %s52, %s68
      %p70 = scmp.eq.s32.totalorder %s18, 0
      %p71 = por %p69, %p70
      %s73 = sadd.s32 %s72, 1
      %p76 = scmp.eq.s32.totalorder %s12, 1
      %p77 = scmp.ne.s32.totalorder %s72, %s74
      %p78 = scmp.eq.s32.totalorder %s12, 0
      %p79 = por %p77, %p78
      %p80 = scmp.ne.s32.totalorder %s72, %s74
      %p81 = scmp.eq.s32.totalorder %s17, 1
      %p82 = por %p80, %p81
      %p83 = scmp.ne.s32.totalorder %s74, %s75
      %p84 = scmp.eq.s32.totalorder %s17, 0
      %p85 = por %p83, %p84
      %p86 = scmp.ne.s32.totalorder %s74, %s75
      %p87 = scmp.eq.s32.totalorder %s18, 1
      %p88 = por %p86, %p87
      %p90 = scmp.ne.s32.totalorder %s75, %s89
      %p91 = scmp.eq.s32.totalorder %s18, 0
      %p92 = por %p90, %p91
      %s94 = sadd.s32 %s93, 1
      %p97 = scmp.eq.s32.totalorder %s12, 1
      %p98 = scmp.ne.s32.totalorder %s93, %s95
      %p99 = scmp.eq.s32.totalorder %s12, 0
      %p100 = por %p98, %p99
      %p101 = scmp.ne.s32.totalorder %s93, %s95
      %p102 = scmp.eq.s32.totalorder %s17, 1
      %p103 = por %p101, %p102
      %p104 = scmp.ne.s32.totalorder %s95, %s96
      %p105 = scmp.eq.s32.totalorder %s17, 0
      %p106 = por %p104, %p105
      %p107 = scmp.ne.s32.totalorder %s95, %s96
      %p108 = scmp.eq.s32.totalorder %s18, 1
      %p109 = por %p107, %p108
      %p111 = scmp.ne.s32.totalorder %s96, %s110
      %p112 = scmp.eq.s32.totalorder %s18, 0
      %p113 = por %p111, %p112
      %p114 = scmp.le.s32.totalorder 1, %s12
      %p115 = scmp.lt.s32.totalorder %s12, 3
      %p116 = pnand %p114, %p115
      %p117 = pneg %p116
      // Predicated region
      $region9: #{scalekd_forward.11} parent=5 // pred_check
        _
      $region10: #{scalekd_forward.11} parent=5 // pred_check_branch
        %119 = sbr.rel (%p116) target = $region12
      $region11: #{scalekd_forward.11} parent=5 // pred_region
        %s120 = ssub.s32 %s12, 1
      $region12: #{scalekd_forward.11} parent=5 // pred_fallthru
        _
      %p121 = scmp.lt.s32.totalorder %s12, 2
      // Predicated region
      $region13: #{scalekd_forward.11} parent=5 // pred_check
        %p122 = pneg %p121
      $region14: #{scalekd_forward.11} parent=5 // pred_check_branch
        %124 = sbr.rel (%p122) target = $region16
      $region15: #{scalekd_forward.11} parent=5 // pred_region
        // Predicated region
        $region17: #{scalekd_forward.11} parent=15 // pred_check
          %p125 = pneg %p32
        $region18: #{scalekd_forward.11} parent=15 // pred_check_branch
          %127 = sbr.rel (%p125) target = $region20
        $region19: #{scalekd_forward.11} parent=15 // pred_region
          %p128 = scmp.lt.s32.totalorder %s12, 1
          %s129 = scalar_select %p128, %s12, 1
          %s130 = smul.addr %s129, 8
          %s131 = smul.addr %s130, 8
          %s132 = scalar_lea.vmem %s0, %s131
        $region20: #{scalekd_forward.11} parent=15 // pred_fallthru
          _
        // Predicated region
        $region21: #{scalekd_forward.11} parent=15 // pred_check
          %p133 = pneg %p58
        $region22: #{scalekd_forward.11} parent=15 // pred_check_branch
          %135 = sbr.rel (%p133) target = $region24
        $region23: #{scalekd_forward.11} parent=15 // pred_region
          %p136 = scmp.lt.s32.totalorder %s12, 1
          %s137 = scalar_select %p136, %s12, 1
          %s138 = smul.addr %s137, 8
          %s139 = smul.addr %s138, 8
          %s140 = scalar_lea.vmem %s1, %s139
        $region24: #{scalekd_forward.11} parent=15 // pred_fallthru
          _
      $region16: #{scalekd_forward.11} parent=5 // pred_fallthru
        _
      %p141 = scmp.le.s32.totalorder 1, %s12
      %p142 = scmp.lt.s32.totalorder %s12, 3
      %p143 = pnand %p141, %p142
      %p144 = pneg %p143
      // Predicated region
      $region25: #{scalekd_forward.11} parent=5 // pred_check
        _
      $region26: #{scalekd_forward.11} parent=5 // pred_check_branch
        %146 = sbr.rel (%p143) target = $region28
      $region27: #{scalekd_forward.11} parent=5 // pred_region
        %s147 = ssub.s32 %s12, 1
        %p148 = scmp.lt.s32.totalorder %s17, 1
        %s149 = scalar_select %p148, %s17, 1
        %s150 = smul.addr %s149, 8
        %s151 = smul.addr %s150, 8
        %s152 = scalar_lea.vmem %s0, %s151
        %p153 = pneg %p38
        %p154 = pneg %p35
        %p155 = scmp.lt.s32.totalorder %s17, 1
        %s156 = scalar_select %p155, %s17, 1
        %s157 = smul.addr %s156, 8
        %s158 = smul.addr %s157, 8
        %s159 = scalar_lea.vmem %s1, %s158
        %p160 = pneg %p64
        %p161 = pneg %p61
        %p162 = pneg %p85
        %p163 = pneg %p82
        %p164 = pneg %p106
        %p165 = pneg %p103
        %p166 = scmp.lt.s32.totalorder %s17, 1
        %s167 = scalar_select %p166, %s17, 1
        %s168 = smul.addr %s167, 8
        %s169 = smul.addr %s168, 8
        %s170 = scalar_lea.vmem %s0, %s169
        %p171 = scmp.lt.s32.totalorder %s17, 1
        %s172 = scalar_select %p171, %s17, 1
        %s173 = smul.addr %s172, 8
        %s174 = smul.addr %s173, 8
        %s175 = scalar_lea.vmem %s1, %s174
        %v176 = vld [vmem:[%s170] sm:$0xff]
        %v177 = vld [vmem:[%s170 + $0x8] sm:$0xff]
        %v178 = vld [vmem:[%s170 + $0x10] sm:$0xff]
        %v179 = vld [vmem:[%s170 + $0x18] sm:$0xff]
        %v180 = vld [vmem:[%s170 + $0x20] sm:$0xff]
        %v181 = vld [vmem:[%s170 + $0x28] sm:$0xff]
        %v182 = vld [vmem:[%s170 + $0x30] sm:$0xff]
        %v183 = vld [vmem:[%s170 + $0x38] sm:$0xff]
        %v184 = vld [vmem:[%s175] sm:$0xff]
        %v185 = vld [vmem:[%s175 + $0x8] sm:$0xff]
        %v186 = vld [vmem:[%s175 + $0x10] sm:$0xff]
        %v187 = vld [vmem:[%s175 + $0x18] sm:$0xff]
        %v188 = vld [vmem:[%s175 + $0x20] sm:$0xff]
        %v189 = vld [vmem:[%s175 + $0x28] sm:$0xff]
        %v190 = vld [vmem:[%s175 + $0x30] sm:$0xff]
        %v191 = vld [vmem:[%s175 + $0x38] sm:$0xff]
        %vm192 = vcmask 261120
        %v193 = vsel %vm192, %v176, 0.0
        %v194 = vsel %vm192, %v177, 0.0
        %v195 = vadd.f32 %v193, %v194
        %v196 = vsel %vm192, %v178, 0.0
        %v197 = vadd.f32 %v195, %v196
        %v198 = vsel %vm192, %v179, 0.0
        %v199 = vadd.f32 %v197, %v198
        %v200 = vsel %vm192, %v180, 0.0
        %v201 = vadd.f32 %v199, %v200
        %v202 = vsel %vm192, %v181, 0.0
        %v203 = vadd.f32 %v201, %v202
        %v204 = vsel %vm192, %v182, 0.0
        %v205 = vadd.f32 %v203, %v204
        %v206 = vsel %vm192, %v183, 0.0
        %v207 = vadd.f32 %v205, %v206
        %v208 = vrot.slane %v207, 4
        %v209 = vadd.f32 %v207, %v208
        %v210 = vrot.slane %v209, 2
        %v211 = vadd.f32 %v209, %v210
        %v212 = vrot.slane %v211, 1
        %v213 = vadd.f32 %v211, %v212
        %v214 = vrcp.pop 64.0
        %v215 = vmul.f32 %v213, %v214
        %v216 = vsub.f32 %v176, %v215
        %v217 = vsub.f32 %v177, %v215
        %v218 = vsub.f32 %v178, %v215
        %v219 = vsub.f32 %v179, %v215
        %v220 = vsub.f32 %v180, %v215
        %v221 = vsub.f32 %v181, %v215
        %v222 = vsub.f32 %v182, %v215
        %v223 = vsub.f32 %v183, %v215
        %v224 = vsel %vm192, %v184, 0.0
        %v225 = vsel %vm192, %v185, 0.0
        %v226 = vadd.f32 %v224, %v225
        %v227 = vsel %vm192, %v186, 0.0
        %v228 = vadd.f32 %v226, %v227
        %v229 = vsel %vm192, %v187, 0.0
        %v230 = vadd.f32 %v228, %v229
        %v231 = vsel %vm192, %v188, 0.0
        %v232 = vadd.f32 %v230, %v231
        %v233 = vsel %vm192, %v189, 0.0
        %v234 = vadd.f32 %v232, %v233
        %v235 = vsel %vm192, %v190, 0.0
        %v236 = vadd.f32 %v234, %v235
        %v237 = vsel %vm192, %v191, 0.0
        %v238 = vadd.f32 %v236, %v237
        %v239 = vrot.slane %v238, 4
        %v240 = vadd.f32 %v238, %v239
        %v241 = vrot.slane %v240, 2
        %v242 = vadd.f32 %v240, %v241
        %v243 = vrot.slane %v242, 1
        %v244 = vadd.f32 %v242, %v243
        %v245 = vmul.f32 %v244, %v214
        %v246 = vsub.f32 %v184, %v245
        %v247 = vsub.f32 %v185, %v245
        %v248 = vsub.f32 %v186, %v245
        %v249 = vsub.f32 %v187, %v245
        %v250 = vsub.f32 %v188, %v245
        %v251 = vsub.f32 %v189, %v245
        %v252 = vsub.f32 %v190, %v245
        %v253 = vsub.f32 %v191, %v245
        %v254 = vmul.f32 %v216, %v216
        %v255 = vmul.f32 %v217, %v217
        %v256 = vmul.f32 %v218, %v218
        %v257 = vmul.f32 %v219, %v219
        %v258 = vmul.f32 %v220, %v220
        %v259 = vmul.f32 %v221, %v221
        %v260 = vmul.f32 %v222, %v222
        %v261 = vmul.f32 %v223, %v223
        %v262 = vsel %vm192, %v254, 0.0
        %263 = vadd.xlane.f32.xlu0 %v262
        %v264 = vpop.xlane.xlu0 %263
        %v265 = vsel %vm192, %v255, 0.0
        %266 = vadd.xlane.f32.xlu0 %v265
        %v267 = vpop.xlane.xlu0 %266
        %v268 = vsel %vm192, %v256, 0.0
        %269 = vadd.xlane.f32.xlu0 %v268
        %v270 = vpop.xlane.xlu0 %269
        %v271 = vsel %vm192, %v257, 0.0
        %272 = vadd.xlane.f32.xlu0 %v271
        %v273 = vpop.xlane.xlu0 %272
        %v274 = vsel %vm192, %v258, 0.0
        %275 = vadd.xlane.f32.xlu0 %v274
        %v276 = vpop.xlane.xlu0 %275
        %v277 = vsel %vm192, %v259, 0.0
        %278 = vadd.xlane.f32.xlu0 %v277
        %v279 = vpop.xlane.xlu0 %278
        %v280 = vsel %vm192, %v260, 0.0
        %281 = vadd.xlane.f32.xlu0 %v280
        %v282 = vpop.xlane.xlu0 %281
        %v283 = vsel %vm192, %v261, 0.0
        %284 = vadd.xlane.f32.xlu0 %v283
        %v285 = vpop.xlane.xlu0 %284
        %v286 = vrsqrt.pop %v264
        %v287 = vmul.f32 %v264, %v286
        %vm288 = vcmp.eq.f32.partialorder %v264, inf
        %v289 = vsel %vm288, %v264, %v287
        %vm290 = vcmp.eq.f32.partialorder %v264, 0.0
        %v291 = vand.u32 %v264, 2147483648
        %v292 = vsel %vm290, %v291, %v289
        %v293 = vrsqrt.pop %v267
        %v294 = vmul.f32 %v267, %v293
        %vm295 = vcmp.eq.f32.partialorder %v267, inf
        %v296 = vsel %vm295, %v267, %v294
        %vm297 = vcmp.eq.f32.partialorder %v267, 0.0
        %v298 = vand.u32 %v267, 2147483648
        %v299 = vsel %vm297, %v298, %v296
        %v300 = vrsqrt.pop %v270
        %v301 = vmul.f32 %v270, %v300
        %vm302 = vcmp.eq.f32.partialorder %v270, inf
        %v303 = vsel %vm302, %v270, %v301
        %vm304 = vcmp.eq.f32.partialorder %v270, 0.0
        %v305 = vand.u32 %v270, 2147483648
        %v306 = vsel %vm304, %v305, %v303
        %v307 = vrsqrt.pop %v273
        %v308 = vmul.f32 %v273, %v307
        %vm309 = vcmp.eq.f32.partialorder %v273, inf
        %v310 = vsel %vm309, %v273, %v308
        %vm311 = vcmp.eq.f32.partialorder %v273, 0.0
        %v312 = vand.u32 %v273, 2147483648
        %v313 = vsel %vm311, %v312, %v310
        %v314 = vrsqrt.pop %v276
        %v315 = vmul.f32 %v276, %v314
        %vm316 = vcmp.eq.f32.partialorder %v276, inf
        %v317 = vsel %vm316, %v276, %v315
        %vm318 = vcmp.eq.f32.partialorder %v276, 0.0
        %v319 = vand.u32 %v276, 2147483648
        %v320 = vsel %vm318, %v319, %v317
        %v321 = vrsqrt.pop %v279
        %v322 = vmul.f32 %v279, %v321
        %vm323 = vcmp.eq.f32.partialorder %v279, inf
        %v324 = vsel %vm323, %v279, %v322
        %vm325 = vcmp.eq.f32.partialorder %v279, 0.0
        %v326 = vand.u32 %v279, 2147483648
        %v327 = vsel %vm325, %v326, %v324
        %v328 = vrsqrt.pop %v282
        %v329 = vmul.f32 %v282, %v328
        %vm330 = vcmp.eq.f32.partialorder %v282, inf
        %v331 = vsel %vm330, %v282, %v329
        %vm332 = vcmp.eq.f32.partialorder %v282, 0.0
        %v333 = vand.u32 %v282, 2147483648
        %v334 = vsel %vm332, %v333, %v331
        %v335 = vrsqrt.pop %v285
        %v336 = vmul.f32 %v285, %v335
        %vm337 = vcmp.eq.f32.partialorder %v285, inf
        %v338 = vsel %vm337, %v285, %v336
        %vm339 = vcmp.eq.f32.partialorder %v285, 0.0
        %v340 = vand.u32 %v285, 2147483648
        %v341 = vsel %vm339, %v340, %v338
        %v342 = vmul.f32 %v246, %v246
        %v343 = vmul.f32 %v247, %v247
        %v344 = vmul.f32 %v248, %v248
        %v345 = vmul.f32 %v249, %v249
        %v346 = vmul.f32 %v250, %v250
        %v347 = vmul.f32 %v251, %v251
        %v348 = vmul.f32 %v252, %v252
        %v349 = vmul.f32 %v253, %v253
        %v350 = vsel %vm192, %v342, 0.0
        %351 = vadd.xlane.f32.xlu0 %v350
        %v352 = vpop.xlane.xlu0 %351
        %v353 = vsel %vm192, %v343, 0.0
        %354 = vadd.xlane.f32.xlu0 %v353
        %v355 = vpop.xlane.xlu0 %354
        %v356 = vsel %vm192, %v344, 0.0
        %357 = vadd.xlane.f32.xlu0 %v356
        %v358 = vpop.xlane.xlu0 %357
        %v359 = vsel %vm192, %v345, 0.0
        %360 = vadd.xlane.f32.xlu0 %v359
        %v361 = vpop.xlane.xlu0 %360
        %v362 = vsel %vm192, %v346, 0.0
        %363 = vadd.xlane.f32.xlu0 %v362
        %v364 = vpop.xlane.xlu0 %363
        %v365 = vsel %vm192, %v347, 0.0
        %366 = vadd.xlane.f32.xlu0 %v365
        %v367 = vpop.xlane.xlu0 %366
        %v368 = vsel %vm192, %v348, 0.0
        %369 = vadd.xlane.f32.xlu0 %v368
        %v370 = vpop.xlane.xlu0 %369
        %v371 = vsel %vm192, %v349, 0.0
        %372 = vadd.xlane.f32.xlu0 %v371
        %v373 = vpop.xlane.xlu0 %372
        %v374 = vrsqrt.pop %v352
        %v375 = vmul.f32 %v352, %v374
        %vm376 = vcmp.eq.f32.partialorder %v352, inf
        %v377 = vsel %vm376, %v352, %v375
        %vm378 = vcmp.eq.f32.partialorder %v352, 0.0
        %v379 = vand.u32 %v352, 2147483648
        %v380 = vsel %vm378, %v379, %v377
        %v381 = vrsqrt.pop %v355
        %v382 = vmul.f32 %v355, %v381
        %vm383 = vcmp.eq.f32.partialorder %v355, inf
        %v384 = vsel %vm383, %v355, %v382
        %vm385 = vcmp.eq.f32.partialorder %v355, 0.0
        %v386 = vand.u32 %v355, 2147483648
        %v387 = vsel %vm385, %v386, %v384
        %v388 = vrsqrt.pop %v358
        %v389 = vmul.f32 %v358, %v388
        %vm390 = vcmp.eq.f32.partialorder %v358, inf
        %v391 = vsel %vm390, %v358, %v389
        %vm392 = vcmp.eq.f32.partialorder %v358, 0.0
        %v393 = vand.u32 %v358, 2147483648
        %v394 = vsel %vm392, %v393, %v391
        %v395 = vrsqrt.pop %v361
        %v396 = vmul.f32 %v361, %v395
        %vm397 = vcmp.eq.f32.partialorder %v361, inf
        %v398 = vsel %vm397, %v361, %v396
        %vm399 = vcmp.eq.f32.partialorder %v361, 0.0
        %v400 = vand.u32 %v361, 2147483648
        %v401 = vsel %vm399, %v400, %v398
        %v402 = vrsqrt.pop %v364
        %v403 = vmul.f32 %v364, %v402
        %vm404 = vcmp.eq.f32.partialorder %v364, inf
        %v405 = vsel %vm404, %v364, %v403
        %vm406 = vcmp.eq.f32.partialorder %v364, 0.0
        %v407 = vand.u32 %v364, 2147483648
        %v408 = vsel %vm406, %v407, %v405
        %v409 = vrsqrt.pop %v367
        %v410 = vmul.f32 %v367, %v409
        %vm411 = vcmp.eq.f32.partialorder %v367, inf
        %v412 = vsel %vm411, %v367, %v410
        %vm413 = vcmp.eq.f32.partialorder %v367, 0.0
        %v414 = vand.u32 %v367, 2147483648
        %v415 = vsel %vm413, %v414, %v412
        %v416 = vrsqrt.pop %v370
        %v417 = vmul.f32 %v370, %v416
        %vm418 = vcmp.eq.f32.partialorder %v370, inf
        %v419 = vsel %vm418, %v370, %v417
        %vm420 = vcmp.eq.f32.partialorder %v370, 0.0
        %v421 = vand.u32 %v370, 2147483648
        %v422 = vsel %vm420, %v421, %v419
        %v423 = vrsqrt.pop %v373
        %v424 = vmul.f32 %v373, %v423
        %vm425 = vcmp.eq.f32.partialorder %v373, inf
        %v426 = vsel %vm425, %v373, %v424
        %vm427 = vcmp.eq.f32.partialorder %v373, 0.0
        %v428 = vand.u32 %v373, 2147483648
        %v429 = vsel %vm427, %v428, %v426
        %v430 = vmax.f32 %v292, 1e-12
        %v431 = vmax.f32 %v299, 1e-12
        %v432 = vmax.f32 %v306, 1e-12
        %v433 = vmax.f32 %v313, 1e-12
        %v434 = vmax.f32 %v320, 1e-12
        %v435 = vmax.f32 %v327, 1e-12
        %v436 = vmax.f32 %v334, 1e-12
        %v437 = vmax.f32 %v341, 1e-12
        %v438 = vrcp.pop %v430
        %v439 = vmul.f32 %v216, %v438
        %v440 = vrcp.pop %v431
        %v441 = vmul.f32 %v217, %v440
        %v442 = vrcp.pop %v432
        %v443 = vmul.f32 %v218, %v442
        %v444 = vrcp.pop %v433
        %v445 = vmul.f32 %v219, %v444
        %v446 = vrcp.pop %v434
        %v447 = vmul.f32 %v220, %v446
        %v448 = vrcp.pop %v435
        %v449 = vmul.f32 %v221, %v448
        %v450 = vrcp.pop %v436
        %v451 = vmul.f32 %v222, %v450
        %v452 = vrcp.pop %v437
        %v453 = vmul.f32 %v223, %v452
        %v454 = vmax.f32 %v380, 1e-12
        %v455 = vmax.f32 %v387, 1e-12
        %v456 = vmax.f32 %v394, 1e-12
        %v457 = vmax.f32 %v401, 1e-12
        %v458 = vmax.f32 %v408, 1e-12
        %v459 = vmax.f32 %v415, 1e-12
        %v460 = vmax.f32 %v422, 1e-12
        %v461 = vmax.f32 %v429, 1e-12
        %v462 = vrcp.pop %v454
        %v463 = vmul.f32 %v246, %v462
        %v464 = vrcp.pop %v455
        %v465 = vmul.f32 %v247, %v464
        %v466 = vrcp.pop %v456
        %v467 = vmul.f32 %v248, %v466
        %v468 = vrcp.pop %v457
        %v469 = vmul.f32 %v249, %v468
        %v470 = vrcp.pop %v458
        %v471 = vmul.f32 %v250, %v470
        %v472 = vrcp.pop %v459
        %v473 = vmul.f32 %v251, %v472
        %v474 = vrcp.pop %v460
        %v475 = vmul.f32 %v252, %v474
        %v476 = vrcp.pop %v461
        %v477 = vmul.f32 %v253, %v476
        %v478 = vsub.f32 %v439, %v463
        %v479 = vsub.f32 %v441, %v465
        %v480 = vsub.f32 %v443, %v467
        %v481 = vsub.f32 %v445, %v469
        %v482 = vsub.f32 %v447, %v471
        %v483 = vsub.f32 %v449, %v473
        %v484 = vsub.f32 %v451, %v475
        %v485 = vsub.f32 %v453, %v477
        %p486 = scmp.eq.s32.totalorder %s17, 0
        // Predicated region
        $region29: #{scalekd_forward.11} parent=27 // pred_check
          %p487 = pneg %p486
        $region30: #{scalekd_forward.11} parent=27 // pred_check_branch
          %489 = sbr.rel (%p487) target = $region32
        $region31: #{scalekd_forward.11} parent=27 // pred_region
          %vm490 = vcmask 0
          %491 = vst.msk [vmem:[#allocation2] sm:$0x1] %vm490, 0.0
          %492 = vst.msk [vmem:[#allocation4] sm:$0x1] %vm490, 0.0
        $region32: #{scalekd_forward.11} parent=27 // pred_fallthru
          _
        %v493 = vld [vmem:[#allocation2] sm:$0x1]
        %v494 = vmul.f32 %v478, %v478
        %v495 = vmul.f32 %v479, %v479
        %v496 = vmul.f32 %v480, %v480
        %v497 = vmul.f32 %v481, %v481
        %v498 = vmul.f32 %v482, %v482
        %v499 = vmul.f32 %v483, %v483
        %v500 = vmul.f32 %v484, %v484
        %v501 = vmul.f32 %v485, %v485
        %v502 = vsel %vm192, %v494, 0.0
        %v503 = vsel %vm192, %v495, 0.0
        %v504 = vadd.f32 %v502, %v503
        %v505 = vsel %vm192, %v496, 0.0
        %v506 = vadd.f32 %v504, %v505
        %v507 = vsel %vm192, %v497, 0.0
        %v508 = vadd.f32 %v506, %v507
        %v509 = vsel %vm192, %v498, 0.0
        %v510 = vadd.f32 %v508, %v509
        %v511 = vsel %vm192, %v499, 0.0
        %v512 = vadd.f32 %v510, %v511
        %v513 = vsel %vm192, %v500, 0.0
        %v514 = vadd.f32 %v512, %v513
        %v515 = vsel %vm192, %v501, 0.0
        %v516 = vadd.f32 %v514, %v515
        %517 = vadd.xlane.f32.xlu0 %v516
        %v518 = vpop.xlane.xlu0 %517
        %v519 = vrot.slane %v518, 4
        %v520 = vadd.f32 %v518, %v519
        %v521 = vrot.slane %v520, 2
        %v522 = vadd.f32 %v520, %v521
        %v523 = vrot.slane %v522, 1
        %v524 = vadd.f32 %v522, %v523
        %s525 = vtos %v524
        %v526 = vstv %s525
        %v527 = vadd.f32 %v493, %v526
        %vm528 = vcmask 0
        %529 = vst.msk [vmem:[#allocation2] sm:$0x1] %vm528, %v527
        %v530 = vld [vmem:[#allocation4] sm:$0x1]
        %v531 = vmul.f32 %v439, %v463
        %v532 = vmul.f32 %v441, %v465
        %v533 = vmul.f32 %v443, %v467
        %v534 = vmul.f32 %v445, %v469
        %v535 = vmul.f32 %v447, %v471
        %v536 = vmul.f32 %v449, %v473
        %v537 = vmul.f32 %v451, %v475
        %v538 = vmul.f32 %v453, %v477
        %v539 = vsel %vm192, %v531, 0.0
        %v540 = vsel %vm192, %v532, 0.0
        %v541 = vadd.f32 %v539, %v540
        %v542 = vsel %vm192, %v533, 0.0
        %v543 = vadd.f32 %v541, %v542
        %v544 = vsel %vm192, %v534, 0.0
        %v545 = vadd.f32 %v543, %v544
        %v546 = vsel %vm192, %v535, 0.0
        %v547 = vadd.f32 %v545, %v546
        %v548 = vsel %vm192, %v536, 0.0
        %v549 = vadd.f32 %v547, %v548
        %v550 = vsel %vm192, %v537, 0.0
        %v551 = vadd.f32 %v549, %v550
        %v552 = vsel %vm192, %v538, 0.0
        %v553 = vadd.f32 %v551, %v552
        %554 = vadd.xlane.f32.xlu0 %v553
        %v555 = vpop.xlane.xlu0 %554
        %v556 = vrot.slane %v555, 4
        %v557 = vadd.f32 %v555, %v556
        %v558 = vrot.slane %v557, 2
        %v559 = vadd.f32 %v557, %v558
        %v560 = vrot.slane %v559, 1
        %v561 = vadd.f32 %v559, %v560
        %s562 = vtos %v561
        %v563 = vstv %s562
        %v564 = vadd.f32 %v530, %v563
        %565 = vst.msk [vmem:[#allocation4] sm:$0x1] %vm528, %v564
        // Predicated region
        $region33: #{scalekd_forward.11} parent=27 // pred_check
          %p566 = pneg %p82
        $region34: #{scalekd_forward.11} parent=27 // pred_check_branch
          %568 = sbr.rel (%p566) target = $region36
        $region35: #{scalekd_forward.11} parent=27 // pred_region
          %s570 = ssub.s32 16, 16
          %571 = vsyncadd [#allocation3], %s570
          %s573 = sshll.u32 [#allocation2], 4
          %s574 = int_to_ptr.vmem [resolvable:$true] %s573
          %576 = dma.vmem_to_hbm [thread:$0]  %s574, 16, %s2, [#allocation3]
        $region36: #{scalekd_forward.11} parent=27 // pred_fallthru
          _
        // Predicated region
        $region37: #{scalekd_forward.11} parent=27 // pred_check
          %p577 = pneg %p103
        $region38: #{scalekd_forward.11} parent=27 // pred_check_branch
          %579 = sbr.rel (%p577) target = $region40
        $region39: #{scalekd_forward.11} parent=27 // pred_region
          %s581 = ssub.s32 16, 16
          %582 = vsyncadd [#allocation5], %s581
          %s584 = sshll.u32 [#allocation4], 4
          %s585 = int_to_ptr.vmem [resolvable:$true] %s584
          %587 = dma.vmem_to_hbm [thread:$0]  %s585, 16, %s3, [#allocation5]
        $region40: #{scalekd_forward.11} parent=27 // pred_fallthru
          _
        // Predicated region
        $region41: #{scalekd_forward.11} parent=27 // pred_check
          %p588 = pneg %p82
        $region42: #{scalekd_forward.11} parent=27 // pred_check_branch
          %590 = sbr.rel (%p588) target = $region44
        $region43: #{scalekd_forward.11} parent=27 // pred_region
          %591 = dma.done [#allocation3], 16
        $region44: #{scalekd_forward.11} parent=27 // pred_fallthru
          _
        // Predicated region
        $region45: #{scalekd_forward.11} parent=27 // pred_check
          %p592 = pneg %p103
        $region46: #{scalekd_forward.11} parent=27 // pred_check_branch
          %594 = sbr.rel (%p592) target = $region48
        $region47: #{scalekd_forward.11} parent=27 // pred_region
          %595 = dma.done [#allocation5], 16
        $region48: #{scalekd_forward.11} parent=27 // pred_fallthru
          _
      $region28: #{scalekd_forward.11} parent=5 // pred_fallthru
        _
      %p596 = scmp.le.s32.totalorder 2, %s12
      // Predicated region
      $region49: #{scalekd_forward.11} parent=5 // pred_check
        %p597 = pneg %p596
      $region50: #{scalekd_forward.11} parent=5 // pred_check_branch
        %599 = sbr.rel (%p597) target = $region52
      $region51: #{scalekd_forward.11} parent=5 // pred_region
        %s600 = ssub.s32 %s12, 2
      $region52: #{scalekd_forward.11} parent=5 // pred_fallthru
        _
    $region6: #{scalekd_forward.11} parent=1 // loop_footer
      %s16 = sadd.s32 1, %s12
    $region7: #{scalekd_forward.11} parent=1 // loop_footer_branch
      %11 = sbr.rel target = $region3
    $region8: #{scalekd_forward.11} parent=1 // loop_exit
      _
    %601 = vsyncpa [#allocation3], 1
    %s602 = scalar_lea.sflag [#allocation3], 1
    %603 = vsyncpa %s602, 1
    %604 = vsyncpa [#allocation5], 1

// kernel: scalekd_forward.10
$region0: #{scalekd_forward.10}
  #allocation0 [shape = 'u32[]', space=smem, size = 0x4, offset = 0x4, fixed_abs, tag = 'smem constant byte address 0x4 - core index']
  #allocation1 [shape = 'u32[144,128]{1,0:T(1,128)}', space=vmem, size = 0x12000, scoped, tag = 'internal scratch']
  %s0 = inlined_call_operand.vmem [shape: f32[2,64,32], index: 0, kind: input, shape index: {}]
  %s1 = inlined_call_operand.vmem [shape: f32[2,64,32], index: 1, kind: input, shape index: {}]
  %s2 = inlined_call_operand.hbm [shape: f32[1,1], index: 2, kind: output, shape index: {0}]
  %s3 = inlined_call_operand.hbm [shape: f32[1,1], index: 3, kind: output, shape index: {1}]
  %4 = xla_tuple %s2, %s3
  %s5 = sld [smem:[#allocation0]]
  $region53: #{scalekd_forward.10} parent=0
    _
  %s7 = ssub.s32 1, %s5
  %s8 = scalar_select 0, %s7, %s5
  $region1: #{scalekd_forward.10} parent=0
    #allocation2 [shape = 'u8[512]{0}', space=vmem, size = 0x400, scoped, tag = 'output window, operand 0, single buffered']
    #allocation3 [shape = 's32[2]{0}', space=sflag, size = 0x8, scoped, tag = 'scoped memory for scalekd_forward.10']
    #allocation4 [shape = 'u8[512]{0}', space=vmem, size = 0x400, scoped, tag = 'output window, operand 1, single buffered']
    #allocation5 [shape = 's32[1]{0}', space=sflag, size = 0x4, scoped, tag = 'scoped memory for scalekd_forward.10']
    %9 = vsyncpa [#allocation3], 0
    %10 = vsyncpa [#allocation5], 0
    loop: start=0, step=1, limit=4
    $region2: #{scalekd_forward.10} parent=1 // loop_pre_header
      _
    $region3: #{scalekd_forward.10} parent=1 // loop_header
      %s12 = sphi 0, %s16
      %p13 = scmp.ge.s32.totalorder %s12, 4
      %s22 = sphi 0, %s24
      %s25 = sphi 0, %s22
      %s26 = sphi 0, %s25
      %s42 = sphi 0, %s26
      %s48 = sphi 0, %s50
      %s51 = sphi 0, %s48
      %s52 = sphi 0, %s51
      %s68 = sphi 0, %s52
      %s72 = sphi 0, %s72
      %s74 = sphi 0, %s72
      %s75 = sphi 0, %s74
      %s89 = sphi 0, %s75
      %s93 = sphi 0, %s93
      %s95 = sphi 0, %s93
      %s96 = sphi 0, %s95
      %s110 = sphi 0, %s96
    $region4: #{scalekd_forward.10} parent=1 // loop_header_branch
      %15 = sbr.rel (%p13) target = $region8
    $region5: #{scalekd_forward.10} parent=1 // loop_body
      %s17 = ssub.s32 %s12, 1
      %s18 = ssub.s32 %s12, 2
      %s19 = sadd.s32 %s12, 1
      %s20 = ssub.s32 %s12, %s19
      %p21 = scmp.eq.s32.totalorder %s20, 0
      %s23 = sadd.s32 %s22, 1
      %s24 = scalar_select %p21, %s22, %s23
      %p27 = pneg %p21
      %p28 = scmp.eq.s32.totalorder %s12, 1
      %p29 = por %p27, %p28
      %p30 = scmp.ne.s32.totalorder %s22, %s25
      %p31 = scmp.eq.s32.totalorder %s12, 0
      %p32 = por %p30, %p31
      %p33 = scmp.ne.s32.totalorder %s22, %s25
      %p34 = scmp.eq.s32.totalorder %s17, 1
      %p35 = por %p33, %p34
      %p36 = scmp.ne.s32.totalorder %s25, %s26
      %p37 = scmp.eq.s32.totalorder %s17, 0
      %p38 = por %p36, %p37
      %p39 = scmp.ne.s32.totalorder %s25, %s26
      %p40 = scmp.eq.s32.totalorder %s18, 1
      %p41 = por %p39, %p40
      %p43 = scmp.ne.s32.totalorder %s26, %s42
      %p44 = scmp.eq.s32.totalorder %s18, 0
      %p45 = por %p43, %p44
      %s46 = ssub.s32 %s12, %s19
      %p47 = scmp.eq.s32.totalorder %s46, 0
      %s49 = sadd.s32 %s48, 1
      %s50 = scalar_select %p47, %s48, %s49
      %p53 = pneg %p47
      %p54 = scmp.eq.s32.totalorder %s12, 1
      %p55 = por %p53, %p54
      %p56 = scmp.ne.s32.totalorder %s48, %s51
      %p57 = scmp.eq.s32.totalorder %s12, 0
      %p58 = por %p56, %p57
      %p59 = scmp.ne.s32.totalorder %s48, %s51
      %p60 = scmp.eq.s32.totalorder %s17, 1
      %p61 = por %p59, %p60
      %p62 = scmp.ne.s32.totalorder %s51, %s52
      %p63 = scmp.eq.s32.totalorder %s17, 0
      %p64 = por %p62, %p63
      %p65 = scmp.ne.s32.totalorder %s51, %s52
      %p66 = scmp.eq.s32.totalorder %s18, 1
      %p67 = por %p65, %p66
      %p69 = scmp.ne.s32.totalorder %s52, %s68
      %p70 = scmp.eq.s32.totalorder %s18, 0
      %p71 = por %p69, %p70
      %s73 = sadd.s32 %s72, 1
      %p76 = scmp.eq.s32.totalorder %s12, 1
      %p77 = scmp.ne.s32.totalorder %s72, %s74
      %p78 = scmp.eq.s32.totalorder %s12, 0
      %p79 = por %p77, %p78
      %p80 = scmp.ne.s32.totalorder %s72, %s74
      %p81 = scmp.eq.s32.totalorder %s17, 1
      %p82 = por %p80, %p81
      %p83 = scmp.ne.s32.totalorder %s74, %s75
      %p84 = scmp.eq.s32.totalorder %s17, 0
      %p85 = por %p83, %p84
      %p86 = scmp.ne.s32.totalorder %s74, %s75
      %p87 = scmp.eq.s32.totalorder %s18, 1
      %p88 = por %p86, %p87
      %p90 = scmp.ne.s32.totalorder %s75, %s89
      %p91 = scmp.eq.s32.totalorder %s18, 0
      %p92 = por %p90, %p91
      %s94 = sadd.s32 %s93, 1
      %p97 = scmp.eq.s32.totalorder %s12, 1
      %p98 = scmp.ne.s32.totalorder %s93, %s95
      %p99 = scmp.eq.s32.totalorder %s12, 0
      %p100 = por %p98, %p99
      %p101 = scmp.ne.s32.totalorder %s93, %s95
      %p102 = scmp.eq.s32.totalorder %s17, 1
      %p103 = por %p101, %p102
      %p104 = scmp.ne.s32.totalorder %s95, %s96
      %p105 = scmp.eq.s32.totalorder %s17, 0
      %p106 = por %p104, %p105
      %p107 = scmp.ne.s32.totalorder %s95, %s96
      %p108 = scmp.eq.s32.totalorder %s18, 1
      %p109 = por %p107, %p108
      %p111 = scmp.ne.s32.totalorder %s96, %s110
      %p112 = scmp.eq.s32.totalorder %s18, 0
      %p113 = por %p111, %p112
      %p114 = scmp.le.s32.totalorder 1, %s12
      %p115 = scmp.lt.s32.totalorder %s12, 3
      %p116 = pnand %p114, %p115
      %p117 = pneg %p116
      // Predicated region
      $region9: #{scalekd_forward.10} parent=5 // pred_check
        _
      $region10: #{scalekd_forward.10} parent=5 // pred_check_branch
        %119 = sbr.rel (%p116) target = $region12
      $region11: #{scalekd_forward.10} parent=5 // pred_region
        %s120 = ssub.s32 %s12, 1
      $region12: #{scalekd_forward.10} parent=5 // pred_fallthru
        _
      %p121 = scmp.lt.s32.totalorder %s12, 2
      // Predicated region
      $region13: #{scalekd_forward.10} parent=5 // pred_check
        %p122 = pneg %p121
      $region14: #{scalekd_forward.10} parent=5 // pred_check_branch
        %124 = sbr.rel (%p122) target = $region16
      $region15: #{scalekd_forward.10} parent=5 // pred_region
        // Predicated region
        $region17: #{scalekd_forward.10} parent=15 // pred_check
          %p125 = pneg %p32
        $region18: #{scalekd_forward.10} parent=15 // pred_check_branch
          %127 = sbr.rel (%p125) target = $region20
        $region19: #{scalekd_forward.10} parent=15 // pred_region
          %p128 = scmp.lt.s32.totalorder %s12, 1
          %s129 = scalar_select %p128, %s12, 1
          %s130 = smul.addr %s129, 8
          %s131 = smul.addr %s130, 8
          %s132 = scalar_lea.vmem %s0, %s131
        $region20: #{scalekd_forward.10} parent=15 // pred_fallthru
          _
        // Predicated region
        $region21: #{scalekd_forward.10} parent=15 // pred_check
          %p133 = pneg %p58
        $region22: #{scalekd_forward.10} parent=15 // pred_check_branch
          %135 = sbr.rel (%p133) target = $region24
        $region23: #{scalekd_forward.10} parent=15 // pred_region
          %p136 = scmp.lt.s32.totalorder %s12, 1
          %s137 = scalar_select %p136, %s12, 1
          %s138 = smul.addr %s137, 8
          %s139 = smul.addr %s138, 8
          %s140 = scalar_lea.vmem %s1, %s139
        $region24: #{scalekd_forward.10} parent=15 // pred_fallthru
          _
      $region16: #{scalekd_forward.10} parent=5 // pred_fallthru
        _
      %p141 = scmp.le.s32.totalorder 1, %s12
      %p142 = scmp.lt.s32.totalorder %s12, 3
      %p143 = pnand %p141, %p142
      %p144 = pneg %p143
      // Predicated region
      $region25: #{scalekd_forward.10} parent=5 // pred_check
        _
      $region26: #{scalekd_forward.10} parent=5 // pred_check_branch
        %146 = sbr.rel (%p143) target = $region28
      $region27: #{scalekd_forward.10} parent=5 // pred_region
        %s147 = ssub.s32 %s12, 1
        %p148 = scmp.lt.s32.totalorder %s17, 1
        %s149 = scalar_select %p148, %s17, 1
        %s150 = smul.addr %s149, 8
        %s151 = smul.addr %s150, 8
        %s152 = scalar_lea.vmem %s0, %s151
        %p153 = pneg %p38
        %p154 = pneg %p35
        %p155 = scmp.lt.s32.totalorder %s17, 1
        %s156 = scalar_select %p155, %s17, 1
        %s157 = smul.addr %s156, 8
        %s158 = smul.addr %s157, 8
        %s159 = scalar_lea.vmem %s1, %s158
        %p160 = pneg %p64
        %p161 = pneg %p61
        %p162 = pneg %p85
        %p163 = pneg %p82
        %p164 = pneg %p106
        %p165 = pneg %p103
        %p166 = scmp.lt.s32.totalorder %s17, 1
        %s167 = scalar_select %p166, %s17, 1
        %s168 = smul.addr %s167, 8
        %s169 = smul.addr %s168, 8
        %s170 = scalar_lea.vmem %s0, %s169
        %p171 = scmp.lt.s32.totalorder %s17, 1
        %s172 = scalar_select %p171, %s17, 1
        %s173 = smul.addr %s172, 8
        %s174 = smul.addr %s173, 8
        %s175 = scalar_lea.vmem %s1, %s174
        %v176 = vld [vmem:[%s170] sm:$0xff]
        %v177 = vld [vmem:[%s170 + $0x8] sm:$0xff]
        %v178 = vld [vmem:[%s170 + $0x10] sm:$0xff]
        %v179 = vld [vmem:[%s170 + $0x18] sm:$0xff]
        %v180 = vld [vmem:[%s170 + $0x20] sm:$0xff]
        %v181 = vld [vmem:[%s170 + $0x28] sm:$0xff]
        %v182 = vld [vmem:[%s170 + $0x30] sm:$0xff]
        %v183 = vld [vmem:[%s170 + $0x38] sm:$0xff]
        %v184 = vld [vmem:[%s175] sm:$0xff]
        %v185 = vld [vmem:[%s175 + $0x8] sm:$0xff]
        %v186 = vld [vmem:[%s175 + $0x10] sm:$0xff]
        %v187 = vld [vmem:[%s175 + $0x18] sm:$0xff]
        %v188 = vld [vmem:[%s175 + $0x20] sm:$0xff]
        %v189 = vld [vmem:[%s175 + $0x28] sm:$0xff]
        %v190 = vld [vmem:[%s175 + $0x30] sm:$0xff]
        %v191 = vld [vmem:[%s175 + $0x38] sm:$0xff]
        %v192 = vmul.f32 %v176, %v176
        %v193 = vmul.f32 %v177, %v177
        %v194 = vmul.f32 %v178, %v178
        %v195 = vmul.f32 %v179, %v179
        %v196 = vmul.f32 %v180, %v180
        %v197 = vmul.f32 %v181, %v181
        %v198 = vmul.f32 %v182, %v182
        %v199 = vmul.f32 %v183, %v183
        %vm200 = vcmask 261120
        %v201 = vsel %vm200, %v192, 0.0
        %202 = vadd.xlane.f32.xlu0 %v201
        %v203 = vpop.xlane.xlu0 %202
        %v204 = vsel %vm200, %v193, 0.0
        %205 = vadd.xlane.f32.xlu0 %v204
        %v206 = vpop.xlane.xlu0 %205
        %v207 = vsel %vm200, %v194, 0.0
        %208 = vadd.xlane.f32.xlu0 %v207
        %v209 = vpop.xlane.xlu0 %208
        %v210 = vsel %vm200, %v195, 0.0
        %211 = vadd.xlane.f32.xlu0 %v210
        %v212 = vpop.xlane.xlu0 %211
        %v213 = vsel %vm200, %v196, 0.0
        %214 = vadd.xlane.f32.xlu0 %v213
        %v215 = vpop.xlane.xlu0 %214
        %v216 = vsel %vm200, %v197, 0.0
        %217 = vadd.xlane.f32.xlu0 %v216
        %v218 = vpop.xlane.xlu0 %217
        %v219 = vsel %vm200, %v198, 0.0
        %220 = vadd.xlane.f32.xlu0 %v219
        %v221 = vpop.xlane.xlu0 %220
        %v222 = vsel %vm200, %v199, 0.0
        %223 = vadd.xlane.f32.xlu0 %v222
        %v224 = vpop.xlane.xlu0 %223
        %v225 = vrsqrt.pop %v203
        %v226 = vmul.f32 %v203, %v225
        %vm227 = vcmp.eq.f32.partialorder %v203, inf
        %v228 = vsel %vm227, %v203, %v226
        %vm229 = vcmp.eq.f32.partialorder %v203, 0.0
        %v230 = vand.u32 %v203, 2147483648
        %v231 = vsel %vm229, %v230, %v228
        %v232 = vrsqrt.pop %v206
        %v233 = vmul.f32 %v206, %v232
        %vm234 = vcmp.eq.f32.partialorder %v206, inf
        %v235 = vsel %vm234, %v206, %v233
        %vm236 = vcmp.eq.f32.partialorder %v206, 0.0
        %v237 = vand.u32 %v206, 2147483648
        %v238 = vsel %vm236, %v237, %v235
        %v239 = vrsqrt.pop %v209
        %v240 = vmul.f32 %v209, %v239
        %vm241 = vcmp.eq.f32.partialorder %v209, inf
        %v242 = vsel %vm241, %v209, %v240
        %vm243 = vcmp.eq.f32.partialorder %v209, 0.0
        %v244 = vand.u32 %v209, 2147483648
        %v245 = vsel %vm243, %v244, %v242
        %v246 = vrsqrt.pop %v212
        %v247 = vmul.f32 %v212, %v246
        %vm248 = vcmp.eq.f32.partialorder %v212, inf
        %v249 = vsel %vm248, %v212, %v247
        %vm250 = vcmp.eq.f32.partialorder %v212, 0.0
        %v251 = vand.u32 %v212, 2147483648
        %v252 = vsel %vm250, %v251, %v249
        %v253 = vrsqrt.pop %v215
        %v254 = vmul.f32 %v215, %v253
        %vm255 = vcmp.eq.f32.partialorder %v215, inf
        %v256 = vsel %vm255, %v215, %v254
        %vm257 = vcmp.eq.f32.partialorder %v215, 0.0
        %v258 = vand.u32 %v215, 2147483648
        %v259 = vsel %vm257, %v258, %v256
        %v260 = vrsqrt.pop %v218
        %v261 = vmul.f32 %v218, %v260
        %vm262 = vcmp.eq.f32.partialorder %v218, inf
        %v263 = vsel %vm262, %v218, %v261
        %vm264 = vcmp.eq.f32.partialorder %v218, 0.0
        %v265 = vand.u32 %v218, 2147483648
        %v266 = vsel %vm264, %v265, %v263
        %v267 = vrsqrt.pop %v221
        %v268 = vmul.f32 %v221, %v267
        %vm269 = vcmp.eq.f32.partialorder %v221, inf
        %v270 = vsel %vm269, %v221, %v268
        %vm271 = vcmp.eq.f32.partialorder %v221, 0.0
        %v272 = vand.u32 %v221, 2147483648
        %v273 = vsel %vm271, %v272, %v270
        %v274 = vrsqrt.pop %v224
        %v275 = vmul.f32 %v224, %v274
        %vm276 = vcmp.eq.f32.partialorder %v224, inf
        %v277 = vsel %vm276, %v224, %v275
        %vm278 = vcmp.eq.f32.partialorder %v224, 0.0
        %v279 = vand.u32 %v224, 2147483648
        %v280 = vsel %vm278, %v279, %v277
        %v281 = vmul.f32 %v184, %v184
        %v282 = vmul.f32 %v185, %v185
        %v283 = vmul.f32 %v186, %v186
        %v284 = vmul.f32 %v187, %v187
        %v285 = vmul.f32 %v188, %v188
        %v286 = vmul.f32 %v189, %v189
        %v287 = vmul.f32 %v190, %v190
        %v288 = vmul.f32 %v191, %v191
        %v289 = vsel %vm200, %v281, 0.0
        %290 = vadd.xlane.f32.xlu0 %v289
        %v291 = vpop.xlane.xlu0 %290
        %v292 = vsel %vm200, %v282, 0.0
        %293 = vadd.xlane.f32.xlu0 %v292
        %v294 = vpop.xlane.xlu0 %293
        %v295 = vsel %vm200, %v283, 0.0
        %296 = vadd.xlane.f32.xlu0 %v295
        %v297 = vpop.xlane.xlu0 %296
        %v298 = vsel %vm200, %v284, 0.0
        %299 = vadd.xlane.f32.xlu0 %v298
        %v300 = vpop.xlane.xlu0 %299
        %v301 = vsel %vm200, %v285, 0.0
        %302 = vadd.xlane.f32.xlu0 %v301
        %v303 = vpop.xlane.xlu0 %302
        %v304 = vsel %vm200, %v286, 0.0
        %305 = vadd.xlane.f32.xlu0 %v304
        %v306 = vpop.xlane.xlu0 %305
        %v307 = vsel %vm200, %v287, 0.0
        %308 = vadd.xlane.f32.xlu0 %v307
        %v309 = vpop.xlane.xlu0 %308
        %v310 = vsel %vm200, %v288, 0.0
        %311 = vadd.xlane.f32.xlu0 %v310
        %v312 = vpop.xlane.xlu0 %311
        %v313 = vrsqrt.pop %v291
        %v314 = vmul.f32 %v291, %v313
        %vm315 = vcmp.eq.f32.partialorder %v291, inf
        %v316 = vsel %vm315, %v291, %v314
        %vm317 = vcmp.eq.f32.partialorder %v291, 0.0
        %v318 = vand.u32 %v291, 2147483648
        %v319 = vsel %vm317, %v318, %v316
        %v320 = vrsqrt.pop %v294
        %v321 = vmul.f32 %v294, %v320
        %vm322 = vcmp.eq.f32.partialorder %v294, inf
        %v323 = vsel %vm322, %v294, %v321
        %vm324 = vcmp.eq.f32.partialorder %v294, 0.0
        %v325 = vand.u32 %v294, 2147483648
        %v326 = vsel %vm324, %v325, %v323
        %v327 = vrsqrt.pop %v297
        %v328 = vmul.f32 %v297, %v327
        %vm329 = vcmp.eq.f32.partialorder %v297, inf
        %v330 = vsel %vm329, %v297, %v328
        %vm331 = vcmp.eq.f32.partialorder %v297, 0.0
        %v332 = vand.u32 %v297, 2147483648
        %v333 = vsel %vm331, %v332, %v330
        %v334 = vrsqrt.pop %v300
        %v335 = vmul.f32 %v300, %v334
        %vm336 = vcmp.eq.f32.partialorder %v300, inf
        %v337 = vsel %vm336, %v300, %v335
        %vm338 = vcmp.eq.f32.partialorder %v300, 0.0
        %v339 = vand.u32 %v300, 2147483648
        %v340 = vsel %vm338, %v339, %v337
        %v341 = vrsqrt.pop %v303
        %v342 = vmul.f32 %v303, %v341
        %vm343 = vcmp.eq.f32.partialorder %v303, inf
        %v344 = vsel %vm343, %v303, %v342
        %vm345 = vcmp.eq.f32.partialorder %v303, 0.0
        %v346 = vand.u32 %v303, 2147483648
        %v347 = vsel %vm345, %v346, %v344
        %v348 = vrsqrt.pop %v306
        %v349 = vmul.f32 %v306, %v348
        %vm350 = vcmp.eq.f32.partialorder %v306, inf
        %v351 = vsel %vm350, %v306, %v349
        %vm352 = vcmp.eq.f32.partialorder %v306, 0.0
        %v353 = vand.u32 %v306, 2147483648
        %v354 = vsel %vm352, %v353, %v351
        %v355 = vrsqrt.pop %v309
        %v356 = vmul.f32 %v309, %v355
        %vm357 = vcmp.eq.f32.partialorder %v309, inf
        %v358 = vsel %vm357, %v309, %v356
        %vm359 = vcmp.eq.f32.partialorder %v309, 0.0
        %v360 = vand.u32 %v309, 2147483648
        %v361 = vsel %vm359, %v360, %v358
        %v362 = vrsqrt.pop %v312
        %v363 = vmul.f32 %v312, %v362
        %vm364 = vcmp.eq.f32.partialorder %v312, inf
        %v365 = vsel %vm364, %v312, %v363
        %vm366 = vcmp.eq.f32.partialorder %v312, 0.0
        %v367 = vand.u32 %v312, 2147483648
        %v368 = vsel %vm366, %v367, %v365
        %v369 = vmax.f32 %v231, 1e-12
        %v370 = vmax.f32 %v238, 1e-12
        %v371 = vmax.f32 %v245, 1e-12
        %v372 = vmax.f32 %v252, 1e-12
        %v373 = vmax.f32 %v259, 1e-12
        %v374 = vmax.f32 %v266, 1e-12
        %v375 = vmax.f32 %v273, 1e-12
        %v376 = vmax.f32 %v280, 1e-12
        %v377 = vrcp.pop %v369
        %v378 = vmul.f32 %v176, %v377
        %v379 = vrcp.pop %v370
        %v380 = vmul.f32 %v177, %v379
        %v381 = vrcp.pop %v371
        %v382 = vmul.f32 %v178, %v381
        %v383 = vrcp.pop %v372
        %v384 = vmul.f32 %v179, %v383
        %v385 = vrcp.pop %v373
        %v386 = vmul.f32 %v180, %v385
        %v387 = vrcp.pop %v374
        %v388 = vmul.f32 %v181, %v387
        %v389 = vrcp.pop %v375
        %v390 = vmul.f32 %v182, %v389
        %v391 = vrcp.pop %v376
        %v392 = vmul.f32 %v183, %v391
        %v393 = vmax.f32 %v319, 1e-12
        %v394 = vmax.f32 %v326, 1e-12
        %v395 = vmax.f32 %v333, 1e-12
        %v396 = vmax.f32 %v340, 1e-12
        %v397 = vmax.f32 %v347, 1e-12
        %v398 = vmax.f32 %v354, 1e-12
        %v399 = vmax.f32 %v361, 1e-12
        %v400 = vmax.f32 %v368, 1e-12
        %v401 = vrcp.pop %v393
        %v402 = vmul.f32 %v184, %v401
        %v403 = vrcp.pop %v394
        %v404 = vmul.f32 %v185, %v403
        %v405 = vrcp.pop %v395
        %v406 = vmul.f32 %v186, %v405
        %v407 = vrcp.pop %v396
        %v408 = vmul.f32 %v187, %v407
        %v409 = vrcp.pop %v397
        %v410 = vmul.f32 %v188, %v409
        %v411 = vrcp.pop %v398
        %v412 = vmul.f32 %v189, %v411
        %v413 = vrcp.pop %v399
        %v414 = vmul.f32 %v190, %v413
        %v415 = vrcp.pop %v400
        %v416 = vmul.f32 %v191, %v415
        %v417 = vsub.f32 %v378, %v402
        %v418 = vsub.f32 %v380, %v404
        %v419 = vsub.f32 %v382, %v406
        %v420 = vsub.f32 %v384, %v408
        %v421 = vsub.f32 %v386, %v410
        %v422 = vsub.f32 %v388, %v412
        %v423 = vsub.f32 %v390, %v414
        %v424 = vsub.f32 %v392, %v416
        %p425 = scmp.eq.s32.totalorder %s17, 0
        // Predicated region
        $region29: #{scalekd_forward.10} parent=27 // pred_check
          %p426 = pneg %p425
        $region30: #{scalekd_forward.10} parent=27 // pred_check_branch
          %428 = sbr.rel (%p426) target = $region32
        $region31: #{scalekd_forward.10} parent=27 // pred_region
          %vm429 = vcmask 0
          %430 = vst.msk [vmem:[#allocation2] sm:$0x1] %vm429, 0.0
          %431 = vst.msk [vmem:[#allocation4] sm:$0x1] %vm429, 0.0
        $region32: #{scalekd_forward.10} parent=27 // pred_fallthru
          _
        %v432 = vld [vmem:[#allocation2] sm:$0x1]
        %v433 = vmul.f32 %v417, %v417
        %v434 = vmul.f32 %v418, %v418
        %v435 = vmul.f32 %v419, %v419
        %v436 = vmul.f32 %v420, %v420
        %v437 = vmul.f32 %v421, %v421
        %v438 = vmul.f32 %v422, %v422
        %v439 = vmul.f32 %v423, %v423
        %v440 = vmul.f32 %v424, %v424
        %v441 = vsel %vm200, %v433, 0.0
        %v442 = vsel %vm200, %v434, 0.0
        %v443 = vadd.f32 %v441, %v442
        %v444 = vsel %vm200, %v435, 0.0
        %v445 = vadd.f32 %v443, %v444
        %v446 = vsel %vm200, %v436, 0.0
        %v447 = vadd.f32 %v445, %v446
        %v448 = vsel %vm200, %v437, 0.0
        %v449 = vadd.f32 %v447, %v448
        %v450 = vsel %vm200, %v438, 0.0
        %v451 = vadd.f32 %v449, %v450
        %v452 = vsel %vm200, %v439, 0.0
        %v453 = vadd.f32 %v451, %v452
        %v454 = vsel %vm200, %v440, 0.0
        %v455 = vadd.f32 %v453, %v454
        %456 = vadd.xlane.f32.xlu0 %v455
        %v457 = vpop.xlane.xlu0 %456
        %v458 = vrot.slane %v457, 4
        %v459 = vadd.f32 %v457, %v458
        %v460 = vrot.slane %v459, 2
        %v461 = vadd.f32 %v459, %v460
        %v462 = vrot.slane %v461, 1
        %v463 = vadd.f32 %v461, %v462
        %s464 = vtos %v463
        %v465 = vstv %s464
        %v466 = vadd.f32 %v432, %v465
        %vm467 = vcmask 0
        %468 = vst.msk [vmem:[#allocation2] sm:$0x1] %vm467, %v466
        %v469 = vld [vmem:[#allocation4] sm:$0x1]
        %v470 = vmul.f32 %v378, %v402
        %v471 = vmul.f32 %v380, %v404
        %v472 = vmul.f32 %v382, %v406
        %v473 = vmul.f32 %v384, %v408
        %v474 = vmul.f32 %v386, %v410
        %v475 = vmul.f32 %v388, %v412
        %v476 = vmul.f32 %v390, %v414
        %v477 = vmul.f32 %v392, %v416
        %v478 = vsel %vm200, %v470, 0.0
        %v479 = vsel %vm200, %v471, 0.0
        %v480 = vadd.f32 %v478, %v479
        %v481 = vsel %vm200, %v472, 0.0
        %v482 = vadd.f32 %v480, %v481
        %v483 = vsel %vm200, %v473, 0.0
        %v484 = vadd.f32 %v482, %v483
        %v485 = vsel %vm200, %v474, 0.0
        %v486 = vadd.f32 %v484, %v485
        %v487 = vsel %vm200, %v475, 0.0
        %v488 = vadd.f32 %v486, %v487
        %v489 = vsel %vm200, %v476, 0.0
        %v490 = vadd.f32 %v488, %v489
        %v491 = vsel %vm200, %v477, 0.0
        %v492 = vadd.f32 %v490, %v491
        %493 = vadd.xlane.f32.xlu0 %v492
        %v494 = vpop.xlane.xlu0 %493
        %v495 = vrot.slane %v494, 4
        %v496 = vadd.f32 %v494, %v495
        %v497 = vrot.slane %v496, 2
        %v498 = vadd.f32 %v496, %v497
        %v499 = vrot.slane %v498, 1
        %v500 = vadd.f32 %v498, %v499
        %s501 = vtos %v500
        %v502 = vstv %s501
        %v503 = vadd.f32 %v469, %v502
        %504 = vst.msk [vmem:[#allocation4] sm:$0x1] %vm467, %v503
        // Predicated region
        $region33: #{scalekd_forward.10} parent=27 // pred_check
          %p505 = pneg %p82
        $region34: #{scalekd_forward.10} parent=27 // pred_check_branch
          %507 = sbr.rel (%p505) target = $region36
        $region35: #{scalekd_forward.10} parent=27 // pred_region
          %s509 = ssub.s32 16, 16
          %510 = vsyncadd [#allocation3], %s509
          %s512 = sshll.u32 [#allocation2], 4
          %s513 = int_to_ptr.vmem [resolvable:$true] %s512
          %515 = dma.vmem_to_hbm [thread:$0]  %s513, 16, %s2, [#allocation3]
        $region36: #{scalekd_forward.10} parent=27 // pred_fallthru
          _
        // Predicated region
        $region37: #{scalekd_forward.10} parent=27 // pred_check
          %p516 = pneg %p103
        $region38: #{scalekd_forward.10} parent=27 // pred_check_branch
          %518 = sbr.rel (%p516) target = $region40
        $region39: #{scalekd_forward.10} parent=27 // pred_region
          %s520 = ssub.s32 16, 16
          %521 = vsyncadd [#allocation5], %s520
          %s523 = sshll.u32 [#allocation4], 4
          %s524 = int_to_ptr.vmem [resolvable:$true] %s523
          %526 = dma.vmem_to_hbm [thread:$0]  %s524, 16, %s3, [#allocation5]
        $region40: #{scalekd_forward.10} parent=27 // pred_fallthru
          _
        // Predicated region
        $region41: #{scalekd_forward.10} parent=27 // pred_check
          %p527 = pneg %p82
        $region42: #{scalekd_forward.10} parent=27 // pred_check_branch
          %529 = sbr.rel (%p527) target = $region44
        $region43: #{scalekd_forward.10} parent=27 // pred_region
          %530 = dma.done [#allocation3], 16
        $region44: #{scalekd_forward.10} parent=27 // pred_fallthru
          _
        // Predicated region
        $region45: #{scalekd_forward.10} parent=27 // pred_check
          %p531 = pneg %p103
        $region46: #{scalekd_forward.10} parent=27 // pred_check_branch
          %533 = sbr.rel (%p531) target = $region48
        $region47: #{scalekd_forward.10} parent=27 // pred_region
          %534 = dma.done [#allocation5], 16
        $region48: #{scalekd_forward.10} parent=27 // pred_fallthru
          _
      $region28: #{scalekd_forward.10} parent=5 // pred_fallthru
        _
      %p535 = scmp.le.s32.totalorder 2, %s12
      // Predicated region
      $region49: #{scalekd_forward.10} parent=5 // pred_check
        %p536 = pneg %p535
      $region50: #{scalekd_forward.10} parent=5 // pred_check_branch
        %538 = sbr.rel (%p536) target = $region52
      $region51: #{scalekd_forward.10} parent=5 // pred_region
        %s539 = ssub.s32 %s12, 2
      $region52: #{scalekd_forward.10} parent=5 // pred_fallthru
        _
    $region6: #{scalekd_forward.10} parent=1 // loop_footer
      %s16 = sadd.s32 1, %s12
    $region7: #{scalekd_forward.10} parent=1 // loop_footer_branch
      %11 = sbr.rel target = $region3
    $region8: #{scalekd_forward.10} parent=1 // loop_exit
      _
    %540 = vsyncpa [#allocation3], 1
    %s541 = scalar_lea.sflag [#allocation3], 1
    %542 = vsyncpa %s541, 1
    %543 = vsyncpa [#allocation5], 1

// kernel: scalekd_forward.8
$region0: #{scalekd_forward.8}
  #allocation0 [shape = 'u32[]', space=smem, size = 0x4, offset = 0x4, fixed_abs, tag = 'smem constant byte address 0x4 - core index']
  #allocation1 [shape = 'u32[144,128]{1,0:T(1,128)}', space=vmem, size = 0x12000, scoped, tag = 'internal scratch']
  %s0 = inlined_call_operand.vmem [shape: f32[2,64,16], index: 0, kind: input, shape index: {}]
  %s1 = inlined_call_operand.vmem [shape: f32[16,32], index: 1, kind: input, shape index: {}]
  %s2 = inlined_call_operand.vmem [shape: f32[1,32], index: 2, kind: input, shape index: {}]
  %s3 = inlined_call_operand.vmem [shape: f32[2,64,32], index: 3, kind: output, shape index: {0}]
  %s4 = inlined_call_operand.vmem [shape: f32[1,32], index: 4, kind: output, shape index: {1}]
  %s5 = inlined_call_operand.vmem [shape: f32[1,32], index: 5, kind: output, shape index: {2}]
  %6 = xla_tuple %s3, %s4, %s5
  %s7 = sld [smem:[#allocation0]]
  $region65: #{scalekd_forward.8} parent=0
    _
  %s9 = ssub.s32 1, %s7
  %s10 = scalar_select 0, %s9, %s7
  loop: start=0, step=1, limit=4
  $region2: #{scalekd_forward.8} parent=0 // loop_pre_header
    _
  $region3: #{scalekd_forward.8} parent=0 // loop_header
    %s12 = sphi 0, %s16
    %p13 = scmp.ge.s32.totalorder %s12, 4
    %s22 = sphi 0, %s24
    %s25 = sphi 0, %s22
    %s26 = sphi 0, %s25
    %s42 = sphi 0, %s26
    %s46 = sphi 0, %s46
    %s48 = sphi 0, %s46
    %s49 = sphi 0, %s48
    %s63 = sphi 0, %s49
    %s67 = sphi 0, %s67
    %s69 = sphi 0, %s67
    %s70 = sphi 0, %s69
    %s84 = sphi 0, %s70
    %s90 = sphi 0, %s92
    %s93 = sphi 0, %s90
    %s94 = sphi 0, %s93
    %s110 = sphi 0, %s94
    %s114 = sphi 0, %s114
    %s116 = sphi 0, %s114
    %s117 = sphi 0, %s116
    %s131 = sphi 0, %s117
    %s135 = sphi 0, %s135
    %s137 = sphi 0, %s135
    %s138 = sphi 0, %s137
    %s152 = sphi 0, %s138
  $region4: #{scalekd_forward.8} parent=0 // loop_header_branch
    %15 = sbr.rel (%p13) target = $region8
  $region5: #{scalekd_forward.8} parent=0 // loop_body
    %s17 = ssub.s32 %s12, 1
    %s18 = ssub.s32 %s12, 2
    %s19 = sadd.s32 %s12, 1
    %s20 = ssub.s32 %s12, %s19
    %p21 = scmp.eq.s32.totalorder %s20, 0
    %s23 = sadd.s32 %s22, 1
    %s24 = scalar_select %p21, %s22, %s23
    %p27 = pneg %p21
    %p28 = scmp.eq.s32.totalorder %s12, 1
    %p29 = por %p27, %p28
    %p30 = scmp.ne.s32.totalorder %s22, %s25
    %p31 = scmp.eq.s32.totalorder %s12, 0
    %p32 = por %p30, %p31
    %p33 = scmp.ne.s32.totalorder %s22, %s25
    %p34 = scmp.eq.s32.totalorder %s17, 1
    %p35 = por %p33, %p34
    %p36 = scmp.ne.s32.totalorder %s25, %s26
    %p37 = scmp.eq.s32.totalorder %s17, 0
    %p38 = por %p36, %p37
    %p39 = scmp.ne.s32.totalorder %s25, %s26
    %p40 = scmp.eq.s32.totalorder %s18, 1
    %p41 = por %p39, %p40
    %p43 = scmp.ne.s32.totalorder %s26, %s42
    %p44 = scmp.eq.s32.totalorder %s18, 0
    %p45 = por %p43, %p44
    %s47 = sadd.s32 %s46, 1
    %p50 = scmp.eq.s32.totalorder %s12, 1
    %p51 = scmp.ne.s32.totalorder %s46, %s48
    %p52 = scmp.eq.s32.totalorder %s12, 0
    %p53 = por %p51, %p52
    %p54 = scmp.ne.s32.totalorder %s46, %s48
    %p55 = scmp.eq.s32.totalorder %s17, 1
    %p56 = por %p54, %p55
    %p57 = scmp.ne.s32.totalorder %s48, %s49
    %p58 = scmp.eq.s32.totalorder %s17, 0
    %p59 = por %p57, %p58
    %p60 = scmp.ne.s32.totalorder %s48, %s49
    %p61 = scmp.eq.s32.totalorder %s18, 1
    %p62 = por %p60, %p61
    %p64 = scmp.ne.s32.totalorder %s49, %s63
    %p65 = scmp.eq.s32.totalorder %s18, 0
    %p66 = por %p64, %p65
    %s68 = sadd.s32 %s67, 1
    %p71 = scmp.eq.s32.totalorder %s12, 1
    %p72 = scmp.ne.s32.totalorder %s67, %s69
    %p73 = scmp.eq.s32.totalorder %s12, 0
    %p74 = por %p72, %p73
    %p75 = scmp.ne.s32.totalorder %s67, %s69
    %p76 = scmp.eq.s32.totalorder %s17, 1
    %p77 = por %p75, %p76
    %p78 = scmp.ne.s32.totalorder %s69, %s70
    %p79 = scmp.eq.s32.totalorder %s17, 0
    %p80 = por %p78, %p79
    %p81 = scmp.ne.s32.totalorder %s69, %s70
    %p82 = scmp.eq.s32.totalorder %s18, 1
    %p83 = por %p81, %p82
    %p85 = scmp.ne.s32.totalorder %s70, %s84
    %p86 = scmp.eq.s32.totalorder %s18, 0
    %p87 = por %p85, %p86
    %s88 = ssub.s32 %s12, %s19
    %p89 = scmp.eq.s32.totalorder %s88, 0
    %s91 = sadd.s32 %s90, 1
    %s92 = scalar_select %p89, %s90, %s91
    %p95 = pneg %p89
    %p96 = scmp.eq.s32.totalorder %s12, 1
    %p97 = por %p95, %p96
    %p98 = scmp.ne.s32.totalorder %s90, %s93
    %p99 = scmp.eq.s32.totalorder %s12, 0
    %p100 = por %p98, %p99
    %p101 = scmp.ne.s32.totalorder %s90, %s93
    %p102 = scmp.eq.s32.totalorder %s17, 1
    %p103 = por %p101, %p102
    %p104 = scmp.ne.s32.totalorder %s93, %s94
    %p105 = scmp.eq.s32.totalorder %s17, 0
    %p106 = por %p104, %p105
    %p107 = scmp.ne.s32.totalorder %s93, %s94
    %p108 = scmp.eq.s32.totalorder %s18, 1
    %p109 = por %p107, %p108
    %p111 = scmp.ne.s32.totalorder %s94, %s110
    %p112 = scmp.eq.s32.totalorder %s18, 0
    %p113 = por %p111, %p112
    %s115 = sadd.s32 %s114, 1
    %p118 = scmp.eq.s32.totalorder %s12, 1
    %p119 = scmp.ne.s32.totalorder %s114, %s116
    %p120 = scmp.eq.s32.totalorder %s12, 0
    %p121 = por %p119, %p120
    %p122 = scmp.ne.s32.totalorder %s114, %s116
    %p123 = scmp.eq.s32.totalorder %s17, 1
    %p124 = por %p122, %p123
    %p125 = scmp.ne.s32.totalorder %s116, %s117
    %p126 = scmp.eq.s32.totalorder %s17, 0
    %p127 = por %p125, %p126
    %p128 = scmp.ne.s32.totalorder %s116, %s117
    %p129 = scmp.eq.s32.totalorder %s18, 1
    %p130 = por %p128, %p129
    %p132 = scmp.ne.s32.totalorder %s117, %s131
    %p133 = scmp.eq.s32.totalorder %s18, 0
    %p134 = por %p132, %p133
    %s136 = sadd.s32 %s135, 1
    %p139 = scmp.eq.s32.totalorder %s12, 1
    %p140 = scmp.ne.s32.totalorder %s135, %s137
    %p141 = scmp.eq.s32.totalorder %s12, 0
    %p142 = por %p140, %p141
    %p143 = scmp.ne.s32.totalorder %s135, %s137
    %p144 = scmp.eq.s32.totalorder %s17, 1
    %p145 = por %p143, %p144
    %p146 = scmp.ne.s32.totalorder %s137, %s138
    %p147 = scmp.eq.s32.totalorder %s17, 0
    %p148 = por %p146, %p147
    %p149 = scmp.ne.s32.totalorder %s137, %s138
    %p150 = scmp.eq.s32.totalorder %s18, 1
    %p151 = por %p149, %p150
    %p153 = scmp.ne.s32.totalorder %s138, %s152
    %p154 = scmp.eq.s32.totalorder %s18, 0
    %p155 = por %p153, %p154
    %p156 = scmp.le.s32.totalorder 1, %s12
    %p157 = scmp.lt.s32.totalorder %s12, 3
    %p158 = pnand %p156, %p157
    %p159 = pneg %p158
    // Predicated region
    $region9: #{scalekd_forward.8} parent=5 // pred_check
      _
    $region10: #{scalekd_forward.8} parent=5 // pred_check_branch
      %161 = sbr.rel (%p158) target = $region12
    $region11: #{scalekd_forward.8} parent=5 // pred_region
      %s162 = ssub.s32 %s12, 1
      // Predicated region
      $region13: #{scalekd_forward.8} parent=11 // pred_check
        %p163 = pneg %p59
      $region14: #{scalekd_forward.8} parent=11 // pred_check_branch
        %165 = sbr.rel (%p163) target = $region16
      $region15: #{scalekd_forward.8} parent=11 // pred_region
        _
      $region16: #{scalekd_forward.8} parent=11 // pred_fallthru
        _
      // Predicated region
      $region17: #{scalekd_forward.8} parent=11 // pred_check
        %p166 = pneg %p80
      $region18: #{scalekd_forward.8} parent=11 // pred_check_branch
        %168 = sbr.rel (%p166) target = $region20
      $region19: #{scalekd_forward.8} parent=11 // pred_region
        _
      $region20: #{scalekd_forward.8} parent=11 // pred_fallthru
        _
    $region12: #{scalekd_forward.8} parent=5 // pred_fallthru
      _
    %p169 = scmp.lt.s32.totalorder %s12, 2
    // Predicated region
    $region21: #{scalekd_forward.8} parent=5 // pred_check
      %p170 = pneg %p169
    $region22: #{scalekd_forward.8} parent=5 // pred_check_branch
      %172 = sbr.rel (%p170) target = $region24
    $region23: #{scalekd_forward.8} parent=5 // pred_region
      // Predicated region
      $region25: #{scalekd_forward.8} parent=23 // pred_check
        %p173 = pneg %p32
      $region26: #{scalekd_forward.8} parent=23 // pred_check_branch
        %175 = sbr.rel (%p173) target = $region28
      $region27: #{scalekd_forward.8} parent=23 // pred_region
        %p176 = scmp.lt.s32.totalorder %s12, 1
        %s177 = scalar_select %p176, %s12, 1
        %s178 = smul.addr %s177, 8
        %s179 = smul.addr %s178, 8
        %s180 = scalar_lea.vmem %s0, %s179
      $region28: #{scalekd_forward.8} parent=23 // pred_fallthru
        _
    $region24: #{scalekd_forward.8} parent=5 // pred_fallthru
      _
    %p181 = scmp.le.s32.totalorder 1, %s12
    %p182 = scmp.lt.s32.totalorder %s12, 3
    %p183 = pnand %p181, %p182
    %p184 = pneg %p183
    // Predicated region
    $region29: #{scalekd_forward.8} parent=5 // pred_check
      _
    $region30: #{scalekd_forward.8} parent=5 // pred_check_branch
      %186 = sbr.rel (%p183) target = $region32
    $region31: #{scalekd_forward.8} parent=5 // pred_region
      %s187 = ssub.s32 %s12, 1
      %p188 = scmp.lt.s32.totalorder %s17, 1
      %s189 = scalar_select %p188, %s17, 1
      %s190 = smul.addr %s189, 8
      %s191 = smul.addr %s190, 8
      %s192 = scalar_lea.vmem %s0, %s191
      %p193 = pneg %p38
      %p194 = pneg %p35
      %p195 = pneg %p59
      %p196 = pneg %p56
      %p197 = pneg %p80
      %p198 = pneg %p77
      %p199 = pneg %p106
      %p200 = pneg %p103
      %p201 = scmp.lt.s32.totalorder %s17, 1
      %s202 = scalar_select %p201, %s17, 1
      %s203 = smul.addr %s202, 8
      %s204 = smul.addr %s203, 8
      %s205 = scalar_lea.vmem %s3, %s204
      %p206 = pneg %p127
      %p207 = pneg %p124
      %p208 = pneg %p148
      %p209 = pneg %p145
      %p210 = scmp.lt.s32.totalorder %s17, 1
      %s211 = scalar_select %p210, %s17, 1
      %s212 = smul.addr %s211, 8
      %s213 = smul.addr %s212, 8
      %s214 = scalar_lea.vmem %s0, %s213
      %p215 = scmp.lt.s32.totalorder %s17, 1
      %s216 = scalar_select %p215, %s17, 1
      %s217 = smul.addr %s216, 8
      %s218 = smul.addr %s217, 8
      %s219 = scalar_lea.vmem %s3, %s218
      %v220 = vld [vmem:[%s214] sm:$0xff]
      %v221 = vld [vmem:[%s214 + $0x8] sm:$0xff]
      %v222 = vld [vmem:[%s214 + $0x10] sm:$0xff]
      %v223 = vld [vmem:[%s214 + $0x18] sm:$0xff]
      %v224 = vld [vmem:[%s214 + $0x20] sm:$0xff]
      %v225 = vld [vmem:[%s214 + $0x28] sm:$0xff]
      %v226 = vld [vmem:[%s214 + $0x30] sm:$0xff]
      %v227 = vld [vmem:[%s214 + $0x38] sm:$0xff]
      %v228 = vld [vmem:[%s1] sm:$0xff]
      %v229 = vld [vmem:[%s1 + $0x8] sm:$0xff]
      %v230 = vld [vmem:[%s2] sm:$0x1]
      %v232 = vlaneseq
      %v233 = vshrl.u32 %v232, 7
      %v234 = vsub.s32 0, %v233
      %v235 = vrot.slane %v230, %v234
      %vm237 = vcmask 130048
      %v239 = vsel %vm237, %v220, 0
      %v242 = vsel %vm237, %v221, 0
      %v245 = vsel %vm237, %v222, 0
      %v248 = vsel %vm237, %v223, 0
      %v251 = vsel %vm237, %v224, 0
      %v254 = vsel %vm237, %v225, 0
      %v257 = vsel %vm237, %v226, 0
      %v260 = vsel %vm237, %v227, 0
      %262 = vmatprep.subr.mxu0 0.0
      %263 = vmatpush1.msra.mxu0 %v228
      %264 = vmatprep.subr.mxu0 0.0
      %265 = vmatpush1.msra.mxu0 %v229
      %266 = vmatprep.subr.mxu0 0.0
      %267 = vmatpush1.msra.mxu0 0.0
      %268 = vmatprep.subr.mxu0 0.0
      %269 = vmatpush1.msra.mxu0 0.0
      %270 = vmatprep.subr.mxu0 0.0
      %271 = vmatpush1.msra.mxu0 0.0
      %272 = vmatprep.subr.mxu0 0.0
      %273 = vmatpush1.msra.mxu0 0.0
      %274 = vmatprep.subr.mxu0 0.0
      %275 = vmatpush1.msra.mxu0 0.0
      %276 = vmatprep.subr.mxu0 0.0
      %277 = vmatpush1.msra.mxu0 0.0
      %278 = vmatprep.subr.mxu0 0.0
      %279 = vmatpush1.msra.mxu0 0.0
      %280 = vmatprep.subr.mxu0 0.0
      %281 = vmatpush1.msra.mxu0 0.0
      %282 = vmatprep.subr.mxu0 0.0
      %283 = vmatpush1.msra.mxu0 0.0
      %284 = vmatprep.subr.mxu0 0.0
      %285 = vmatpush1.msra.mxu0 0.0
      %286 = vmatprep.subr.mxu0 0.0
      %287 = vmatpush1.msra.mxu0 0.0
      %288 = vmatprep.subr.mxu0 0.0
      %289 = vmatpush1.msra.mxu0 0.0
      %290 = vmatprep.subr.mxu0 0.0
      %291 = vmatpush1.msra.mxu0 0.0
      %292 = vmatprep.subr.mxu0 0.0
      %293 = vmatpush1.msra.mxu0 0.0
      %294 = vmatprep.subr.mxu0 0.0
      %295 = vmatpush1.msra.mxu0 0.0
      %296 = vmatprep.subr.mxu0 0.0
      %297 = vmatpush1.msra.mxu0 0.0
      %298 = vmatprep.subr.mxu0 0.0
      %299 = vmatpush1.msra.mxu0 0.0
      %300 = vmatprep.subr.mxu0 0.0
      %301 = vmatpush1.msra.mxu0 0.0
      %302 = vmatprep.subr.mxu0 0.0
      %303 = vmatpush1.msra.mxu0 0.0
      %304 = vmatprep.subr.mxu0 0.0
      %305 = vmatpush1.msra.mxu0 0.0
      %306 = vmatprep.subr.mxu0 0.0
      %307 = vmatpush1.msra.mxu0 0.0
      %308 = vmatprep.subr.mxu0 0.0
      %309 = vmatpush1.msra.mxu0 0.0
      %310 = vmatprep.subr.mxu0 0.0
      %311 = vmatpush1.msra.mxu0 0.0
      %312 = vmatprep.subr.mxu0 0.0
      %313 = vmatpush1.msra.mxu0 0.0
      %314 = vmatprep.subr.mxu0 0.0
      %315 = vmatpush1.msra.mxu0 0.0
      %316 = vmatprep.subr.mxu0 0.0
      %317 = vmatpush1.msra.mxu0 0.0
      %318 = vmatprep.subr.mxu0 0.0
      %319 = vmatpush1.msra.mxu0 0.0
      %320 = vmatprep.subr.mxu0 0.0
      %321 = vmatpush1.msra.mxu0 0.0
      %322 = vmatprep.subr.mxu0 0.0
      %323 = vmatpush1.msra.mxu0 0.0
      %324 = vmatprep.subr.mxu0 0.0
      %325 = vmatpush1.msra.mxu0 0.0
      %326 = vmatprep.mubr.f32.mxu0 0.0
      %327 = vmatmul.mubr.f32.gmra.mrb[0].mxu0 %v239
      %v328 = vpop.f32.mrb[0].mxu0
      %v329 = vadd.f32 %v235, %v328
      %v330 = vpop.f32.mrb[0].mxu0
      %331 = vmatprep.mubr.f32.mxu0 0.0
      %332 = vmatmul.mubr.f32.gmra.mrb[0].mxu0 %v242
      %v333 = vpop.f32.mrb[0].mxu0
      %v334 = vadd.f32 %v235, %v333
      %v335 = vpop.f32.mrb[0].mxu0
      %336 = vmatprep.mubr.f32.mxu0 0.0
      %337 = vmatmul.mubr.f32.gmra.mrb[0].mxu0 %v245
      %v338 = vpop.f32.mrb[0].mxu0
      %v339 = vadd.f32 %v235, %v338
      %v340 = vpop.f32.mrb[0].mxu0
      %341 = vmatprep.mubr.f32.mxu0 0.0
      %342 = vmatmul.mubr.f32.gmra.mrb[0].mxu0 %v248
      %v343 = vpop.f32.mrb[0].mxu0
      %v344 = vadd.f32 %v235, %v343
      %v345 = vpop.f32.mrb[0].mxu0
      %346 = vmatprep.mubr.f32.mxu0 0.0
      %347 = vmatmul.mubr.f32.gmra.mrb[0].mxu0 %v251
      %v348 = vpop.f32.mrb[0].mxu0
      %v349 = vadd.f32 %v235, %v348
      %v350 = vpop.f32.mrb[0].mxu0
      %351 = vmatprep.mubr.f32.mxu0 0.0
      %352 = vmatmul.mubr.f32.gmra.mrb[0].mxu0 %v254
      %v353 = vpop.f32.mrb[0].mxu0
      %v354 = vadd.f32 %v235, %v353
      %v355 = vpop.f32.mrb[0].mxu0
      %356 = vmatprep.mubr.f32.mxu0 0.0
      %357 = vmatmul.mubr.f32.gmra.mrb[0].mxu0 %v257
      %v358 = vpop.f32.mrb[0].mxu0
      %v359 = vadd.f32 %v235, %v358
      %v360 = vpop.f32.mrb[0].mxu0
      %361 = vmatprep.mubr.f32.mxu0 0.0
      %362 = vmatmul.mubr.f32.gmra.mrb[0].mxu0 %v260
      %v363 = vpop.f32.mrb[0].mxu0
      %v364 = vadd.f32 %v235, %v363
      %v365 = vpop.f32.mrb[0].mxu0
      %366 = vdwg.mxu0
      %vm367 = vcmask 261120
      %368 = vst.msk [vmem:[%s219] sm:$0xff] %vm367, %v329
      %369 = vst.msk [vmem:[%s219 + $0x8] sm:$0xff] %vm367, %v334
      %370 = vst.msk [vmem:[%s219 + $0x10] sm:$0xff] %vm367, %v339
      %371 = vst.msk [vmem:[%s219 + $0x18] sm:$0xff] %vm367, %v344
      %372 = vst.msk [vmem:[%s219 + $0x20] sm:$0xff] %vm367, %v349
      %373 = vst.msk [vmem:[%s219 + $0x28] sm:$0xff] %vm367, %v354
      %374 = vst.msk [vmem:[%s219 + $0x30] sm:$0xff] %vm367, %v359
      %375 = vst.msk [vmem:[%s219 + $0x38] sm:$0xff] %vm367, %v364
      %p376 = scmp.eq.s32.totalorder %s17, 0
      // Predicated region
      $region33: #{scalekd_forward.8} parent=31 // pred_check
        %p377 = pneg %p376
      $region34: #{scalekd_forward.8} parent=31 // pred_check_branch
        %379 = sbr.rel (%p377) target = $region36
      $region35: #{scalekd_forward.8} parent=31 // pred_region
        %vm380 = vcmask 253952
        %381 = vst.msk [vmem:[%s4] sm:$0x1] %vm380, 0.0
        %382 = vst.msk [vmem:[%s5] sm:$0x1] %vm380, 0.0
      $region36: #{scalekd_forward.8} parent=31 // pred_fallthru
        _
      %v383 = vld [vmem:[%s4] sm:$0x1]
      %v384 = vsel %vm367, %v329, 0.0
      %v385 = vsel %vm367, %v334, 0.0
      %v386 = vadd.f32 %v384, %v385
      %v387 = vsel %vm367, %v339, 0.0
      %v388 = vadd.f32 %v386, %v387
      %v389 = vsel %vm367, %v344, 0.0
      %v390 = vadd.f32 %v388, %v389
      %v391 = vsel %vm367, %v349, 0.0
      %v392 = vadd.f32 %v390, %v391
      %v393 = vsel %vm367, %v354, 0.0
      %v394 = vadd.f32 %v392, %v393
      %v395 = vsel %vm367, %v359, 0.0
      %v396 = vadd.f32 %v394, %v395
      %v397 = vsel %vm367, %v364, 0.0
      %v398 = vadd.f32 %v396, %v397
      %v399 = vrot.slane %v398, 4
      %v400 = vadd.f32 %v398, %v399
      %v401 = vrot.slane %v400, 2
      %v402 = vadd.f32 %v400, %v401
      %v403 = vrot.slane %v402, 1
      %v404 = vadd.f32 %v402, %v403
      %v405 = vadd.f32 %v383, %v404
      %vm406 = vcmask 253952
      %407 = vst.msk [vmem:[%s4] sm:$0x1] %vm406, %v405
      %v408 = vld [vmem:[%s5] sm:$0x1]
      %v409 = vmul.f32 %v329, %v329
      %v410 = vmul.f32 %v334, %v334
      %v411 = vmul.f32 %v339, %v339
      %v412 = vmul.f32 %v344, %v344
      %v413 = vmul.f32 %v349, %v349
      %v414 = vmul.f32 %v354, %v354
      %v415 = vmul.f32 %v359, %v359
      %v416 = vmul.f32 %v364, %v364
      %v417 = vsel %vm367, %v409, 0.0
      %v418 = vsel %vm367, %v410, 0.0
      %v419 = vadd.f32 %v417, %v418
      %v420 = vsel %vm367, %v411, 0.0
      %v421 = vadd.f32 %v419, %v420
      %v422 = vsel %vm367, %v412, 0.0
      %v423 = vadd.f32 %v421, %v422
      %v424 = vsel %vm367, %v413, 0.0
      %v425 = vadd.f32 %v423, %v424
      %v426 = vsel %vm367, %v414, 0.0
      %v427 = vadd.f32 %v425, %v426
      %v428 = vsel %vm367, %v415, 0.0
      %v429 = vadd.f32 %v427, %v428
      %v430 = vsel %vm367, %v416, 0.0
      %v431 = vadd.f32 %v429, %v430
      %v432 = vrot.slane %v431, 4
      %v433 = vadd.f32 %v431, %v432
      %v434 = vrot.slane %v433, 2
      %v435 = vadd.f32 %v433, %v434
      %v436 = vrot.slane %v435, 1
      %v437 = vadd.f32 %v435, %v436
      %v438 = vadd.f32 %v408, %v437
      %439 = vst.msk [vmem:[%s5] sm:$0x1] %vm406, %v438
      %p440 = scmp.lt.s32.totalorder %s17, 1
      %s441 = scalar_select %p440, %s17, 1
      %s442 = smul.addr %s441, 8
      %s443 = smul.addr %s442, 8
      %s444 = scalar_lea.vmem %s3, %s443
      // Predicated region
      $region37: #{scalekd_forward.8} parent=31 // pred_check
        %p445 = pneg %p103
      $region38: #{scalekd_forward.8} parent=31 // pred_check_branch
        %447 = sbr.rel (%p445) target = $region40
      $region39: #{scalekd_forward.8} parent=31 // pred_region
        _
      $region40: #{scalekd_forward.8} parent=31 // pred_fallthru
        _
      // Predicated region
      $region41: #{scalekd_forward.8} parent=31 // pred_check
        %p448 = pneg %p124
      $region42: #{scalekd_forward.8} parent=31 // pred_check_branch
        %450 = sbr.rel (%p448) target = $region44
      $region43: #{scalekd_forward.8} parent=31 // pred_region
        _
      $region44: #{scalekd_forward.8} parent=31 // pred_fallthru
        _
      // Predicated region
      $region45: #{scalekd_forward.8} parent=31 // pred_check
        %p451 = pneg %p145
      $region46: #{scalekd_forward.8} parent=31 // pred_check_branch
        %453 = sbr.rel (%p451) target = $region48
      $region47: #{scalekd_forward.8} parent=31 // pred_region
        _
      $region48: #{scalekd_forward.8} parent=31 // pred_fallthru
        _
      // Predicated region
      $region49: #{scalekd_forward.8} parent=31 // pred_check
        %p454 = pneg %p124
      $region50: #{scalekd_forward.8} parent=31 // pred_check_branch
        %456 = sbr.rel (%p454) target = $region52
      $region51: #{scalekd_forward.8} parent=31 // pred_region
        _
      $region52: #{scalekd_forward.8} parent=31 // pred_fallthru
        _
      // Predicated region
      $region53: #{scalekd_forward.8} parent=31 // pred_check
        %p457 = pneg %p145
      $region54: #{scalekd_forward.8} parent=31 // pred_check_branch
        %459 = sbr.rel (%p457) target = $region56
      $region55: #{scalekd_forward.8} parent=31 // pred_region
        _
      $region56: #{scalekd_forward.8} parent=31 // pred_fallthru
        _
    $region32: #{scalekd_forward.8} parent=5 // pred_fallthru
      _
    %p460 = scmp.le.s32.totalorder 2, %s12
    // Predicated region
    $region57: #{scalekd_forward.8} parent=5 // pred_check
      %p461 = pneg %p460
    $region58: #{scalekd_forward.8} parent=5 // pred_check_branch
      %463 = sbr.rel (%p461) target = $region60
    $region59: #{scalekd_forward.8} parent=5 // pred_region
      %s464 = ssub.s32 %s12, 2
      // Predicated region
      $region61: #{scalekd_forward.8} parent=59 // pred_check
        %p465 = pneg %p109
      $region62: #{scalekd_forward.8} parent=59 // pred_check_branch
        %467 = sbr.rel (%p465) target = $region64
      $region63: #{scalekd_forward.8} parent=59 // pred_region
        %p468 = scmp.lt.s32.totalorder %s18, 1
        %s469 = scalar_select %p468, %s18, 1
        %s470 = smul.addr %s469, 8
        %s471 = smul.addr %s470, 8
        %s472 = scalar_lea.vmem %s3, %s471
      $region64: #{scalekd_forward.8} parent=59 // pred_fallthru
        _
    $region60: #{scalekd_forward.8} parent=5 // pred_fallthru
      _
  $region6: #{scalekd_forward.8} parent=0 // loop_footer
    %s16 = sadd.s32 1, %s12
  $region7: #{scalekd_forward.8} parent=0 // loop_footer_branch
    %11 = sbr.rel target = $region3
  $region8: #{scalekd_forward.8} parent=0 // loop_exit
    _

// kernel: scalekd_forward.9
$region0: #{scalekd_forward.9}
  #allocation0 [shape = 'u32[]', space=smem, size = 0x4, offset = 0x4, fixed_abs, tag = 'smem constant byte address 0x4 - core index']
  #allocation1 [shape = 'u32[144,128]{1,0:T(1,128)}', space=vmem, size = 0x12000, scoped, tag = 'internal scratch']
  %s0 = inlined_call_operand.vmem [shape: f32[2,64,32], index: 0, kind: input, shape index: {}]
  %s1 = inlined_call_operand.vmem [shape: f32[1,32], index: 1, kind: input, shape index: {}]
  %s2 = inlined_call_operand.vmem [shape: f32[1,32], index: 2, kind: input, shape index: {}]
  %s3 = inlined_call_operand.vmem [shape: f32[64,32], index: 3, kind: input, shape index: {}]
  %s4 = inlined_call_operand.vmem [shape: f32[64,32], index: 4, kind: input, shape index: {}]
  %s5 = inlined_call_operand.vmem [shape: f32[32,32], index: 5, kind: input, shape index: {}]
  %s6 = inlined_call_operand.vmem [shape: f32[1,32], index: 6, kind: input, shape index: {}]
  %s7 = inlined_call_operand.vmem [shape: f32[32,64], index: 7, kind: input, shape index: {}]
  %s8 = inlined_call_operand.vmem [shape: f32[1,64], index: 8, kind: input, shape index: {}]
  %s9 = inlined_call_operand.vmem [shape: f32[32,32], index: 9, kind: input, shape index: {}]
  %s10 = inlined_call_operand.vmem [shape: f32[1,32], index: 10, kind: input, shape index: {}]
  %s11 = inlined_call_operand.vmem [shape: f32[1,32], index: 11, kind: input, shape index: {}]
  %s12 = inlined_call_operand.vmem [shape: f32[1,32], index: 12, kind: input, shape index: {}]
  %s13 = inlined_call_operand.vmem [shape: f32[32,128], index: 13, kind: input, shape index: {}]
  %s14 = inlined_call_operand.vmem [shape: f32[1,128], index: 14, kind: input, shape index: {}]
  %s15 = inlined_call_operand.vmem [shape: f32[128,32], index: 15, kind: input, shape index: {}]
  %s16 = inlined_call_operand.vmem [shape: f32[1,32], index: 16, kind: input, shape index: {}]
  %s17 = inlined_call_operand.vmem [shape: f32[1,32], index: 17, kind: input, shape index: {}]
  %s18 = inlined_call_operand.vmem [shape: f32[1,32], index: 18, kind: input, shape index: {}]
  %s19 = inlined_call_operand.vmem [shape: f32[2,64,32], index: 19, kind: output, shape index: {}]
  %s20 = sld [smem:[#allocation0]]
  $region109: #{scalekd_forward.9} parent=0
    _
  %s22 = ssub.s32 1, %s20
  %s23 = scalar_select 0, %s22, %s20
  loop: start=0, step=1, limit=4
  $region2: #{scalekd_forward.9} parent=0 // loop_pre_header
    _
  $region3: #{scalekd_forward.9} parent=0 // loop_header
    %s25 = sphi 0, %s29
    %p26 = scmp.ge.s32.totalorder %s25, 4
    %s35 = sphi 0, %s37
    %s38 = sphi 0, %s35
    %s39 = sphi 0, %s38
    %s55 = sphi 0, %s39
    %s59 = sphi 0, %s59
    %s61 = sphi 0, %s59
    %s62 = sphi 0, %s61
    %s76 = sphi 0, %s62
    %s80 = sphi 0, %s80
    %s82 = sphi 0, %s80
    %s83 = sphi 0, %s82
    %s97 = sphi 0, %s83
    %s101 = sphi 0, %s101
    %s103 = sphi 0, %s101
    %s104 = sphi 0, %s103
    %s118 = sphi 0, %s104
    %s122 = sphi 0, %s122
    %s124 = sphi 0, %s122
    %s125 = sphi 0, %s124
    %s139 = sphi 0, %s125
    %s143 = sphi 0, %s143
    %s145 = sphi 0, %s143
    %s146 = sphi 0, %s145
    %s160 = sphi 0, %s146
    %s164 = sphi 0, %s164
    %s166 = sphi 0, %s164
    %s167 = sphi 0, %s166
    %s181 = sphi 0, %s167
    %s185 = sphi 0, %s185
    %s187 = sphi 0, %s185
    %s188 = sphi 0, %s187
    %s202 = sphi 0, %s188
    %s206 = sphi 0, %s206
    %s208 = sphi 0, %s206
    %s209 = sphi 0, %s208
    %s223 = sphi 0, %s209
    %s227 = sphi 0, %s227
    %s229 = sphi 0, %s227
    %s230 = sphi 0, %s229
    %s244 = sphi 0, %s230
    %s248 = sphi 0, %s248
    %s250 = sphi 0, %s248
    %s251 = sphi 0, %s250
    %s265 = sphi 0, %s251
    %s269 = sphi 0, %s269
    %s271 = sphi 0, %s269
    %s272 = sphi 0, %s271
    %s286 = sphi 0, %s272
    %s290 = sphi 0, %s290
    %s292 = sphi 0, %s290
    %s293 = sphi 0, %s292
    %s307 = sphi 0, %s293
    %s311 = sphi 0, %s311
    %s313 = sphi 0, %s311
    %s314 = sphi 0, %s313
    %s328 = sphi 0, %s314
    %s332 = sphi 0, %s332
    %s334 = sphi 0, %s332
    %s335 = sphi 0, %s334
    %s349 = sphi 0, %s335
    %s353 = sphi 0, %s353
    %s355 = sphi 0, %s353
    %s356 = sphi 0, %s355
    %s370 = sphi 0, %s356
    %s374 = sphi 0, %s374
    %s376 = sphi 0, %s374
    %s377 = sphi 0, %s376
    %s391 = sphi 0, %s377
    %s395 = sphi 0, %s395
    %s397 = sphi 0, %s395
    %s398 = sphi 0, %s397
    %s412 = sphi 0, %s398
    %s416 = sphi 0, %s416
    %s418 = sphi 0, %s416
    %s419 = sphi 0, %s418
    %s433 = sphi 0, %s419
    %s439 = sphi 0, %s441
    %s442 = sphi 0, %s439
    %s443 = sphi 0, %s442
    %s459 = sphi 0, %s443
  $region4: #{scalekd_forward.9} parent=0 // loop_header_branch
    %28 = sbr.rel (%p26) target = $region8
  $region5: #{scalekd_forward.9} parent=0 // loop_body
    %s30 = ssub.s32 %s25, 1
    %s31 = ssub.s32 %s25, 2
    %s32 = sadd.s32 %s25, 1
    %s33 = ssub.s32 %s25, %s32
    %p34 = scmp.eq.s32.totalorder %s33, 0
    %s36 = sadd.s32 %s35, 1
    %s37 = scalar_select %p34, %s35, %s36
    %p40 = pneg %p34
    %p41 = scmp.eq.s32.totalorder %s25, 1
    %p42 = por %p40, %p41
    %p43 = scmp.ne.s32.totalorder %s35, %s38
    %p44 = scmp.eq.s32.totalorder %s25, 0
    %p45 = por %p43, %p44
    %p46 = scmp.ne.s32.totalorder %s35, %s38
    %p47 = scmp.eq.s32.totalorder %s30, 1
    %p48 = por %p46, %p47
    %p49 = scmp.ne.s32.totalorder %s38, %s39
    %p50 = scmp.eq.s32.totalorder %s30, 0
    %p51 = por %p49, %p50
    %p52 = scmp.ne.s32.totalorder %s38, %s39
    %p53 = scmp.eq.s32.totalorder %s31, 1
    %p54 = por %p52, %p53
    %p56 = scmp.ne.s32.totalorder %s39, %s55
    %p57 = scmp.eq.s32.totalorder %s31, 0
    %p58 = por %p56, %p57
    %s60 = sadd.s32 %s59, 1
    %p63 = scmp.eq.s32.totalorder %s25, 1
    %p64 = scmp.ne.s32.totalorder %s59, %s61
    %p65 = scmp.eq.s32.totalorder %s25, 0
    %p66 = por %p64, %p65
    %p67 = scmp.ne.s32.totalorder %s59, %s61
    %p68 = scmp.eq.s32.totalorder %s30, 1
    %p69 = por %p67, %p68
    %p70 = scmp.ne.s32.totalorder %s61, %s62
    %p71 = scmp.eq.s32.totalorder %s30, 0
    %p72 = por %p70, %p71
    %p73 = scmp.ne.s32.totalorder %s61, %s62
    %p74 = scmp.eq.s32.totalorder %s31, 1
    %p75 = por %p73, %p74
    %p77 = scmp.ne.s32.totalorder %s62, %s76
    %p78 = scmp.eq.s32.totalorder %s31, 0
    %p79 = por %p77, %p78
    %s81 = sadd.s32 %s80, 1
    %p84 = scmp.eq.s32.totalorder %s25, 1
    %p85 = scmp.ne.s32.totalorder %s80, %s82
    %p86 = scmp.eq.s32.totalorder %s25, 0
    %p87 = por %p85, %p86
    %p88 = scmp.ne.s32.totalorder %s80, %s82
    %p89 = scmp.eq.s32.totalorder %s30, 1
    %p90 = por %p88, %p89
    %p91 = scmp.ne.s32.totalorder %s82, %s83
    %p92 = scmp.eq.s32.totalorder %s30, 0
    %p93 = por %p91, %p92
    %p94 = scmp.ne.s32.totalorder %s82, %s83
    %p95 = scmp.eq.s32.totalorder %s31, 1
    %p96 = por %p94, %p95
    %p98 = scmp.ne.s32.totalorder %s83, %s97
    %p99 = scmp.eq.s32.totalorder %s31, 0
    %p100 = por %p98, %p99
    %s102 = sadd.s32 %s101, 1
    %p105 = scmp.eq.s32.totalorder %s25, 1
    %p106 = scmp.ne.s32.totalorder %s101, %s103
    %p107 = scmp.eq.s32.totalorder %s25, 0
    %p108 = por %p106, %p107
    %p109 = scmp.ne.s32.totalorder %s101, %s103
    %p110 = scmp.eq.s32.totalorder %s30, 1
    %p111 = por %p109, %p110
    %p112 = scmp.ne.s32.totalorder %s103, %s104
    %p113 = scmp.eq.s32.totalorder %s30, 0
    %p114 = por %p112, %p113
    %p115 = scmp.ne.s32.totalorder %s103, %s104
    %p116 = scmp.eq.s32.totalorder %s31, 1
    %p117 = por %p115, %p116
    %p119 = scmp.ne.s32.totalorder %s104, %s118
    %p120 = scmp.eq.s32.totalorder %s31, 0
    %p121 = por %p119, %p120
    %s123 = sadd.s32 %s122, 1
    %p126 = scmp.eq.s32.totalorder %s25, 1
    %p127 = scmp.ne.s32.totalorder %s122, %s124
    %p128 = scmp.eq.s32.totalorder %s25, 0
    %p129 = por %p127, %p128
    %p130 = scmp.ne.s32.totalorder %s122, %s124
    %p131 = scmp.eq.s32.totalorder %s30, 1
    %p132 = por %p130, %p131
    %p133 = scmp.ne.s32.totalorder %s124, %s125
    %p134 = scmp.eq.s32.totalorder %s30, 0
    %p135 = por %p133, %p134
    %p136 = scmp.ne.s32.totalorder %s124, %s125
    %p137 = scmp.eq.s32.totalorder %s31, 1
    %p138 = por %p136, %p137
    %p140 = scmp.ne.s32.totalorder %s125, %s139
    %p141 = scmp.eq.s32.totalorder %s31, 0
    %p142 = por %p140, %p141
    %s144 = sadd.s32 %s143, 1
    %p147 = scmp.eq.s32.totalorder %s25, 1
    %p148 = scmp.ne.s32.totalorder %s143, %s145
    %p149 = scmp.eq.s32.totalorder %s25, 0
    %p150 = por %p148, %p149
    %p151 = scmp.ne.s32.totalorder %s143, %s145
    %p152 = scmp.eq.s32.totalorder %s30, 1
    %p153 = por %p151, %p152
    %p154 = scmp.ne.s32.totalorder %s145, %s146
    %p155 = scmp.eq.s32.totalorder %s30, 0
    %p156 = por %p154, %p155
    %p157 = scmp.ne.s32.totalorder %s145, %s146
    %p158 = scmp.eq.s32.totalorder %s31, 1
    %p159 = por %p157, %p158
    %p161 = scmp.ne.s32.totalorder %s146, %s160
    %p162 = scmp.eq.s32.totalorder %s31, 0
    %p163 = por %p161, %p162
    %s165 = sadd.s32 %s164, 1
    %p168 = scmp.eq.s32.totalorder %s25, 1
    %p169 = scmp.ne.s32.totalorder %s164, %s166
    %p170 = scmp.eq.s32.totalorder %s25, 0
    %p171 = por %p169, %p170
    %p172 = scmp.ne.s32.totalorder %s164, %s166
    %p173 = scmp.eq.s32.totalorder %s30, 1
    %p174 = por %p172, %p173
    %p175 = scmp.ne.s32.totalorder %s166, %s167
    %p176 = scmp.eq.s32.totalorder %s30, 0
    %p177 = por %p175, %p176
    %p178 = scmp.ne.s32.totalorder %s166, %s167
    %p179 = scmp.eq.s32.totalorder %s31, 1
    %p180 = por %p178, %p179
    %p182 = scmp.ne.s32.totalorder %s167, %s181
    %p183 = scmp.eq.s32.totalorder %s31, 0
    %p184 = por %p182, %p183
    %s186 = sadd.s32 %s185, 1
    %p189 = scmp.eq.s32.totalorder %s25, 1
    %p190 = scmp.ne.s32.totalorder %s185, %s187
    %p191 = scmp.eq.s32.totalorder %s25, 0
    %p192 = por %p190, %p191
    %p193 = scmp.ne.s32.totalorder %s185, %s187
    %p194 = scmp.eq.s32.totalorder %s30, 1
    %p195 = por %p193, %p194
    %p196 = scmp.ne.s32.totalorder %s187, %s188
    %p197 = scmp.eq.s32.totalorder %s30, 0
    %p198 = por %p196, %p197
    %p199 = scmp.ne.s32.totalorder %s187, %s188
    %p200 = scmp.eq.s32.totalorder %s31, 1
    %p201 = por %p199, %p200
    %p203 = scmp.ne.s32.totalorder %s188, %s202
    %p204 = scmp.eq.s32.totalorder %s31, 0
    %p205 = por %p203, %p204
    %s207 = sadd.s32 %s206, 1
    %p210 = scmp.eq.s32.totalorder %s25, 1
    %p211 = scmp.ne.s32.totalorder %s206, %s208
    %p212 = scmp.eq.s32.totalorder %s25, 0
    %p213 = por %p211, %p212
    %p214 = scmp.ne.s32.totalorder %s206, %s208
    %p215 = scmp.eq.s32.totalorder %s30, 1
    %p216 = por %p214, %p215
    %p217 = scmp.ne.s32.totalorder %s208, %s209
    %p218 = scmp.eq.s32.totalorder %s30, 0
    %p219 = por %p217, %p218
    %p220 = scmp.ne.s32.totalorder %s208, %s209
    %p221 = scmp.eq.s32.totalorder %s31, 1
    %p222 = por %p220, %p221
    %p224 = scmp.ne.s32.totalorder %s209, %s223
    %p225 = scmp.eq.s32.totalorder %s31, 0
    %p226 = por %p224, %p225
    %s228 = sadd.s32 %s227, 1
    %p231 = scmp.eq.s32.totalorder %s25, 1
    %p232 = scmp.ne.s32.totalorder %s227, %s229
    %p233 = scmp.eq.s32.totalorder %s25, 0
    %p234 = por %p232, %p233
    %p235 = scmp.ne.s32.totalorder %s227, %s229
    %p236 = scmp.eq.s32.totalorder %s30, 1
    %p237 = por %p235, %p236
    %p238 = scmp.ne.s32.totalorder %s229, %s230
    %p239 = scmp.eq.s32.totalorder %s30, 0
    %p240 = por %p238, %p239
    %p241 = scmp.ne.s32.totalorder %s229, %s230
    %p242 = scmp.eq.s32.totalorder %s31, 1
    %p243 = por %p241, %p242
    %p245 = scmp.ne.s32.totalorder %s230, %s244
    %p246 = scmp.eq.s32.totalorder %s31, 0
    %p247 = por %p245, %p246
    %s249 = sadd.s32 %s248, 1
    %p252 = scmp.eq.s32.totalorder %s25, 1
    %p253 = scmp.ne.s32.totalorder %s248, %s250
    %p254 = scmp.eq.s32.totalorder %s25, 0
    %p255 = por %p253, %p254
    %p256 = scmp.ne.s32.totalorder %s248, %s250
    %p257 = scmp.eq.s32.totalorder %s30, 1
    %p258 = por %p256, %p257
    %p259 = scmp.ne.s32.totalorder %s250, %s251
    %p260 = scmp.eq.s32.totalorder %s30, 0
    %p261 = por %p259, %p260
    %p262 = scmp.ne.s32.totalorder %s250, %s251
    %p263 = scmp.eq.s32.totalorder %s31, 1
    %p264 = por %p262, %p263
    %p266 = scmp.ne.s32.totalorder %s251, %s265
    %p267 = scmp.eq.s32.totalorder %s31, 0
    %p268 = por %p266, %p267
    %s270 = sadd.s32 %s269, 1
    %p273 = scmp.eq.s32.totalorder %s25, 1
    %p274 = scmp.ne.s32.totalorder %s269, %s271
    %p275 = scmp.eq.s32.totalorder %s25, 0
    %p276 = por %p274, %p275
    %p277 = scmp.ne.s32.totalorder %s269, %s271
    %p278 = scmp.eq.s32.totalorder %s30, 1
    %p279 = por %p277, %p278
    %p280 = scmp.ne.s32.totalorder %s271, %s272
    %p281 = scmp.eq.s32.totalorder %s30, 0
    %p282 = por %p280, %p281
    %p283 = scmp.ne.s32.totalorder %s271, %s272
    %p284 = scmp.eq.s32.totalorder %s31, 1
    %p285 = por %p283, %p284
    %p287 = scmp.ne.s32.totalorder %s272, %s286
    %p288 = scmp.eq.s32.totalorder %s31, 0
    %p289 = por %p287, %p288
    %s291 = sadd.s32 %s290, 1
    %p294 = scmp.eq.s32.totalorder %s25, 1
    %p295 = scmp.ne.s32.totalorder %s290, %s292
    %p296 = scmp.eq.s32.totalorder %s25, 0
    %p297 = por %p295, %p296
    %p298 = scmp.ne.s32.totalorder %s290, %s292
    %p299 = scmp.eq.s32.totalorder %s30, 1
    %p300 = por %p298, %p299
    %p301 = scmp.ne.s32.totalorder %s292, %s293
    %p302 = scmp.eq.s32.totalorder %s30, 0
    %p303 = por %p301, %p302
    %p304 = scmp.ne.s32.totalorder %s292, %s293
    %p305 = scmp.eq.s32.totalorder %s31, 1
    %p306 = por %p304, %p305
    %p308 = scmp.ne.s32.totalorder %s293, %s307
    %p309 = scmp.eq.s32.totalorder %s31, 0
    %p310 = por %p308, %p309
    %s312 = sadd.s32 %s311, 1
    %p315 = scmp.eq.s32.totalorder %s25, 1
    %p316 = scmp.ne.s32.totalorder %s311, %s313
    %p317 = scmp.eq.s32.totalorder %s25, 0
    %p318 = por %p316, %p317
    %p319 = scmp.ne.s32.totalorder %s311, %s313
    %p320 = scmp.eq.s32.totalorder %s30, 1
    %p321 = por %p319, %p320
    %p322 = scmp.ne.s32.totalorder %s313, %s314
    %p323 = scmp.eq.s32.totalorder %s30, 0
    %p324 = por %p322, %p323
    %p325 = scmp.ne.s32.totalorder %s313, %s314
    %p326 = scmp.eq.s32.totalorder %s31, 1
    %p327 = por %p325, %p326
    %p329 = scmp.ne.s32.totalorder %s314, %s328
    %p330 = scmp.eq.s32.totalorder %s31, 0
    %p331 = por %p329, %p330
    %s333 = sadd.s32 %s332, 1
    %p336 = scmp.eq.s32.totalorder %s25, 1
    %p337 = scmp.ne.s32.totalorder %s332, %s334
    %p338 = scmp.eq.s32.totalorder %s25, 0
    %p339 = por %p337, %p338
    %p340 = scmp.ne.s32.totalorder %s332, %s334
    %p341 = scmp.eq.s32.totalorder %s30, 1
    %p342 = por %p340, %p341
    %p343 = scmp.ne.s32.totalorder %s334, %s335
    %p344 = scmp.eq.s32.totalorder %s30, 0
    %p345 = por %p343, %p344
    %p346 = scmp.ne.s32.totalorder %s334, %s335
    %p347 = scmp.eq.s32.totalorder %s31, 1
    %p348 = por %p346, %p347
    %p350 = scmp.ne.s32.totalorder %s335, %s349
    %p351 = scmp.eq.s32.totalorder %s31, 0
    %p352 = por %p350, %p351
    %s354 = sadd.s32 %s353, 1
    %p357 = scmp.eq.s32.totalorder %s25, 1
    %p358 = scmp.ne.s32.totalorder %s353, %s355
    %p359 = scmp.eq.s32.totalorder %s25, 0
    %p360 = por %p358, %p359
    %p361 = scmp.ne.s32.totalorder %s353, %s355
    %p362 = scmp.eq.s32.totalorder %s30, 1
    %p363 = por %p361, %p362
    %p364 = scmp.ne.s32.totalorder %s355, %s356
    %p365 = scmp.eq.s32.totalorder %s30, 0
    %p366 = por %p364, %p365
    %p367 = scmp.ne.s32.totalorder %s355, %s356
    %p368 = scmp.eq.s32.totalorder %s31, 1
    %p369 = por %p367, %p368
    %p371 = scmp.ne.s32.totalorder %s356, %s370
    %p372 = scmp.eq.s32.totalorder %s31, 0
    %p373 = por %p371, %p372
    %s375 = sadd.s32 %s374, 1
    %p378 = scmp.eq.s32.totalorder %s25, 1
    %p379 = scmp.ne.s32.totalorder %s374, %s376
    %p380 = scmp.eq.s32.totalorder %s25, 0
    %p381 = por %p379, %p380
    %p382 = scmp.ne.s32.totalorder %s374, %s376
    %p383 = scmp.eq.s32.totalorder %s30, 1
    %p384 = por %p382, %p383
    %p385 = scmp.ne.s32.totalorder %s376, %s377
    %p386 = scmp.eq.s32.totalorder %s30, 0
    %p387 = por %p385, %p386
    %p388 = scmp.ne.s32.totalorder %s376, %s377
    %p389 = scmp.eq.s32.totalorder %s31, 1
    %p390 = por %p388, %p389
    %p392 = scmp.ne.s32.totalorder %s377, %s391
    %p393 = scmp.eq.s32.totalorder %s31, 0
    %p394 = por %p392, %p393
    %s396 = sadd.s32 %s395, 1
    %p399 = scmp.eq.s32.totalorder %s25, 1
    %p400 = scmp.ne.s32.totalorder %s395, %s397
    %p401 = scmp.eq.s32.totalorder %s25, 0
    %p402 = por %p400, %p401
    %p403 = scmp.ne.s32.totalorder %s395, %s397
    %p404 = scmp.eq.s32.totalorder %s30, 1
    %p405 = por %p403, %p404
    %p406 = scmp.ne.s32.totalorder %s397, %s398
    %p407 = scmp.eq.s32.totalorder %s30, 0
    %p408 = por %p406, %p407
    %p409 = scmp.ne.s32.totalorder %s397, %s398
    %p410 = scmp.eq.s32.totalorder %s31, 1
    %p411 = por %p409, %p410
    %p413 = scmp.ne.s32.totalorder %s398, %s412
    %p414 = scmp.eq.s32.totalorder %s31, 0
    %p415 = por %p413, %p414
    %s417 = sadd.s32 %s416, 1
    %p420 = scmp.eq.s32.totalorder %s25, 1
    %p421 = scmp.ne.s32.totalorder %s416, %s418
    %p422 = scmp.eq.s32.totalorder %s25, 0
    %p423 = por %p421, %p422
    %p424 = scmp.ne.s32.totalorder %s416, %s418
    %p425 = scmp.eq.s32.totalorder %s30, 1
    %p426 = por %p424, %p425
    %p427 = scmp.ne.s32.totalorder %s418, %s419
    %p428 = scmp.eq.s32.totalorder %s30, 0
    %p429 = por %p427, %p428
    %p430 = scmp.ne.s32.totalorder %s418, %s419
    %p431 = scmp.eq.s32.totalorder %s31, 1
    %p432 = por %p430, %p431
    %p434 = scmp.ne.s32.totalorder %s419, %s433
    %p435 = scmp.eq.s32.totalorder %s31, 0
    %p436 = por %p434, %p435
    %s437 = ssub.s32 %s25, %s32
    %p438 = scmp.eq.s32.totalorder %s437, 0
    %s440 = sadd.s32 %s439, 1
    %s441 = scalar_select %p438, %s439, %s440
    %p444 = pneg %p438
    %p445 = scmp.eq.s32.totalorder %s25, 1
    %p446 = por %p444, %p445
    %p447 = scmp.ne.s32.totalorder %s439, %s442
    %p448 = scmp.eq.s32.totalorder %s25, 0
    %p449 = por %p447, %p448
    %p450 = scmp.ne.s32.totalorder %s439, %s442
    %p451 = scmp.eq.s32.totalorder %s30, 1
    %p452 = por %p450, %p451
    %p453 = scmp.ne.s32.totalorder %s442, %s443
    %p454 = scmp.eq.s32.totalorder %s30, 0
    %p455 = por %p453, %p454
    %p456 = scmp.ne.s32.totalorder %s442, %s443
    %p457 = scmp.eq.s32.totalorder %s31, 1
    %p458 = por %p456, %p457
    %p460 = scmp.ne.s32.totalorder %s443, %s459
    %p461 = scmp.eq.s32.totalorder %s31, 0
    %p462 = por %p460, %p461
    %p463 = scmp.le.s32.totalorder 1, %s25
    %p464 = scmp.lt.s32.totalorder %s25, 3
    %p465 = pnand %p463, %p464
    %p466 = pneg %p465
    // Predicated region
    $region9: #{scalekd_forward.9} parent=5 // pred_check
      _
    $region10: #{scalekd_forward.9} parent=5 // pred_check_branch
      %468 = sbr.rel (%p465) target = $region12
    $region11: #{scalekd_forward.9} parent=5 // pred_region
      %s469 = ssub.s32 %s25, 1
      // Predicated region
      $region13: #{scalekd_forward.9} parent=11 // pred_check
        %p470 = pneg %p72
      $region14: #{scalekd_forward.9} parent=11 // pred_check_branch
        %472 = sbr.rel (%p470) target = $region16
      $region15: #{scalekd_forward.9} parent=11 // pred_region
        _
      $region16: #{scalekd_forward.9} parent=11 // pred_fallthru
        _
      // Predicated region
      $region17: #{scalekd_forward.9} parent=11 // pred_check
        %p473 = pneg %p93
      $region18: #{scalekd_forward.9} parent=11 // pred_check_branch
        %475 = sbr.rel (%p473) target = $region20
      $region19: #{scalekd_forward.9} parent=11 // pred_region
        _
      $region20: #{scalekd_forward.9} parent=11 // pred_fallthru
        _
      // Predicated region
      $region21: #{scalekd_forward.9} parent=11 // pred_check
        %p476 = pneg %p114
      $region22: #{scalekd_forward.9} parent=11 // pred_check_branch
        %478 = sbr.rel (%p476) target = $region24
      $region23: #{scalekd_forward.9} parent=11 // pred_region
        _
      $region24: #{scalekd_forward.9} parent=11 // pred_fallthru
        _
      // Predicated region
      $region25: #{scalekd_forward.9} parent=11 // pred_check
        %p479 = pneg %p135
      $region26: #{scalekd_forward.9} parent=11 // pred_check_branch
        %481 = sbr.rel (%p479) target = $region28
      $region27: #{scalekd_forward.9} parent=11 // pred_region
        _
      $region28: #{scalekd_forward.9} parent=11 // pred_fallthru
        _
      // Predicated region
      $region29: #{scalekd_forward.9} parent=11 // pred_check
        %p482 = pneg %p156
      $region30: #{scalekd_forward.9} parent=11 // pred_check_branch
        %484 = sbr.rel (%p482) target = $region32
      $region31: #{scalekd_forward.9} parent=11 // pred_region
        _
      $region32: #{scalekd_forward.9} parent=11 // pred_fallthru
        _
      // Predicated region
      $region33: #{scalekd_forward.9} parent=11 // pred_check
        %p485 = pneg %p177
      $region34: #{scalekd_forward.9} parent=11 // pred_check_branch
        %487 = sbr.rel (%p485) target = $region36
      $region35: #{scalekd_forward.9} parent=11 // pred_region
        _
      $region36: #{scalekd_forward.9} parent=11 // pred_fallthru
        _
      // Predicated region
      $region37: #{scalekd_forward.9} parent=11 // pred_check
        %p488 = pneg %p198
      $region38: #{scalekd_forward.9} parent=11 // pred_check_branch
        %490 = sbr.rel (%p488) target = $region40
      $region39: #{scalekd_forward.9} parent=11 // pred_region
        _
      $region40: #{scalekd_forward.9} parent=11 // pred_fallthru
        _
      // Predicated region
      $region41: #{scalekd_forward.9} parent=11 // pred_check
        %p491 = pneg %p219
      $region42: #{scalekd_forward.9} parent=11 // pred_check_branch
        %493 = sbr.rel (%p491) target = $region44
      $region43: #{scalekd_forward.9} parent=11 // pred_region
        _
      $region44: #{scalekd_forward.9} parent=11 // pred_fallthru
        _
      // Predicated region
      $region45: #{scalekd_forward.9} parent=11 // pred_check
        %p494 = pneg %p240
      $region46: #{scalekd_forward.9} parent=11 // pred_check_branch
        %496 = sbr.rel (%p494) target = $region48
      $region47: #{scalekd_forward.9} parent=11 // pred_region
        _
      $region48: #{scalekd_forward.9} parent=11 // pred_fallthru
        _
      // Predicated region
      $region49: #{scalekd_forward.9} parent=11 // pred_check
        %p497 = pneg %p261
      $region50: #{scalekd_forward.9} parent=11 // pred_check_branch
        %499 = sbr.rel (%p497) target = $region52
      $region51: #{scalekd_forward.9} parent=11 // pred_region
        _
      $region52: #{scalekd_forward.9} parent=11 // pred_fallthru
        _
      // Predicated region
      $region53: #{scalekd_forward.9} parent=11 // pred_check
        %p500 = pneg %p282
      $region54: #{scalekd_forward.9} parent=11 // pred_check_branch
        %502 = sbr.rel (%p500) target = $region56
      $region55: #{scalekd_forward.9} parent=11 // pred_region
        _
      $region56: #{scalekd_forward.9} parent=11 // pred_fallthru
        _
      // Predicated region
      $region57: #{scalekd_forward.9} parent=11 // pred_check
        %p503 = pneg %p303
      $region58: #{scalekd_forward.9} parent=11 // pred_check_branch
        %505 = sbr.rel (%p503) target = $region60
      $region59: #{scalekd_forward.9} parent=11 // pred_region
        _
      $region60: #{scalekd_forward.9} parent=11 // pred_fallthru
        _
      // Predicated region
      $region61: #{scalekd_forward.9} parent=11 // pred_check
        %p506 = pneg %p324
      $region62: #{scalekd_forward.9} parent=11 // pred_check_branch
        %508 = sbr.rel (%p506) target = $region64
      $region63: #{scalekd_forward.9} parent=11 // pred_region
        _
      $region64: #{scalekd_forward.9} parent=11 // pred_fallthru
        _
      // Predicated region
      $region65: #{scalekd_forward.9} parent=11 // pred_check
        %p509 = pneg %p345
      $region66: #{scalekd_forward.9} parent=11 // pred_check_branch
        %511 = sbr.rel (%p509) target = $region68
      $region67: #{scalekd_forward.9} parent=11 // pred_region
        _
      $region68: #{scalekd_forward.9} parent=11 // pred_fallthru
        _
      // Predicated region
      $region69: #{scalekd_forward.9} parent=11 // pred_check
        %p512 = pneg %p366
      $region70: #{scalekd_forward.9} parent=11 // pred_check_branch
        %514 = sbr.rel (%p512) target = $region72
      $region71: #{scalekd_forward.9} parent=11 // pred_region
        _
      $region72: #{scalekd_forward.9} parent=11 // pred_fallthru
        _
      // Predicated region
      $region73: #{scalekd_forward.9} parent=11 // pred_check
        %p515 = pneg %p387
      $region74: #{scalekd_forward.9} parent=11 // pred_check_branch
        %517 = sbr.rel (%p515) target = $region76
      $region75: #{scalekd_forward.9} parent=11 // pred_region
        _
      $region76: #{scalekd_forward.9} parent=11 // pred_fallthru
        _
      // Predicated region
      $region77: #{scalekd_forward.9} parent=11 // pred_check
        %p518 = pneg %p408
      $region78: #{scalekd_forward.9} parent=11 // pred_check_branch
        %520 = sbr.rel (%p518) target = $region80
      $region79: #{scalekd_forward.9} parent=11 // pred_region
        _
      $region80: #{scalekd_forward.9} parent=11 // pred_fallthru
        _
      // Predicated region
      $region81: #{scalekd_forward.9} parent=11 // pred_check
        %p521 = pneg %p429
      $region82: #{scalekd_forward.9} parent=11 // pred_check_branch
        %523 = sbr.rel (%p521) target = $region84
      $region83: #{scalekd_forward.9} parent=11 // pred_region
        _
      $region84: #{scalekd_forward.9} parent=11 // pred_fallthru
        _
    $region12: #{scalekd_forward.9} parent=5 // pred_fallthru
      _
    %p524 = scmp.lt.s32.totalorder %s25, 2
    // Predicated region
    $region85: #{scalekd_forward.9} parent=5 // pred_check
      %p525 = pneg %p524
    $region86: #{scalekd_forward.9} parent=5 // pred_check_branch
      %527 = sbr.rel (%p525) target = $region88
    $region87: #{scalekd_forward.9} parent=5 // pred_region
      // Predicated region
      $region89: #{scalekd_forward.9} parent=87 // pred_check
        %p528 = pneg %p45
      $region90: #{scalekd_forward.9} parent=87 // pred_check_branch
        %530 = sbr.rel (%p528) target = $region92
      $region91: #{scalekd_forward.9} parent=87 // pred_region
        %p531 = scmp.lt.s32.totalorder %s25, 1
        %s532 = scalar_select %p531, %s25, 1
        %s533 = smul.addr %s532, 8
        %s534 = smul.addr %s533, 8
        %s535 = scalar_lea.vmem %s0, %s534
      $region92: #{scalekd_forward.9} parent=87 // pred_fallthru
        _
    $region88: #{scalekd_forward.9} parent=5 // pred_fallthru
      _
    %p536 = scmp.le.s32.totalorder 1, %s25
    %p537 = scmp.lt.s32.totalorder %s25, 3
    %p538 = pnand %p536, %p537
    %p539 = pneg %p538
    // Predicated region
    $region93: #{scalekd_forward.9} parent=5 // pred_check
      _
    $region94: #{scalekd_forward.9} parent=5 // pred_check_branch
      %541 = sbr.rel (%p538) target = $region96
    $region95: #{scalekd_forward.9} parent=5 // pred_region
      %s542 = ssub.s32 %s25, 1
      %p543 = scmp.lt.s32.totalorder %s30, 1
      %s544 = scalar_select %p543, %s30, 1
      %s545 = smul.addr %s544, 8
      %s546 = smul.addr %s545, 8
      %s547 = scalar_lea.vmem %s0, %s546
      %p548 = pneg %p51
      %p549 = pneg %p48
      %p550 = pneg %p72
      %p551 = pneg %p69
      %p552 = pneg %p93
      %p553 = pneg %p90
      %p554 = pneg %p114
      %p555 = pneg %p111
      %p556 = pneg %p135
      %p557 = pneg %p132
      %p558 = pneg %p156
      %p559 = pneg %p153
      %p560 = pneg %p177
      %p561 = pneg %p174
      %p562 = pneg %p198
      %p563 = pneg %p195
      %p564 = pneg %p219
      %p565 = pneg %p216
      %p566 = pneg %p240
      %p567 = pneg %p237
      %p568 = pneg %p261
      %p569 = pneg %p258
      %p570 = pneg %p282
      %p571 = pneg %p279
      %p572 = pneg %p303
      %p573 = pneg %p300
      %p574 = pneg %p324
      %p575 = pneg %p321
      %p576 = pneg %p345
      %p577 = pneg %p342
      %p578 = pneg %p366
      %p579 = pneg %p363
      %p580 = pneg %p387
      %p581 = pneg %p384
      %p582 = pneg %p408
      %p583 = pneg %p405
      %p584 = pneg %p429
      %p585 = pneg %p426
      %p586 = pneg %p455
      %p587 = pneg %p452
      %p588 = scmp.lt.s32.totalorder %s30, 1
      %s589 = scalar_select %p588, %s30, 1
      %s590 = smul.addr %s589, 8
      %s591 = smul.addr %s590, 8
      %s592 = scalar_lea.vmem %s19, %s591
      %p593 = scmp.lt.s32.totalorder %s30, 1
      %s594 = scalar_select %p593, %s30, 1
      %s595 = smul.addr %s594, 8
      %s596 = smul.addr %s595, 8
      %s597 = scalar_lea.vmem %s0, %s596
      %p598 = scmp.lt.s32.totalorder %s30, 1
      %s599 = scalar_select %p598, %s30, 1
      %s600 = smul.addr %s599, 8
      %s601 = smul.addr %s600, 8
      %s602 = scalar_lea.vmem %s19, %s601
      %v603 = vld [vmem:[%s597] sm:$0xff]
      %v604 = vld [vmem:[%s597 + $0x8] sm:$0xff]
      %v605 = vld [vmem:[%s597 + $0x10] sm:$0xff]
      %v606 = vld [vmem:[%s597 + $0x18] sm:$0xff]
      %v607 = vld [vmem:[%s597 + $0x20] sm:$0xff]
      %v608 = vld [vmem:[%s597 + $0x28] sm:$0xff]
      %v609 = vld [vmem:[%s597 + $0x30] sm:$0xff]
      %v610 = vld [vmem:[%s597 + $0x38] sm:$0xff]
      %v611 = vld [vmem:[%s1] sm:$0x1]
      %v613 = vlaneseq
      %v614 = vshrl.u32 %v613, 7
      %v615 = vsub.s32 0, %v614
      %v616 = vrot.slane %v611, %v615
      %v618 = vmul.f32 %v603, %v616
      %v619 = vmul.f32 %v604, %v616
      %v620 = vmul.f32 %v605, %v616
      %v621 = vmul.f32 %v606, %v616
      %v622 = vmul.f32 %v607, %v616
      %v623 = vmul.f32 %v608, %v616
      %v624 = vmul.f32 %v609, %v616
      %v625 = vmul.f32 %v610, %v616
      %v626 = vld [vmem:[%s2] sm:$0x1]
      %v628 = vlaneseq
      %v629 = vshrl.u32 %v628, 7
      %v630 = vsub.s32 0, %v629
      %v631 = vrot.slane %v626, %v630
      %v633 = vadd.f32 %v618, %v631
      %v634 = vadd.f32 %v619, %v631
      %v635 = vadd.f32 %v620, %v631
      %v636 = vadd.f32 %v621, %v631
      %v637 = vadd.f32 %v622, %v631
      %v638 = vadd.f32 %v623, %v631
      %v639 = vadd.f32 %v624, %v631
      %v640 = vadd.f32 %v625, %v631
      %v641 = vmax.f32 %v633, 0.0
      %v642 = vmax.f32 %v634, 0.0
      %v643 = vmax.f32 %v635, 0.0
      %v644 = vmax.f32 %v636, 0.0
      %v645 = vmax.f32 %v637, 0.0
      %v646 = vmax.f32 %v638, 0.0
      %v647 = vmax.f32 %v639, 0.0
      %v648 = vmax.f32 %v640, 0.0
      %v649 = vld [vmem:[%s3] sm:$0xff]
      %v650 = vld [vmem:[%s3 + $0x8] sm:$0xff]
      %v651 = vld [vmem:[%s3 + $0x10] sm:$0xff]
      %v652 = vld [vmem:[%s3 + $0x18] sm:$0xff]
      %v653 = vld [vmem:[%s3 + $0x20] sm:$0xff]
      %v654 = vld [vmem:[%s3 + $0x28] sm:$0xff]
      %v655 = vld [vmem:[%s3 + $0x30] sm:$0xff]
      %v656 = vld [vmem:[%s3 + $0x38] sm:$0xff]
      %v657 = vadd.f32 %v641, %v649
      %v658 = vadd.f32 %v642, %v650
      %v659 = vadd.f32 %v643, %v651
      %v660 = vadd.f32 %v644, %v652
      %v661 = vadd.f32 %v645, %v653
      %v662 = vadd.f32 %v646, %v654
      %v663 = vadd.f32 %v647, %v655
      %v664 = vadd.f32 %v648, %v656
      %v665 = vld [vmem:[%s4] sm:$0xff]
      %v666 = vld [vmem:[%s4 + $0x8] sm:$0xff]
      %v667 = vld [vmem:[%s4 + $0x10] sm:$0xff]
      %v668 = vld [vmem:[%s4 + $0x18] sm:$0xff]
      %v669 = vld [vmem:[%s4 + $0x20] sm:$0xff]
      %v670 = vld [vmem:[%s4 + $0x28] sm:$0xff]
      %v671 = vld [vmem:[%s4 + $0x30] sm:$0xff]
      %v672 = vld [vmem:[%s4 + $0x38] sm:$0xff]
      %v673 = vld [vmem:[%s5] sm:$0xff]
      %v674 = vld [vmem:[%s5 + $0x8] sm:$0xff]
      %v675 = vld [vmem:[%s5 + $0x10] sm:$0xff]
      %v676 = vld [vmem:[%s5 + $0x18] sm:$0xff]
      %v677 = vld [vmem:[%s6] sm:$0x1]
      %v679 = vlaneseq
      %v680 = vshrl.u32 %v679, 7
      %v681 = vsub.s32 0, %v680
      %v682 = vrot.slane %v677, %v681
      %vm684 = vcmask 261120
      %v686 = vsel %vm684, %v665, 0
      %v689 = vsel %vm684, %v666, 0
      %v692 = vsel %vm684, %v667, 0
      %v695 = vsel %vm684, %v668, 0
      %v698 = vsel %vm684, %v669, 0
      %v701 = vsel %vm684, %v670, 0
      %v704 = vsel %vm684, %v671, 0
      %v707 = vsel %vm684, %v672, 0
      %709 = vmatprep.subr.mxu0 0.0
      %710 = vmatpush1.msra.mxu0 %v673
      %711 = vmatprep.subr.mxu0 0.0
      %712 = vmatpush1.msra.mxu0 %v674
      %713 = vmatprep.subr.mxu0 0.0
      %714 = vmatpush1.msra.mxu0 %v675
      %715 = vmatprep.subr.mxu0 0.0
      %716 = vmatpush1.msra.mxu0 %v676
      %717 = vmatprep.subr.mxu0 0.0
      %718 = vmatpush1.msra.mxu0 0.0
      %719 = vmatprep.subr.mxu0 0.0
      %720 = vmatpush1.msra.mxu0 0.0
      %721 = vmatprep.subr.mxu0 0.0
      %722 = vmatpush1.msra.mxu0 0.0
      %723 = vmatprep.subr.mxu0 0.0
      %724 = vmatpush1.msra.mxu0 0.0
      %725 = vmatprep.subr.mxu0 0.0
      %726 = vmatpush1.msra.mxu0 0.0
      %727 = vmatprep.subr.mxu0 0.0
      %728 = vmatpush1.msra.mxu0 0.0
      %729 = vmatprep.subr.mxu0 0.0
      %730 = vmatpush1.msra.mxu0 0.0
      %731 = vmatprep.subr.mxu0 0.0
      %732 = vmatpush1.msra.mxu0 0.0
      %733 = vmatprep.subr.mxu0 0.0
      %734 = vmatpush1.msra.mxu0 0.0
      %735 = vmatprep.subr.mxu0 0.0
      %736 = vmatpush1.msra.mxu0 0.0
      %737 = vmatprep.subr.mxu0 0.0
      %738 = vmatpush1.msra.mxu0 0.0
      %739 = vmatprep.subr.mxu0 0.0
      %740 = vmatpush1.msra.mxu0 0.0
      %741 = vmatprep.subr.mxu0 0.0
      %742 = vmatpush1.msra.mxu0 0.0
      %743 = vmatprep.subr.mxu0 0.0
      %744 = vmatpush1.msra.mxu0 0.0
      %745 = vmatprep.subr.mxu0 0.0
      %746 = vmatpush1.msra.mxu0 0.0
      %747 = vmatprep.subr.mxu0 0.0
      %748 = vmatpush1.msra.mxu0 0.0
      %749 = vmatprep.subr.mxu0 0.0
      %750 = vmatpush1.msra.mxu0 0.0
      %751 = vmatprep.subr.mxu0 0.0
      %752 = vmatpush1.msra.mxu0 0.0
      %753 = vmatprep.subr.mxu0 0.0
      %754 = vmatpush1.msra.mxu0 0.0
      %755 = vmatprep.subr.mxu0 0.0
      %756 = vmatpush1.msra.mxu0 0.0
      %757 = vmatprep.subr.mxu0 0.0
      %758 = vmatpush1.msra.mxu0 0.0
      %759 = vmatprep.subr.mxu0 0.0
      %760 = vmatpush1.msra.mxu0 0.0
      %761 = vmatprep.subr.mxu0 0.0
      %762 = vmatpush1.msra.mxu0 0.0
      %763 = vmatprep.subr.mxu0 0.0
      %764 = vmatpush1.msra.mxu0 0.0
      %765 = vmatprep.subr.mxu0 0.0
      %766 = vmatpush1.msra.mxu0 0.0
      %767 = vmatprep.subr.mxu0 0.0
      %768 = vmatpush1.msra.mxu0 0.0
      %769 = vmatprep.subr.mxu0 0.0
      %770 = vmatpush1.msra.mxu0 0.0
      %771 = vmatprep.subr.mxu0 0.0
      %772 = vmatpush1.msra.mxu0 0.0
      %773 = vmatprep.mubr.f32.mxu0 0.0
      %774 = vmatmul.mubr.f32.gmra.mrb[0].mxu0 %v686
      %v775 = vpop.f32.mrb[0].mxu0
      %v776 = vadd.f32 %v682, %v775
      %v777 = vpop.f32.mrb[0].mxu0
      %778 = vmatprep.mubr.f32.mxu0 0.0
      %779 = vmatmul.mubr.f32.gmra.mrb[0].mxu0 %v689
      %v780 = vpop.f32.mrb[0].mxu0
      %v781 = vadd.f32 %v682, %v780
      %v782 = vpop.f32.mrb[0].mxu0
      %783 = vmatprep.mubr.f32.mxu0 0.0
      %784 = vmatmul.mubr.f32.gmra.mrb[0].mxu0 %v692
      %v785 = vpop.f32.mrb[0].mxu0
      %v786 = vadd.f32 %v682, %v785
      %v787 = vpop.f32.mrb[0].mxu0
      %788 = vmatprep.mubr.f32.mxu0 0.0
      %789 = vmatmul.mubr.f32.gmra.mrb[0].mxu0 %v695
      %v790 = vpop.f32.mrb[0].mxu0
      %v791 = vadd.f32 %v682, %v790
      %v792 = vpop.f32.mrb[0].mxu0
      %793 = vmatprep.mubr.f32.mxu0 0.0
      %794 = vmatmul.mubr.f32.gmra.mrb[0].mxu0 %v698
      %v795 = vpop.f32.mrb[0].mxu0
      %v796 = vadd.f32 %v682, %v795
      %v797 = vpop.f32.mrb[0].mxu0
      %798 = vmatprep.mubr.f32.mxu0 0.0
      %799 = vmatmul.mubr.f32.gmra.mrb[0].mxu0 %v701
      %v800 = vpop.f32.mrb[0].mxu0
      %v801 = vadd.f32 %v682, %v800
      %v802 = vpop.f32.mrb[0].mxu0
      %803 = vmatprep.mubr.f32.mxu0 0.0
      %804 = vmatmul.mubr.f32.gmra.mrb[0].mxu0 %v704
      %v805 = vpop.f32.mrb[0].mxu0
      %v806 = vadd.f32 %v682, %v805
      %v807 = vpop.f32.mrb[0].mxu0
      %808 = vmatprep.mubr.f32.mxu0 0.0
      %809 = vmatmul.mubr.f32.gmra.mrb[0].mxu0 %v707
      %v810 = vpop.f32.mrb[0].mxu0
      %v811 = vadd.f32 %v682, %v810
      %v812 = vpop.f32.mrb[0].mxu0
      %813 = vdwg.mxu0
      %v814 = vld [vmem:[%s7] sm:$0xff]
      %v815 = vld [vmem:[%s7 + $0x8] sm:$0xff]
      %v816 = vld [vmem:[%s7 + $0x10] sm:$0xff]
      %v817 = vld [vmem:[%s7 + $0x18] sm:$0xff]
      %v818 = vld [vmem:[%s8] sm:$0x1]
      %v820 = vlaneseq
      %v821 = vshrl.u32 %v820, 7
      %v822 = vsub.s32 0, %v821
      %v823 = vrot.slane %v818, %v822
      %v826 = vsel %vm684, %v657, 0
      %v829 = vsel %vm684, %v658, 0
      %v832 = vsel %vm684, %v659, 0
      %v835 = vsel %vm684, %v660, 0
      %v838 = vsel %vm684, %v661, 0
      %v841 = vsel %vm684, %v662, 0
      %v844 = vsel %vm684, %v663, 0
      %v847 = vsel %vm684, %v664, 0
      %849 = vmatprep.subr.mxu0 0.0
      %850 = vmatpush1.msra.mxu0 %v814
      %851 = vmatprep.subr.mxu0 0.0
      %852 = vmatpush1.msra.mxu0 %v815
      %853 = vmatprep.subr.mxu0 0.0
      %854 = vmatpush1.msra.mxu0 %v816
      %855 = vmatprep.subr.mxu0 0.0
      %856 = vmatpush1.msra.mxu0 %v817
      %857 = vmatprep.subr.mxu0 0.0
      %858 = vmatpush1.msra.mxu0 0.0
      %859 = vmatprep.subr.mxu0 0.0
      %860 = vmatpush1.msra.mxu0 0.0
      %861 = vmatprep.subr.mxu0 0.0
      %862 = vmatpush1.msra.mxu0 0.0
      %863 = vmatprep.subr.mxu0 0.0
      %864 = vmatpush1.msra.mxu0 0.0
      %865 = vmatprep.subr.mxu0 0.0
      %866 = vmatpush1.msra.mxu0 0.0
      %867 = vmatprep.subr.mxu0 0.0
      %868 = vmatpush1.msra.mxu0 0.0
      %869 = vmatprep.subr.mxu0 0.0
      %870 = vmatpush1.msra.mxu0 0.0
      %871 = vmatprep.subr.mxu0 0.0
      %872 = vmatpush1.msra.mxu0 0.0
      %873 = vmatprep.subr.mxu0 0.0
      %874 = vmatpush1.msra.mxu0 0.0
      %875 = vmatprep.subr.mxu0 0.0
      %876 = vmatpush1.msra.mxu0 0.0
      %877 = vmatprep.subr.mxu0 0.0
      %878 = vmatpush1.msra.mxu0 0.0
      %879 = vmatprep.subr.mxu0 0.0
      %880 = vmatpush1.msra.mxu0 0.0
      %881 = vmatprep.subr.mxu0 0.0
      %882 = vmatpush1.msra.mxu0 0.0
      %883 = vmatprep.subr.mxu0 0.0
      %884 = vmatpush1.msra.mxu0 0.0
      %885 = vmatprep.subr.mxu0 0.0
      %886 = vmatpush1.msra.mxu0 0.0
      %887 = vmatprep.subr.mxu0 0.0
      %888 = vmatpush1.msra.mxu0 0.0
      %889 = vmatprep.subr.mxu0 0.0
      %890 = vmatpush1.msra.mxu0 0.0
      %891 = vmatprep.subr.mxu0 0.0
      %892 = vmatpush1.msra.mxu0 0.0
      %893 = vmatprep.subr.mxu0 0.0
      %894 = vmatpush1.msra.mxu0 0.0
      %895 = vmatprep.subr.mxu0 0.0
      %896 = vmatpush1.msra.mxu0 0.0
      %897 = vmatprep.subr.mxu0 0.0
      %898 = vmatpush1.msra.mxu0 0.0
      %899 = vmatprep.subr.mxu0 0.0
      %900 = vmatpush1.msra.mxu0 0.0
      %901 = vmatprep.subr.mxu0 0.0
      %902 = vmatpush1.msra.mxu0 0.0
      %903 = vmatprep.subr.mxu0 0.0
      %904 = vmatpush1.msra.mxu0 0.0
      %905 = vmatprep.subr.mxu0 0.0
      %906 = vmatpush1.msra.mxu0 0.0
      %907 = vmatprep.subr.mxu0 0.0
      %908 = vmatpush1.msra.mxu0 0.0
      %909 = vmatprep.subr.mxu0 0.0
      %910 = vmatpush1.msra.mxu0 0.0
      %911 = vmatprep.subr.mxu0 0.0
      %912 = vmatpush1.msra.mxu0 0.0
      %913 = vmatprep.mubr.f32.mxu0 0.0
      %914 = vmatmul.mubr.f32.gmra.mrb[0].mxu0 %v826
      %v915 = vpop.f32.mrb[0].mxu0
      %v916 = vadd.f32 %v823, %v915
      %v917 = vpop.f32.mrb[0].mxu0
      %918 = vmatprep.mubr.f32.mxu0 0.0
      %919 = vmatmul.mubr.f32.gmra.mrb[0].mxu0 %v829
      %v920 = vpop.f32.mrb[0].mxu0
      %v921 = vadd.f32 %v823, %v920
      %v922 = vpop.f32.mrb[0].mxu0
      %923 = vmatprep.mubr.f32.mxu0 0.0
      %924 = vmatmul.mubr.f32.gmra.mrb[0].mxu0 %v832
      %v925 = vpop.f32.mrb[0].mxu0
      %v926 = vadd.f32 %v823, %v925
      %v927 = vpop.f32.mrb[0].mxu0
      %928 = vmatprep.mubr.f32.mxu0 0.0
      %929 = vmatmul.mubr.f32.gmra.mrb[0].mxu0 %v835
      %v930 = vpop.f32.mrb[0].mxu0
      %v931 = vadd.f32 %v823, %v930
      %v932 = vpop.f32.mrb[0].mxu0
      %933 = vmatprep.mubr.f32.mxu0 0.0
      %934 = vmatmul.mubr.f32.gmra.mrb[0].mxu0 %v838
      %v935 = vpop.f32.mrb[0].mxu0
      %v936 = vadd.f32 %v823, %v935
      %v937 = vpop.f32.mrb[0].mxu0
      %938 = vmatprep.mubr.f32.mxu0 0.0
      %939 = vmatmul.mubr.f32.gmra.mrb[0].mxu0 %v841
      %v940 = vpop.f32.mrb[0].mxu0
      %v941 = vadd.f32 %v823, %v940
      %v942 = vpop.f32.mrb[0].mxu0
      %943 = vmatprep.mubr.f32.mxu0 0.0
      %944 = vmatmul.mubr.f32.gmra.mrb[0].mxu0 %v844
      %v945 = vpop.f32.mrb[0].mxu0
      %v946 = vadd.f32 %v823, %v945
      %v947 = vpop.f32.mrb[0].mxu0
      %948 = vmatprep.mubr.f32.mxu0 0.0
      %949 = vmatmul.mubr.f32.gmra.mrb[0].mxu0 %v847
      %v950 = vpop.f32.mrb[0].mxu0
      %v951 = vadd.f32 %v823, %v950
      %v952 = vpop.f32.mrb[0].mxu0
      %953 = vdwg.mxu0
      %v954 = vmul.f32 %v776, 0.35355338
      %v955 = vmul.f32 %v781, 0.35355338
      %v956 = vmul.f32 %v786, 0.35355338
      %v957 = vmul.f32 %v791, 0.35355338
      %v958 = vmul.f32 %v796, 0.35355338
      %v959 = vmul.f32 %v801, 0.35355338
      %v960 = vmul.f32 %v806, 0.35355338
      %v961 = vmul.f32 %v811, 0.35355338
      %vm962 = vcmask 64512
      %v964 = vsel %vm962, %v954, 0
      %v967 = vsel %vm962, %v955, 0
      %v970 = vsel %vm962, %v956, 0
      %v973 = vsel %vm962, %v957, 0
      %v976 = vsel %vm962, %v958, 0
      %v979 = vsel %vm962, %v959, 0
      %v982 = vsel %vm962, %v960, 0
      %v985 = vsel %vm962, %v961, 0
      %v988 = vsel %vm962, %v916, 0
      %v991 = vsel %vm962, %v921, 0
      %v994 = vsel %vm962, %v926, 0
      %v997 = vsel %vm962, %v931, 0
      %v1000 = vsel %vm962, %v936, 0
      %v1003 = vsel %vm962, %v941, 0
      %v1006 = vsel %vm962, %v946, 0
      %v1009 = vsel %vm962, %v951, 0
      %1011 = vmatprep.subr.mxu0 0.0
      %1012 = vmatpush1.xpose.msra.mxu0 %v988
      %1013 = vmatprep.subr.mxu0 0.0
      %1014 = vmatpush1.xpose.msra.mxu0 %v991
      %1015 = vmatprep.subr.mxu0 0.0
      %1016 = vmatpush1.xpose.msra.mxu0 %v994
      %1017 = vmatprep.subr.mxu0 0.0
      %1018 = vmatpush1.xpose.msra.mxu0 %v997
      %1019 = vmatprep.subr.mxu0 0.0
      %1020 = vmatpush1.xpose.msra.mxu0 %v1000
      %1021 = vmatprep.subr.mxu0 0.0
      %1022 = vmatpush1.xpose.msra.mxu0 %v1003
      %1023 = vmatprep.subr.mxu0 0.0
      %1024 = vmatpush1.xpose.msra.mxu0 %v1006
      %1025 = vmatprep.subr.mxu0 0.0
      %1026 = vmatpush1.xpose.msra.mxu0 %v1009
      %1027 = vmatprep.subr.mxu0 0.0
      %1028 = vmatpush1.xpose.msra.mxu0 0.0
      %1029 = vmatprep.subr.mxu0 0.0
      %1030 = vmatpush1.xpose.msra.mxu0 0.0
      %1031 = vmatprep.subr.mxu0 0.0
      %1032 = vmatpush1.xpose.msra.mxu0 0.0
      %1033 = vmatprep.subr.mxu0 0.0
      %1034 = vmatpush1.xpose.msra.mxu0 0.0
      %1035 = vmatprep.subr.mxu0 0.0
      %1036 = vmatpush1.xpose.msra.mxu0 0.0
      %1037 = vmatprep.subr.mxu0 0.0
      %1038 = vmatpush1.xpose.msra.mxu0 0.0
      %1039 = vmatprep.subr.mxu0 0.0
      %1040 = vmatpush1.xpose.msra.mxu0 0.0
      %1041 = vmatprep.subr.mxu0 0.0
      %1042 = vmatpush1.xpose.msra.mxu0 0.0
      %1043 = vmatprep.subr.mxu0 0.0
      %1044 = vmatpush1.xpose.msra.mxu0 0.0
      %1045 = vmatprep.subr.mxu0 0.0
      %1046 = vmatpush1.xpose.msra.mxu0 0.0
      %1047 = vmatprep.subr.mxu0 0.0
      %1048 = vmatpush1.xpose.msra.mxu0 0.0
      %1049 = vmatprep.subr.mxu0 0.0
      %1050 = vmatpush1.xpose.msra.mxu0 0.0
      %1051 = vmatprep.subr.mxu0 0.0
      %1052 = vmatpush1.xpose.msra.mxu0 0.0
      %1053 = vmatprep.subr.mxu0 0.0
      %1054 = vmatpush1.xpose.msra.mxu0 0.0
      %1055 = vmatprep.subr.mxu0 0.0
      %1056 = vmatpush1.xpose.msra.mxu0 0.0
      %1057 = vmatprep.subr.mxu0 0.0
      %1058 = vmatpush1.xpose.msra.mxu0 0.0
      %1059 = vmatprep.subr.mxu0 0.0
      %1060 = vmatpush1.xpose.msra.mxu0 0.0
      %1061 = vmatprep.subr.mxu0 0.0
      %1062 = vmatpush1.xpose.msra.mxu0 0.0
      %1063 = vmatprep.subr.mxu0 0.0
      %1064 = vmatpush1.xpose.msra.mxu0 0.0
      %1065 = vmatprep.subr.mxu0 0.0
      %1066 = vmatpush1.xpose.msra.mxu0 0.0
      %1067 = vmatprep.subr.mxu0 0.0
      %1068 = vmatpush1.xpose.msra.mxu0 0.0
      %1069 = vmatprep.subr.mxu0 0.0
      %1070 = vmatpush1.xpose.msra.mxu0 0.0
      %1071 = vmatprep.subr.mxu0 0.0
      %1072 = vmatpush1.xpose.msra.mxu0 0.0
      %1073 = vmatprep.subr.mxu0 0.0
      %1074 = vmatpush1.xpose.msra.mxu0 0.0
      %1075 = vmatprep.mubr.f32.mxu0 0.0
      %1076 = vmatmul.mubr.f32.gmra.mrb[0].mxu0 %v964
      %v1077 = vpop.f32.mrb[0].mxu0
      %v1078 = vadd.f32 0.0, %v1077
      %v1079 = vpop.f32.mrb[0].mxu0
      %1080 = vmatprep.mubr.f32.mxu0 0.0
      %1081 = vmatmul.mubr.f32.gmra.mrb[0].mxu0 %v967
      %v1082 = vpop.f32.mrb[0].mxu0
      %v1083 = vadd.f32 0.0, %v1082
      %v1084 = vpop.f32.mrb[0].mxu0
      %1085 = vmatprep.mubr.f32.mxu0 0.0
      %1086 = vmatmul.mubr.f32.gmra.mrb[0].mxu0 %v970
      %v1087 = vpop.f32.mrb[0].mxu0
      %v1088 = vadd.f32 0.0, %v1087
      %v1089 = vpop.f32.mrb[0].mxu0
      %1090 = vmatprep.mubr.f32.mxu0 0.0
      %1091 = vmatmul.mubr.f32.gmra.mrb[0].mxu0 %v973
      %v1092 = vpop.f32.mrb[0].mxu0
      %v1093 = vadd.f32 0.0, %v1092
      %v1094 = vpop.f32.mrb[0].mxu0
      %1095 = vmatprep.mubr.f32.mxu0 0.0
      %1096 = vmatmul.mubr.f32.gmra.mrb[0].mxu0 %v976
      %v1097 = vpop.f32.mrb[0].mxu0
      %v1098 = vadd.f32 0.0, %v1097
      %v1099 = vpop.f32.mrb[0].mxu0
      %1100 = vmatprep.mubr.f32.mxu0 0.0
      %1101 = vmatmul.mubr.f32.gmra.mrb[0].mxu0 %v979
      %v1102 = vpop.f32.mrb[0].mxu0
      %v1103 = vadd.f32 0.0, %v1102
      %v1104 = vpop.f32.mrb[0].mxu0
      %1105 = vmatprep.mubr.f32.mxu0 0.0
      %1106 = vmatmul.mubr.f32.gmra.mrb[0].mxu0 %v982
      %v1107 = vpop.f32.mrb[0].mxu0
      %v1108 = vadd.f32 0.0, %v1107
      %v1109 = vpop.f32.mrb[0].mxu0
      %1110 = vmatprep.mubr.f32.mxu0 0.0
      %1111 = vmatmul.mubr.f32.gmra.mrb[0].mxu0 %v985
      %v1112 = vpop.f32.mrb[0].mxu0
      %v1113 = vadd.f32 0.0, %v1112
      %v1114 = vpop.f32.mrb[0].mxu0
      %1115 = vdwg.mxu0
      %vm1116 = vcmask 523264
      %v1117 = vsel %vm1116, %v1078, -inf
      %1118 = vmax.xlane.f32.xlu0 %v1117
      %v1119 = vpop.xlane.xlu0 %1118
      %v1120 = vsel %vm1116, %v1083, -inf
      %1121 = vmax.xlane.f32.xlu0 %v1120
      %v1122 = vpop.xlane.xlu0 %1121
      %v1123 = vsel %vm1116, %v1088, -inf
      %1124 = vmax.xlane.f32.xlu0 %v1123
      %v1125 = vpop.xlane.xlu0 %1124
      %v1126 = vsel %vm1116, %v1093, -inf
      %1127 = vmax.xlane.f32.xlu0 %v1126
      %v1128 = vpop.xlane.xlu0 %1127
      %v1129 = vsel %vm1116, %v1098, -inf
      %1130 = vmax.xlane.f32.xlu0 %v1129
      %v1131 = vpop.xlane.xlu0 %1130
      %v1132 = vsel %vm1116, %v1103, -inf
      %1133 = vmax.xlane.f32.xlu0 %v1132
      %v1134 = vpop.xlane.xlu0 %1133
      %v1135 = vsel %vm1116, %v1108, -inf
      %1136 = vmax.xlane.f32.xlu0 %v1135
      %v1137 = vpop.xlane.xlu0 %1136
      %v1138 = vsel %vm1116, %v1113, -inf
      %1139 = vmax.xlane.f32.xlu0 %v1138
      %v1140 = vpop.xlane.xlu0 %1139
      %v1141 = vsub.f32 %v1078, %v1119
      %v1142 = vsub.f32 %v1083, %v1122
      %v1143 = vsub.f32 %v1088, %v1125
      %v1144 = vsub.f32 %v1093, %v1128
      %v1145 = vsub.f32 %v1098, %v1131
      %v1146 = vsub.f32 %v1103, %v1134
      %v1147 = vsub.f32 %v1108, %v1137
      %v1148 = vsub.f32 %v1113, %v1140
      %v1149 = vmul.f32 %v1141, 1.442695
      %v1150 = vpow.pop %v1149
      %v1151 = vmul.f32 %v1142, 1.442695
      %v1152 = vpow.pop %v1151
      %v1153 = vmul.f32 %v1143, 1.442695
      %v1154 = vpow.pop %v1153
      %v1155 = vmul.f32 %v1144, 1.442695
      %v1156 = vpow.pop %v1155
      %v1157 = vmul.f32 %v1145, 1.442695
      %v1158 = vpow.pop %v1157
      %v1159 = vmul.f32 %v1146, 1.442695
      %v1160 = vpow.pop %v1159
      %v1161 = vmul.f32 %v1147, 1.442695
      %v1162 = vpow.pop %v1161
      %v1163 = vmul.f32 %v1148, 1.442695
      %v1164 = vpow.pop %v1163
      %v1165 = vsel %vm1116, %v1150, 0.0
      %1166 = vadd.xlane.f32.xlu0 %v1165
      %v1167 = vpop.xlane.xlu0 %1166
      %v1168 = vsel %vm1116, %v1152, 0.0
      %1169 = vadd.xlane.f32.xlu0 %v1168
      %v1170 = vpop.xlane.xlu0 %1169
      %v1171 = vsel %vm1116, %v1154, 0.0
      %1172 = vadd.xlane.f32.xlu0 %v1171
      %v1173 = vpop.xlane.xlu0 %1172
      %v1174 = vsel %vm1116, %v1156, 0.0
      %1175 = vadd.xlane.f32.xlu0 %v1174
      %v1176 = vpop.xlane.xlu0 %1175
      %v1177 = vsel %vm1116, %v1158, 0.0
      %1178 = vadd.xlane.f32.xlu0 %v1177
      %v1179 = vpop.xlane.xlu0 %1178
      %v1180 = vsel %vm1116, %v1160, 0.0
      %1181 = vadd.xlane.f32.xlu0 %v1180
      %v1182 = vpop.xlane.xlu0 %1181
      %v1183 = vsel %vm1116, %v1162, 0.0
      %1184 = vadd.xlane.f32.xlu0 %v1183
      %v1185 = vpop.xlane.xlu0 %1184
      %v1186 = vsel %vm1116, %v1164, 0.0
      %1187 = vadd.xlane.f32.xlu0 %v1186
      %v1188 = vpop.xlane.xlu0 %1187
      %v1189 = vrcp.pop %v1167
      %v1190 = vrcp.pop %v1170
      %v1191 = vrcp.pop %v1173
      %v1192 = vrcp.pop %v1176
      %v1193 = vrcp.pop %v1179
      %v1194 = vrcp.pop %v1182
      %v1195 = vrcp.pop %v1185
      %v1196 = vrcp.pop %v1188
      %v1197 = vmul.f32 %v1150, %v1189
      %v1198 = vmul.f32 %v1152, %v1190
      %v1199 = vmul.f32 %v1154, %v1191
      %v1200 = vmul.f32 %v1156, %v1192
      %v1201 = vmul.f32 %v1158, %v1193
      %v1202 = vmul.f32 %v1160, %v1194
      %v1203 = vmul.f32 %v1162, %v1195
      %v1204 = vmul.f32 %v1164, %v1196
      %1205 = vrot.lane.b32.xlu0 %v916, 96
      %v1206 = vpop.permute.xlu0 %1205
      %1207 = vrot.lane.b32.xlu0 %v921, 96
      %v1208 = vpop.permute.xlu0 %1207
      %1209 = vrot.lane.b32.xlu0 %v926, 96
      %v1210 = vpop.permute.xlu0 %1209
      %1211 = vrot.lane.b32.xlu0 %v931, 96
      %v1212 = vpop.permute.xlu0 %1211
      %1213 = vrot.lane.b32.xlu0 %v936, 96
      %v1214 = vpop.permute.xlu0 %1213
      %1215 = vrot.lane.b32.xlu0 %v941, 96
      %v1216 = vpop.permute.xlu0 %1215
      %1217 = vrot.lane.b32.xlu0 %v946, 96
      %v1218 = vpop.permute.xlu0 %1217
      %1219 = vrot.lane.b32.xlu0 %v951, 96
      %v1220 = vpop.permute.xlu0 %1219
      %v1230 = vsel %vm1116, %v1197, 0
      %v1233 = vsel %vm1116, %v1198, 0
      %v1236 = vsel %vm1116, %v1199, 0
      %v1239 = vsel %vm1116, %v1200, 0
      %v1242 = vsel %vm1116, %v1201, 0
      %v1245 = vsel %vm1116, %v1202, 0
      %v1248 = vsel %vm1116, %v1203, 0
      %v1251 = vsel %vm1116, %v1204, 0
      %1253 = vmatprep.subr.mxu0 0.0
      %1254 = vmatpush1.msra.mxu0 %v1206
      %1255 = vmatprep.subr.mxu0 0.0
      %1256 = vmatpush1.msra.mxu0 %v1208
      %1257 = vmatprep.subr.mxu0 0.0
      %1258 = vmatpush1.msra.mxu0 %v1210
      %1259 = vmatprep.subr.mxu0 0.0
      %1260 = vmatpush1.msra.mxu0 %v1212
      %1261 = vmatprep.subr.mxu0 0.0
      %1262 = vmatpush1.msra.mxu0 %v1214
      %1263 = vmatprep.subr.mxu0 0.0
      %1264 = vmatpush1.msra.mxu0 %v1216
      %1265 = vmatprep.subr.mxu0 0.0
      %1266 = vmatpush1.msra.mxu0 %v1218
      %1267 = vmatprep.subr.mxu0 0.0
      %1268 = vmatpush1.msra.mxu0 %v1220
      %1269 = vmatprep.subr.mxu0 0.0
      %1270 = vmatpush1.msra.mxu0 0.0
      %1271 = vmatprep.subr.mxu0 0.0
      %1272 = vmatpush1.msra.mxu0 0.0
      %1273 = vmatprep.subr.mxu0 0.0
      %1274 = vmatpush1.msra.mxu0 0.0
      %1275 = vmatprep.subr.mxu0 0.0
      %1276 = vmatpush1.msra.mxu0 0.0
      %1277 = vmatprep.subr.mxu0 0.0
      %1278 = vmatpush1.msra.mxu0 0.0
      %1279 = vmatprep.subr.mxu0 0.0
      %1280 = vmatpush1.msra.mxu0 0.0
      %1281 = vmatprep.subr.mxu0 0.0
      %1282 = vmatpush1.msra.mxu0 0.0
      %1283 = vmatprep.subr.mxu0 0.0
      %1284 = vmatpush1.msra.mxu0 0.0
      %1285 = vmatprep.subr.mxu0 0.0
      %1286 = vmatpush1.msra.mxu0 0.0
      %1287 = vmatprep.subr.mxu0 0.0
      %1288 = vmatpush1.msra.mxu0 0.0
      %1289 = vmatprep.subr.mxu0 0.0
      %1290 = vmatpush1.msra.mxu0 0.0
      %1291 = vmatprep.subr.mxu0 0.0
      %1292 = vmatpush1.msra.mxu0 0.0
      %1293 = vmatprep.subr.mxu0 0.0
      %1294 = vmatpush1.msra.mxu0 0.0
      %1295 = vmatprep.subr.mxu0 0.0
      %1296 = vmatpush1.msra.mxu0 0.0
      %1297 = vmatprep.subr.mxu0 0.0
      %1298 = vmatpush1.msra.mxu0 0.0
      %1299 = vmatprep.subr.mxu0 0.0
      %1300 = vmatpush1.msra.mxu0 0.0
      %1301 = vmatprep.subr.mxu0 0.0
      %1302 = vmatpush1.msra.mxu0 0.0
      %1303 = vmatprep.subr.mxu0 0.0
      %1304 = vmatpush1.msra.mxu0 0.0
      %1305 = vmatprep.subr.mxu0 0.0
      %1306 = vmatpush1.msra.mxu0 0.0
      %1307 = vmatprep.subr.mxu0 0.0
      %1308 = vmatpush1.msra.mxu0 0.0
      %1309 = vmatprep.subr.mxu0 0.0
      %1310 = vmatpush1.msra.mxu0 0.0
      %1311 = vmatprep.subr.mxu0 0.0
      %1312 = vmatpush1.msra.mxu0 0.0
      %1313 = vmatprep.subr.mxu0 0.0
      %1314 = vmatpush1.msra.mxu0 0.0
      %1315 = vmatprep.subr.mxu0 0.0
      %1316 = vmatpush1.msra.mxu0 0.0
      %1317 = vmatprep.mubr.f32.mxu0 0.0
      %1318 = vmatmul.mubr.f32.gmra.mrb[0].mxu0 %v1230
      %v1319 = vpop.f32.mrb[0].mxu0
      %v1320 = vadd.f32 0.0, %v1319
      %v1321 = vpop.f32.mrb[0].mxu0
      %1322 = vmatprep.mubr.f32.mxu0 0.0
      %1323 = vmatmul.mubr.f32.gmra.mrb[0].mxu0 %v1233
      %v1324 = vpop.f32.mrb[0].mxu0
      %v1325 = vadd.f32 0.0, %v1324
      %v1326 = vpop.f32.mrb[0].mxu0
      %1327 = vmatprep.mubr.f32.mxu0 0.0
      %1328 = vmatmul.mubr.f32.gmra.mrb[0].mxu0 %v1236
      %v1329 = vpop.f32.mrb[0].mxu0
      %v1330 = vadd.f32 0.0, %v1329
      %v1331 = vpop.f32.mrb[0].mxu0
      %1332 = vmatprep.mubr.f32.mxu0 0.0
      %1333 = vmatmul.mubr.f32.gmra.mrb[0].mxu0 %v1239
      %v1334 = vpop.f32.mrb[0].mxu0
      %v1335 = vadd.f32 0.0, %v1334
      %v1336 = vpop.f32.mrb[0].mxu0
      %1337 = vmatprep.mubr.f32.mxu0 0.0
      %1338 = vmatmul.mubr.f32.gmra.mrb[0].mxu0 %v1242
      %v1339 = vpop.f32.mrb[0].mxu0
      %v1340 = vadd.f32 0.0, %v1339
      %v1341 = vpop.f32.mrb[0].mxu0
      %1342 = vmatprep.mubr.f32.mxu0 0.0
      %1343 = vmatmul.mubr.f32.gmra.mrb[0].mxu0 %v1245
      %v1344 = vpop.f32.mrb[0].mxu0
      %v1345 = vadd.f32 0.0, %v1344
      %v1346 = vpop.f32.mrb[0].mxu0
      %1347 = vmatprep.mubr.f32.mxu0 0.0
      %1348 = vmatmul.mubr.f32.gmra.mrb[0].mxu0 %v1248
      %v1349 = vpop.f32.mrb[0].mxu0
      %v1350 = vadd.f32 0.0, %v1349
      %v1351 = vpop.f32.mrb[0].mxu0
      %1352 = vmatprep.mubr.f32.mxu0 0.0
      %1353 = vmatmul.mubr.f32.gmra.mrb[0].mxu0 %v1251
      %v1354 = vpop.f32.mrb[0].mxu0
      %v1355 = vadd.f32 0.0, %v1354
      %v1356 = vpop.f32.mrb[0].mxu0
      %1357 = vdwg.mxu0
      %1358 = vrot.lane.b32.xlu0 %v954, 120
      %v1359 = vpop.permute.xlu0 %1358
      %1360 = vrot.lane.b32.xlu0 %v955, 120
      %v1361 = vpop.permute.xlu0 %1360
      %1362 = vrot.lane.b32.xlu0 %v956, 120
      %v1363 = vpop.permute.xlu0 %1362
      %1364 = vrot.lane.b32.xlu0 %v957, 120
      %v1365 = vpop.permute.xlu0 %1364
      %1366 = vrot.lane.b32.xlu0 %v958, 120
      %v1367 = vpop.permute.xlu0 %1366
      %1368 = vrot.lane.b32.xlu0 %v959, 120
      %v1369 = vpop.permute.xlu0 %1368
      %1370 = vrot.lane.b32.xlu0 %v960, 120
      %v1371 = vpop.permute.xlu0 %1370
      %1372 = vrot.lane.b32.xlu0 %v961, 120
      %v1373 = vpop.permute.xlu0 %1372
      %1374 = vrot.lane.b32.xlu0 %v916, 120
      %v1375 = vpop.permute.xlu0 %1374
      %1376 = vrot.lane.b32.xlu0 %v921, 120
      %v1377 = vpop.permute.xlu0 %1376
      %1378 = vrot.lane.b32.xlu0 %v926, 120
      %v1379 = vpop.permute.xlu0 %1378
      %1380 = vrot.lane.b32.xlu0 %v931, 120
      %v1381 = vpop.permute.xlu0 %1380
      %1382 = vrot.lane.b32.xlu0 %v936, 120
      %v1383 = vpop.permute.xlu0 %1382
      %1384 = vrot.lane.b32.xlu0 %v941, 120
      %v1385 = vpop.permute.xlu0 %1384
      %1386 = vrot.lane.b32.xlu0 %v946, 120
      %v1387 = vpop.permute.xlu0 %1386
      %1388 = vrot.lane.b32.xlu0 %v951, 120
      %v1389 = vpop.permute.xlu0 %1388
      %v1390 = vsel %vm962, %v1359, 0
      %v1392 = vsel %vm962, %v1361, 0
      %v1394 = vsel %vm962, %v1363, 0
      %v1396 = vsel %vm962, %v1365, 0
      %v1398 = vsel %vm962, %v1367, 0
      %v1400 = vsel %vm962, %v1369, 0
      %v1402 = vsel %vm962, %v1371, 0
      %v1404 = vsel %vm962, %v1373, 0
      %v1406 = vsel %vm962, %v1375, 0
      %v1408 = vsel %vm962, %v1377, 0
      %v1410 = vsel %vm962, %v1379, 0
      %v1412 = vsel %vm962, %v1381, 0
      %v1414 = vsel %vm962, %v1383, 0
      %v1416 = vsel %vm962, %v1385, 0
      %v1418 = vsel %vm962, %v1387, 0
      %v1420 = vsel %vm962, %v1389, 0
      %1422 = vmatprep.subr.mxu0 0.0
      %1423 = vmatpush1.xpose.msra.mxu0 %v1406
      %1424 = vmatprep.subr.mxu0 0.0
      %1425 = vmatpush1.xpose.msra.mxu0 %v1408
      %1426 = vmatprep.subr.mxu0 0.0
      %1427 = vmatpush1.xpose.msra.mxu0 %v1410
      %1428 = vmatprep.subr.mxu0 0.0
      %1429 = vmatpush1.xpose.msra.mxu0 %v1412
      %1430 = vmatprep.subr.mxu0 0.0
      %1431 = vmatpush1.xpose.msra.mxu0 %v1414
      %1432 = vmatprep.subr.mxu0 0.0
      %1433 = vmatpush1.xpose.msra.mxu0 %v1416
      %1434 = vmatprep.subr.mxu0 0.0
      %1435 = vmatpush1.xpose.msra.mxu0 %v1418
      %1436 = vmatprep.subr.mxu0 0.0
      %1437 = vmatpush1.xpose.msra.mxu0 %v1420
      %1438 = vmatprep.subr.mxu0 0.0
      %1439 = vmatpush1.xpose.msra.mxu0 0.0
      %1440 = vmatprep.subr.mxu0 0.0
      %1441 = vmatpush1.xpose.msra.mxu0 0.0
      %1442 = vmatprep.subr.mxu0 0.0
      %1443 = vmatpush1.xpose.msra.mxu0 0.0
      %1444 = vmatprep.subr.mxu0 0.0
      %1445 = vmatpush1.xpose.msra.mxu0 0.0
      %1446 = vmatprep.subr.mxu0 0.0
      %1447 = vmatpush1.xpose.msra.mxu0 0.0
      %1448 = vmatprep.subr.mxu0 0.0
      %1449 = vmatpush1.xpose.msra.mxu0 0.0
      %1450 = vmatprep.subr.mxu0 0.0
      %1451 = vmatpush1.xpose.msra.mxu0 0.0
      %1452 = vmatprep.subr.mxu0 0.0
      %1453 = vmatpush1.xpose.msra.mxu0 0.0
      %1454 = vmatprep.subr.mxu0 0.0
      %1455 = vmatpush1.xpose.msra.mxu0 0.0
      %1456 = vmatprep.subr.mxu0 0.0
      %1457 = vmatpush1.xpose.msra.mxu0 0.0
      %1458 = vmatprep.subr.mxu0 0.0
      %1459 = vmatpush1.xpose.msra.mxu0 0.0
      %1460 = vmatprep.subr.mxu0 0.0
      %1461 = vmatpush1.xpose.msra.mxu0 0.0
      %1462 = vmatprep.subr.mxu0 0.0
      %1463 = vmatpush1.xpose.msra.mxu0 0.0
      %1464 = vmatprep.subr.mxu0 0.0
      %1465 = vmatpush1.xpose.msra.mxu0 0.0
      %1466 = vmatprep.subr.mxu0 0.0
      %1467 = vmatpush1.xpose.msra.mxu0 0.0
      %1468 = vmatprep.subr.mxu0 0.0
      %1469 = vmatpush1.xpose.msra.mxu0 0.0
      %1470 = vmatprep.subr.mxu0 0.0
      %1471 = vmatpush1.xpose.msra.mxu0 0.0
      %1472 = vmatprep.subr.mxu0 0.0
      %1473 = vmatpush1.xpose.msra.mxu0 0.0
      %1474 = vmatprep.subr.mxu0 0.0
      %1475 = vmatpush1.xpose.msra.mxu0 0.0
      %1476 = vmatprep.subr.mxu0 0.0
      %1477 = vmatpush1.xpose.msra.mxu0 0.0
      %1478 = vmatprep.subr.mxu0 0.0
      %1479 = vmatpush1.xpose.msra.mxu0 0.0
      %1480 = vmatprep.subr.mxu0 0.0
      %1481 = vmatpush1.xpose.msra.mxu0 0.0
      %1482 = vmatprep.subr.mxu0 0.0
      %1483 = vmatpush1.xpose.msra.mxu0 0.0
      %1484 = vmatprep.subr.mxu0 0.0
      %1485 = vmatpush1.xpose.msra.mxu0 0.0
      %1486 = vmatprep.mubr.f32.mxu0 0.0
      %1487 = vmatmul.mubr.f32.gmra.mrb[0].mxu0 %v1390
      %v1488 = vpop.f32.mrb[0].mxu0
      %v1489 = vadd.f32 0.0, %v1488
      %v1490 = vpop.f32.mrb[0].mxu0
      %1491 = vmatprep.mubr.f32.mxu0 0.0
      %1492 = vmatmul.mubr.f32.gmra.mrb[0].mxu0 %v1392
      %v1493 = vpop.f32.mrb[0].mxu0
      %v1494 = vadd.f32 0.0, %v1493
      %v1495 = vpop.f32.mrb[0].mxu0
      %1496 = vmatprep.mubr.f32.mxu0 0.0
      %1497 = vmatmul.mubr.f32.gmra.mrb[0].mxu0 %v1394
      %v1498 = vpop.f32.mrb[0].mxu0
      %v1499 = vadd.f32 0.0, %v1498
      %v1500 = vpop.f32.mrb[0].mxu0
      %1501 = vmatprep.mubr.f32.mxu0 0.0
      %1502 = vmatmul.mubr.f32.gmra.mrb[0].mxu0 %v1396
      %v1503 = vpop.f32.mrb[0].mxu0
      %v1504 = vadd.f32 0.0, %v1503
      %v1505 = vpop.f32.mrb[0].mxu0
      %1506 = vmatprep.mubr.f32.mxu0 0.0
      %1507 = vmatmul.mubr.f32.gmra.mrb[0].mxu0 %v1398
      %v1508 = vpop.f32.mrb[0].mxu0
      %v1509 = vadd.f32 0.0, %v1508
      %v1510 = vpop.f32.mrb[0].mxu0
      %1511 = vmatprep.mubr.f32.mxu0 0.0
      %1512 = vmatmul.mubr.f32.gmra.mrb[0].mxu0 %v1400
      %v1513 = vpop.f32.mrb[0].mxu0
      %v1514 = vadd.f32 0.0, %v1513
      %v1515 = vpop.f32.mrb[0].mxu0
      %1516 = vmatprep.mubr.f32.mxu0 0.0
      %1517 = vmatmul.mubr.f32.gmra.mrb[0].mxu0 %v1402
      %v1518 = vpop.f32.mrb[0].mxu0
      %v1519 = vadd.f32 0.0, %v1518
      %v1520 = vpop.f32.mrb[0].mxu0
      %1521 = vmatprep.mubr.f32.mxu0 0.0
      %1522 = vmatmul.mubr.f32.gmra.mrb[0].mxu0 %v1404
      %v1523 = vpop.f32.mrb[0].mxu0
      %v1524 = vadd.f32 0.0, %v1523
      %v1525 = vpop.f32.mrb[0].mxu0
      %1526 = vdwg.mxu0
      %v1527 = vsel %vm1116, %v1489, -inf
      %1528 = vmax.xlane.f32.xlu0 %v1527
      %v1529 = vpop.xlane.xlu0 %1528
      %v1530 = vsel %vm1116, %v1494, -inf
      %1531 = vmax.xlane.f32.xlu0 %v1530
      %v1532 = vpop.xlane.xlu0 %1531
      %v1533 = vsel %vm1116, %v1499, -inf
      %1534 = vmax.xlane.f32.xlu0 %v1533
      %v1535 = vpop.xlane.xlu0 %1534
      %v1536 = vsel %vm1116, %v1504, -inf
      %1537 = vmax.xlane.f32.xlu0 %v1536
      %v1538 = vpop.xlane.xlu0 %1537
      %v1539 = vsel %vm1116, %v1509, -inf
      %1540 = vmax.xlane.f32.xlu0 %v1539
      %v1541 = vpop.xlane.xlu0 %1540
      %v1542 = vsel %vm1116, %v1514, -inf
      %1543 = vmax.xlane.f32.xlu0 %v1542
      %v1544 = vpop.xlane.xlu0 %1543
      %v1545 = vsel %vm1116, %v1519, -inf
      %1546 = vmax.xlane.f32.xlu0 %v1545
      %v1547 = vpop.xlane.xlu0 %1546
      %v1548 = vsel %vm1116, %v1524, -inf
      %1549 = vmax.xlane.f32.xlu0 %v1548
      %v1550 = vpop.xlane.xlu0 %1549
      %v1551 = vsub.f32 %v1489, %v1529
      %v1552 = vsub.f32 %v1494, %v1532
      %v1553 = vsub.f32 %v1499, %v1535
      %v1554 = vsub.f32 %v1504, %v1538
      %v1555 = vsub.f32 %v1509, %v1541
      %v1556 = vsub.f32 %v1514, %v1544
      %v1557 = vsub.f32 %v1519, %v1547
      %v1558 = vsub.f32 %v1524, %v1550
      %v1559 = vmul.f32 %v1551, 1.442695
      %v1560 = vpow.pop %v1559
      %v1561 = vmul.f32 %v1552, 1.442695
      %v1562 = vpow.pop %v1561
      %v1563 = vmul.f32 %v1553, 1.442695
      %v1564 = vpow.pop %v1563
      %v1565 = vmul.f32 %v1554, 1.442695
      %v1566 = vpow.pop %v1565
      %v1567 = vmul.f32 %v1555, 1.442695
      %v1568 = vpow.pop %v1567
      %v1569 = vmul.f32 %v1556, 1.442695
      %v1570 = vpow.pop %v1569
      %v1571 = vmul.f32 %v1557, 1.442695
      %v1572 = vpow.pop %v1571
      %v1573 = vmul.f32 %v1558, 1.442695
      %v1574 = vpow.pop %v1573
      %v1575 = vsel %vm1116, %v1560, 0.0
      %1576 = vadd.xlane.f32.xlu0 %v1575
      %v1577 = vpop.xlane.xlu0 %1576
      %v1578 = vsel %vm1116, %v1562, 0.0
      %1579 = vadd.xlane.f32.xlu0 %v1578
      %v1580 = vpop.xlane.xlu0 %1579
      %v1581 = vsel %vm1116, %v1564, 0.0
      %1582 = vadd.xlane.f32.xlu0 %v1581
      %v1583 = vpop.xlane.xlu0 %1582
      %v1584 = vsel %vm1116, %v1566, 0.0
      %1585 = vadd.xlane.f32.xlu0 %v1584
      %v1586 = vpop.xlane.xlu0 %1585
      %v1587 = vsel %vm1116, %v1568, 0.0
      %1588 = vadd.xlane.f32.xlu0 %v1587
      %v1589 = vpop.xlane.xlu0 %1588
      %v1590 = vsel %vm1116, %v1570, 0.0
      %1591 = vadd.xlane.f32.xlu0 %v1590
      %v1592 = vpop.xlane.xlu0 %1591
      %v1593 = vsel %vm1116, %v1572, 0.0
      %1594 = vadd.xlane.f32.xlu0 %v1593
      %v1595 = vpop.xlane.xlu0 %1594
      %v1596 = vsel %vm1116, %v1574, 0.0
      %1597 = vadd.xlane.f32.xlu0 %v1596
      %v1598 = vpop.xlane.xlu0 %1597
      %v1599 = vrcp.pop %v1577
      %v1600 = vrcp.pop %v1580
      %v1601 = vrcp.pop %v1583
      %v1602 = vrcp.pop %v1586
      %v1603 = vrcp.pop %v1589
      %v1604 = vrcp.pop %v1592
      %v1605 = vrcp.pop %v1595
      %v1606 = vrcp.pop %v1598
      %v1607 = vmul.f32 %v1560, %v1599
      %v1608 = vmul.f32 %v1562, %v1600
      %v1609 = vmul.f32 %v1564, %v1601
      %v1610 = vmul.f32 %v1566, %v1602
      %v1611 = vmul.f32 %v1568, %v1603
      %v1612 = vmul.f32 %v1570, %v1604
      %v1613 = vmul.f32 %v1572, %v1605
      %v1614 = vmul.f32 %v1574, %v1606
      %1615 = vrot.lane.b32.xlu0 %v916, 88
      %v1616 = vpop.permute.xlu0 %1615
      %1617 = vrot.lane.b32.xlu0 %v921, 88
      %v1618 = vpop.permute.xlu0 %1617
      %1619 = vrot.lane.b32.xlu0 %v926, 88
      %v1620 = vpop.permute.xlu0 %1619
      %1621 = vrot.lane.b32.xlu0 %v931, 88
      %v1622 = vpop.permute.xlu0 %1621
      %1623 = vrot.lane.b32.xlu0 %v936, 88
      %v1624 = vpop.permute.xlu0 %1623
      %1625 = vrot.lane.b32.xlu0 %v941, 88
      %v1626 = vpop.permute.xlu0 %1625
      %1627 = vrot.lane.b32.xlu0 %v946, 88
      %v1628 = vpop.permute.xlu0 %1627
      %1629 = vrot.lane.b32.xlu0 %v951, 88
      %v1630 = vpop.permute.xlu0 %1629
      %v1640 = vsel %vm1116, %v1607, 0
      %v1643 = vsel %vm1116, %v1608, 0
      %v1646 = vsel %vm1116, %v1609, 0
      %v1649 = vsel %vm1116, %v1610, 0
      %v1652 = vsel %vm1116, %v1611, 0
      %v1655 = vsel %vm1116, %v1612, 0
      %v1658 = vsel %vm1116, %v1613, 0
      %v1661 = vsel %vm1116, %v1614, 0
      %1663 = vmatprep.subr.mxu0 0.0
      %1664 = vmatpush1.msra.mxu0 %v1616
      %1665 = vmatprep.subr.mxu0 0.0
      %1666 = vmatpush1.msra.mxu0 %v1618
      %1667 = vmatprep.subr.mxu0 0.0
      %1668 = vmatpush1.msra.mxu0 %v1620
      %1669 = vmatprep.subr.mxu0 0.0
      %1670 = vmatpush1.msra.mxu0 %v1622
      %1671 = vmatprep.subr.mxu0 0.0
      %1672 = vmatpush1.msra.mxu0 %v1624
      %1673 = vmatprep.subr.mxu0 0.0
      %1674 = vmatpush1.msra.mxu0 %v1626
      %1675 = vmatprep.subr.mxu0 0.0
      %1676 = vmatpush1.msra.mxu0 %v1628
      %1677 = vmatprep.subr.mxu0 0.0
      %1678 = vmatpush1.msra.mxu0 %v1630
      %1679 = vmatprep.subr.mxu0 0.0
      %1680 = vmatpush1.msra.mxu0 0.0
      %1681 = vmatprep.subr.mxu0 0.0
      %1682 = vmatpush1.msra.mxu0 0.0
      %1683 = vmatprep.subr.mxu0 0.0
      %1684 = vmatpush1.msra.mxu0 0.0
      %1685 = vmatprep.subr.mxu0 0.0
      %1686 = vmatpush1.msra.mxu0 0.0
      %1687 = vmatprep.subr.mxu0 0.0
      %1688 = vmatpush1.msra.mxu0 0.0
      %1689 = vmatprep.subr.mxu0 0.0
      %1690 = vmatpush1.msra.mxu0 0.0
      %1691 = vmatprep.subr.mxu0 0.0
      %1692 = vmatpush1.msra.mxu0 0.0
      %1693 = vmatprep.subr.mxu0 0.0
      %1694 = vmatpush1.msra.mxu0 0.0
      %1695 = vmatprep.subr.mxu0 0.0
      %1696 = vmatpush1.msra.mxu0 0.0
      %1697 = vmatprep.subr.mxu0 0.0
      %1698 = vmatpush1.msra.mxu0 0.0
      %1699 = vmatprep.subr.mxu0 0.0
      %1700 = vmatpush1.msra.mxu0 0.0
      %1701 = vmatprep.subr.mxu0 0.0
      %1702 = vmatpush1.msra.mxu0 0.0
      %1703 = vmatprep.subr.mxu0 0.0
      %1704 = vmatpush1.msra.mxu0 0.0
      %1705 = vmatprep.subr.mxu0 0.0
      %1706 = vmatpush1.msra.mxu0 0.0
      %1707 = vmatprep.subr.mxu0 0.0
      %1708 = vmatpush1.msra.mxu0 0.0
      %1709 = vmatprep.subr.mxu0 0.0
      %1710 = vmatpush1.msra.mxu0 0.0
      %1711 = vmatprep.subr.mxu0 0.0
      %1712 = vmatpush1.msra.mxu0 0.0
      %1713 = vmatprep.subr.mxu0 0.0
      %1714 = vmatpush1.msra.mxu0 0.0
      %1715 = vmatprep.subr.mxu0 0.0
      %1716 = vmatpush1.msra.mxu0 0.0
      %1717 = vmatprep.subr.mxu0 0.0
      %1718 = vmatpush1.msra.mxu0 0.0
      %1719 = vmatprep.subr.mxu0 0.0
      %1720 = vmatpush1.msra.mxu0 0.0
      %1721 = vmatprep.subr.mxu0 0.0
      %1722 = vmatpush1.msra.mxu0 0.0
      %1723 = vmatprep.subr.mxu0 0.0
      %1724 = vmatpush1.msra.mxu0 0.0
      %1725 = vmatprep.subr.mxu0 0.0
      %1726 = vmatpush1.msra.mxu0 0.0
      %1727 = vmatprep.mubr.f32.mxu0 0.0
      %1728 = vmatmul.mubr.f32.gmra.mrb[0].mxu0 %v1640
      %v1729 = vpop.f32.mrb[0].mxu0
      %v1730 = vadd.f32 0.0, %v1729
      %v1731 = vpop.f32.mrb[0].mxu0
      %1732 = vmatprep.mubr.f32.mxu0 0.0
      %1733 = vmatmul.mubr.f32.gmra.mrb[0].mxu0 %v1643
      %v1734 = vpop.f32.mrb[0].mxu0
      %v1735 = vadd.f32 0.0, %v1734
      %v1736 = vpop.f32.mrb[0].mxu0
      %1737 = vmatprep.mubr.f32.mxu0 0.0
      %1738 = vmatmul.mubr.f32.gmra.mrb[0].mxu0 %v1646
      %v1739 = vpop.f32.mrb[0].mxu0
      %v1740 = vadd.f32 0.0, %v1739
      %v1741 = vpop.f32.mrb[0].mxu0
      %1742 = vmatprep.mubr.f32.mxu0 0.0
      %1743 = vmatmul.mubr.f32.gmra.mrb[0].mxu0 %v1649
      %v1744 = vpop.f32.mrb[0].mxu0
      %v1745 = vadd.f32 0.0, %v1744
      %v1746 = vpop.f32.mrb[0].mxu0
      %1747 = vmatprep.mubr.f32.mxu0 0.0
      %1748 = vmatmul.mubr.f32.gmra.mrb[0].mxu0 %v1652
      %v1749 = vpop.f32.mrb[0].mxu0
      %v1750 = vadd.f32 0.0, %v1749
      %v1751 = vpop.f32.mrb[0].mxu0
      %1752 = vmatprep.mubr.f32.mxu0 0.0
      %1753 = vmatmul.mubr.f32.gmra.mrb[0].mxu0 %v1655
      %v1754 = vpop.f32.mrb[0].mxu0
      %v1755 = vadd.f32 0.0, %v1754
      %v1756 = vpop.f32.mrb[0].mxu0
      %1757 = vmatprep.mubr.f32.mxu0 0.0
      %1758 = vmatmul.mubr.f32.gmra.mrb[0].mxu0 %v1658
      %v1759 = vpop.f32.mrb[0].mxu0
      %v1760 = vadd.f32 0.0, %v1759
      %v1761 = vpop.f32.mrb[0].mxu0
      %1762 = vmatprep.mubr.f32.mxu0 0.0
      %1763 = vmatmul.mubr.f32.gmra.mrb[0].mxu0 %v1661
      %v1764 = vpop.f32.mrb[0].mxu0
      %v1765 = vadd.f32 0.0, %v1764
      %v1766 = vpop.f32.mrb[0].mxu0
      %1767 = vdwg.mxu0
      %1768 = vrot.lane.b32.xlu0 %v954, 112
      %v1769 = vpop.permute.xlu0 %1768
      %1770 = vrot.lane.b32.xlu0 %v955, 112
      %v1771 = vpop.permute.xlu0 %1770
      %1772 = vrot.lane.b32.xlu0 %v956, 112
      %v1773 = vpop.permute.xlu0 %1772
      %1774 = vrot.lane.b32.xlu0 %v957, 112
      %v1775 = vpop.permute.xlu0 %1774
      %1776 = vrot.lane.b32.xlu0 %v958, 112
      %v1777 = vpop.permute.xlu0 %1776
      %1778 = vrot.lane.b32.xlu0 %v959, 112
      %v1779 = vpop.permute.xlu0 %1778
      %1780 = vrot.lane.b32.xlu0 %v960, 112
      %v1781 = vpop.permute.xlu0 %1780
      %1782 = vrot.lane.b32.xlu0 %v961, 112
      %v1783 = vpop.permute.xlu0 %1782
      %1784 = vrot.lane.b32.xlu0 %v916, 112
      %v1785 = vpop.permute.xlu0 %1784
      %1786 = vrot.lane.b32.xlu0 %v921, 112
      %v1787 = vpop.permute.xlu0 %1786
      %1788 = vrot.lane.b32.xlu0 %v926, 112
      %v1789 = vpop.permute.xlu0 %1788
      %1790 = vrot.lane.b32.xlu0 %v931, 112
      %v1791 = vpop.permute.xlu0 %1790
      %1792 = vrot.lane.b32.xlu0 %v936, 112
      %v1793 = vpop.permute.xlu0 %1792
      %1794 = vrot.lane.b32.xlu0 %v941, 112
      %v1795 = vpop.permute.xlu0 %1794
      %1796 = vrot.lane.b32.xlu0 %v946, 112
      %v1797 = vpop.permute.xlu0 %1796
      %1798 = vrot.lane.b32.xlu0 %v951, 112
      %v1799 = vpop.permute.xlu0 %1798
      %v1800 = vsel %vm962, %v1769, 0
      %v1802 = vsel %vm962, %v1771, 0
      %v1804 = vsel %vm962, %v1773, 0
      %v1806 = vsel %vm962, %v1775, 0
      %v1808 = vsel %vm962, %v1777, 0
      %v1810 = vsel %vm962, %v1779, 0
      %v1812 = vsel %vm962, %v1781, 0
      %v1814 = vsel %vm962, %v1783, 0
      %v1816 = vsel %vm962, %v1785, 0
      %v1818 = vsel %vm962, %v1787, 0
      %v1820 = vsel %vm962, %v1789, 0
      %v1822 = vsel %vm962, %v1791, 0
      %v1824 = vsel %vm962, %v1793, 0
      %v1826 = vsel %vm962, %v1795, 0
      %v1828 = vsel %vm962, %v1797, 0
      %v1830 = vsel %vm962, %v1799, 0
      %1832 = vmatprep.subr.mxu0 0.0
      %1833 = vmatpush1.xpose.msra.mxu0 %v1816
      %1834 = vmatprep.subr.mxu0 0.0
      %1835 = vmatpush1.xpose.msra.mxu0 %v1818
      %1836 = vmatprep.subr.mxu0 0.0
      %1837 = vmatpush1.xpose.msra.mxu0 %v1820
      %1838 = vmatprep.subr.mxu0 0.0
      %1839 = vmatpush1.xpose.msra.mxu0 %v1822
      %1840 = vmatprep.subr.mxu0 0.0
      %1841 = vmatpush1.xpose.msra.mxu0 %v1824
      %1842 = vmatprep.subr.mxu0 0.0
      %1843 = vmatpush1.xpose.msra.mxu0 %v1826
      %1844 = vmatprep.subr.mxu0 0.0
      %1845 = vmatpush1.xpose.msra.mxu0 %v1828
      %1846 = vmatprep.subr.mxu0 0.0
      %1847 = vmatpush1.xpose.msra.mxu0 %v1830
      %1848 = vmatprep.subr.mxu0 0.0
      %1849 = vmatpush1.xpose.msra.mxu0 0.0
      %1850 = vmatprep.subr.mxu0 0.0
      %1851 = vmatpush1.xpose.msra.mxu0 0.0
      %1852 = vmatprep.subr.mxu0 0.0
      %1853 = vmatpush1.xpose.msra.mxu0 0.0
      %1854 = vmatprep.subr.mxu0 0.0
      %1855 = vmatpush1.xpose.msra.mxu0 0.0
      %1856 = vmatprep.subr.mxu0 0.0
      %1857 = vmatpush1.xpose.msra.mxu0 0.0
      %1858 = vmatprep.subr.mxu0 0.0
      %1859 = vmatpush1.xpose.msra.mxu0 0.0
      %1860 = vmatprep.subr.mxu0 0.0
      %1861 = vmatpush1.xpose.msra.mxu0 0.0
      %1862 = vmatprep.subr.mxu0 0.0
      %1863 = vmatpush1.xpose.msra.mxu0 0.0
      %1864 = vmatprep.subr.mxu0 0.0
      %1865 = vmatpush1.xpose.msra.mxu0 0.0
      %1866 = vmatprep.subr.mxu0 0.0
      %1867 = vmatpush1.xpose.msra.mxu0 0.0
      %1868 = vmatprep.subr.mxu0 0.0
      %1869 = vmatpush1.xpose.msra.mxu0 0.0
      %1870 = vmatprep.subr.mxu0 0.0
      %1871 = vmatpush1.xpose.msra.mxu0 0.0
      %1872 = vmatprep.subr.mxu0 0.0
      %1873 = vmatpush1.xpose.msra.mxu0 0.0
      %1874 = vmatprep.subr.mxu0 0.0
      %1875 = vmatpush1.xpose.msra.mxu0 0.0
      %1876 = vmatprep.subr.mxu0 0.0
      %1877 = vmatpush1.xpose.msra.mxu0 0.0
      %1878 = vmatprep.subr.mxu0 0.0
      %1879 = vmatpush1.xpose.msra.mxu0 0.0
      %1880 = vmatprep.subr.mxu0 0.0
      %1881 = vmatpush1.xpose.msra.mxu0 0.0
      %1882 = vmatprep.subr.mxu0 0.0
      %1883 = vmatpush1.xpose.msra.mxu0 0.0
      %1884 = vmatprep.subr.mxu0 0.0
      %1885 = vmatpush1.xpose.msra.mxu0 0.0
      %1886 = vmatprep.subr.mxu0 0.0
      %1887 = vmatpush1.xpose.msra.mxu0 0.0
      %1888 = vmatprep.subr.mxu0 0.0
      %1889 = vmatpush1.xpose.msra.mxu0 0.0
      %1890 = vmatprep.subr.mxu0 0.0
      %1891 = vmatpush1.xpose.msra.mxu0 0.0
      %1892 = vmatprep.subr.mxu0 0.0
      %1893 = vmatpush1.xpose.msra.mxu0 0.0
      %1894 = vmatprep.subr.mxu0 0.0
      %1895 = vmatpush1.xpose.msra.mxu0 0.0
      %1896 = vmatprep.mubr.f32.mxu0 0.0
      %1897 = vmatmul.mubr.f32.gmra.mrb[0].mxu0 %v1800
      %v1898 = vpop.f32.mrb[0].mxu0
      %v1899 = vadd.f32 0.0, %v1898
      %v1900 = vpop.f32.mrb[0].mxu0
      %1901 = vmatprep.mubr.f32.mxu0 0.0
      %1902 = vmatmul.mubr.f32.gmra.mrb[0].mxu0 %v1802
      %v1903 = vpop.f32.mrb[0].mxu0
      %v1904 = vadd.f32 0.0, %v1903
      %v1905 = vpop.f32.mrb[0].mxu0
      %1906 = vmatprep.mubr.f32.mxu0 0.0
      %1907 = vmatmul.mubr.f32.gmra.mrb[0].mxu0 %v1804
      %v1908 = vpop.f32.mrb[0].mxu0
      %v1909 = vadd.f32 0.0, %v1908
      %v1910 = vpop.f32.mrb[0].mxu0
      %1911 = vmatprep.mubr.f32.mxu0 0.0
      %1912 = vmatmul.mubr.f32.gmra.mrb[0].mxu0 %v1806
      %v1913 = vpop.f32.mrb[0].mxu0
      %v1914 = vadd.f32 0.0, %v1913
      %v1915 = vpop.f32.mrb[0].mxu0
      %1916 = vmatprep.mubr.f32.mxu0 0.0
      %1917 = vmatmul.mubr.f32.gmra.mrb[0].mxu0 %v1808
      %v1918 = vpop.f32.mrb[0].mxu0
      %v1919 = vadd.f32 0.0, %v1918
      %v1920 = vpop.f32.mrb[0].mxu0
      %1921 = vmatprep.mubr.f32.mxu0 0.0
      %1922 = vmatmul.mubr.f32.gmra.mrb[0].mxu0 %v1810
      %v1923 = vpop.f32.mrb[0].mxu0
      %v1924 = vadd.f32 0.0, %v1923
      %v1925 = vpop.f32.mrb[0].mxu0
      %1926 = vmatprep.mubr.f32.mxu0 0.0
      %1927 = vmatmul.mubr.f32.gmra.mrb[0].mxu0 %v1812
      %v1928 = vpop.f32.mrb[0].mxu0
      %v1929 = vadd.f32 0.0, %v1928
      %v1930 = vpop.f32.mrb[0].mxu0
      %1931 = vmatprep.mubr.f32.mxu0 0.0
      %1932 = vmatmul.mubr.f32.gmra.mrb[0].mxu0 %v1814
      %v1933 = vpop.f32.mrb[0].mxu0
      %v1934 = vadd.f32 0.0, %v1933
      %v1935 = vpop.f32.mrb[0].mxu0
      %1936 = vdwg.mxu0
      %v1937 = vsel %vm1116, %v1899, -inf
      %1938 = vmax.xlane.f32.xlu0 %v1937
      %v1939 = vpop.xlane.xlu0 %1938
      %v1940 = vsel %vm1116, %v1904, -inf
      %1941 = vmax.xlane.f32.xlu0 %v1940
      %v1942 = vpop.xlane.xlu0 %1941
      %v1943 = vsel %vm1116, %v1909, -inf
      %1944 = vmax.xlane.f32.xlu0 %v1943
      %v1945 = vpop.xlane.xlu0 %1944
      %v1946 = vsel %vm1116, %v1914, -inf
      %1947 = vmax.xlane.f32.xlu0 %v1946
      %v1948 = vpop.xlane.xlu0 %1947
      %v1949 = vsel %vm1116, %v1919, -inf
      %1950 = vmax.xlane.f32.xlu0 %v1949
      %v1951 = vpop.xlane.xlu0 %1950
      %v1952 = vsel %vm1116, %v1924, -inf
      %1953 = vmax.xlane.f32.xlu0 %v1952
      %v1954 = vpop.xlane.xlu0 %1953
      %v1955 = vsel %vm1116, %v1929, -inf
      %1956 = vmax.xlane.f32.xlu0 %v1955
      %v1957 = vpop.xlane.xlu0 %1956
      %v1958 = vsel %vm1116, %v1934, -inf
      %1959 = vmax.xlane.f32.xlu0 %v1958
      %v1960 = vpop.xlane.xlu0 %1959
      %v1961 = vsub.f32 %v1899, %v1939
      %v1962 = vsub.f32 %v1904, %v1942
      %v1963 = vsub.f32 %v1909, %v1945
      %v1964 = vsub.f32 %v1914, %v1948
      %v1965 = vsub.f32 %v1919, %v1951
      %v1966 = vsub.f32 %v1924, %v1954
      %v1967 = vsub.f32 %v1929, %v1957
      %v1968 = vsub.f32 %v1934, %v1960
      %v1969 = vmul.f32 %v1961, 1.442695
      %v1970 = vpow.pop %v1969
      %v1971 = vmul.f32 %v1962, 1.442695
      %v1972 = vpow.pop %v1971
      %v1973 = vmul.f32 %v1963, 1.442695
      %v1974 = vpow.pop %v1973
      %v1975 = vmul.f32 %v1964, 1.442695
      %v1976 = vpow.pop %v1975
      %v1977 = vmul.f32 %v1965, 1.442695
      %v1978 = vpow.pop %v1977
      %v1979 = vmul.f32 %v1966, 1.442695
      %v1980 = vpow.pop %v1979
      %v1981 = vmul.f32 %v1967, 1.442695
      %v1982 = vpow.pop %v1981
      %v1983 = vmul.f32 %v1968, 1.442695
      %v1984 = vpow.pop %v1983
      %v1985 = vsel %vm1116, %v1970, 0.0
      %1986 = vadd.xlane.f32.xlu0 %v1985
      %v1987 = vpop.xlane.xlu0 %1986
      %v1988 = vsel %vm1116, %v1972, 0.0
      %1989 = vadd.xlane.f32.xlu0 %v1988
      %v1990 = vpop.xlane.xlu0 %1989
      %v1991 = vsel %vm1116, %v1974, 0.0
      %1992 = vadd.xlane.f32.xlu0 %v1991
      %v1993 = vpop.xlane.xlu0 %1992
      %v1994 = vsel %vm1116, %v1976, 0.0
      %1995 = vadd.xlane.f32.xlu0 %v1994
      %v1996 = vpop.xlane.xlu0 %1995
      %v1997 = vsel %vm1116, %v1978, 0.0
      %1998 = vadd.xlane.f32.xlu0 %v1997
      %v1999 = vpop.xlane.xlu0 %1998
      %v2000 = vsel %vm1116, %v1980, 0.0
      %2001 = vadd.xlane.f32.xlu0 %v2000
      %v2002 = vpop.xlane.xlu0 %2001
      %v2003 = vsel %vm1116, %v1982, 0.0
      %2004 = vadd.xlane.f32.xlu0 %v2003
      %v2005 = vpop.xlane.xlu0 %2004
      %v2006 = vsel %vm1116, %v1984, 0.0
      %2007 = vadd.xlane.f32.xlu0 %v2006
      %v2008 = vpop.xlane.xlu0 %2007
      %v2009 = vrcp.pop %v1987
      %v2010 = vrcp.pop %v1990
      %v2011 = vrcp.pop %v1993
      %v2012 = vrcp.pop %v1996
      %v2013 = vrcp.pop %v1999
      %v2014 = vrcp.pop %v2002
      %v2015 = vrcp.pop %v2005
      %v2016 = vrcp.pop %v2008
      %v2017 = vmul.f32 %v1970, %v2009
      %v2018 = vmul.f32 %v1972, %v2010
      %v2019 = vmul.f32 %v1974, %v2011
      %v2020 = vmul.f32 %v1976, %v2012
      %v2021 = vmul.f32 %v1978, %v2013
      %v2022 = vmul.f32 %v1980, %v2014
      %v2023 = vmul.f32 %v1982, %v2015
      %v2024 = vmul.f32 %v1984, %v2016
      %2025 = vrot.lane.b32.xlu0 %v916, 80
      %v2026 = vpop.permute.xlu0 %2025
      %2027 = vrot.lane.b32.xlu0 %v921, 80
      %v2028 = vpop.permute.xlu0 %2027
      %2029 = vrot.lane.b32.xlu0 %v926, 80
      %v2030 = vpop.permute.xlu0 %2029
      %2031 = vrot.lane.b32.xlu0 %v931, 80
      %v2032 = vpop.permute.xlu0 %2031
      %2033 = vrot.lane.b32.xlu0 %v936, 80
      %v2034 = vpop.permute.xlu0 %2033
      %2035 = vrot.lane.b32.xlu0 %v941, 80
      %v2036 = vpop.permute.xlu0 %2035
      %2037 = vrot.lane.b32.xlu0 %v946, 80
      %v2038 = vpop.permute.xlu0 %2037
      %2039 = vrot.lane.b32.xlu0 %v951, 80
      %v2040 = vpop.permute.xlu0 %2039
      %v2050 = vsel %vm1116, %v2017, 0
      %v2053 = vsel %vm1116, %v2018, 0
      %v2056 = vsel %vm1116, %v2019, 0
      %v2059 = vsel %vm1116, %v2020, 0
      %v2062 = vsel %vm1116, %v2021, 0
      %v2065 = vsel %vm1116, %v2022, 0
      %v2068 = vsel %vm1116, %v2023, 0
      %v2071 = vsel %vm1116, %v2024, 0
      %2073 = vmatprep.subr.mxu0 0.0
      %2074 = vmatpush1.msra.mxu0 %v2026
      %2075 = vmatprep.subr.mxu0 0.0
      %2076 = vmatpush1.msra.mxu0 %v2028
      %2077 = vmatprep.subr.mxu0 0.0
      %2078 = vmatpush1.msra.mxu0 %v2030
      %2079 = vmatprep.subr.mxu0 0.0
      %2080 = vmatpush1.msra.mxu0 %v2032
      %2081 = vmatprep.subr.mxu0 0.0
      %2082 = vmatpush1.msra.mxu0 %v2034
      %2083 = vmatprep.subr.mxu0 0.0
      %2084 = vmatpush1.msra.mxu0 %v2036
      %2085 = vmatprep.subr.mxu0 0.0
      %2086 = vmatpush1.msra.mxu0 %v2038
      %2087 = vmatprep.subr.mxu0 0.0
      %2088 = vmatpush1.msra.mxu0 %v2040
      %2089 = vmatprep.subr.mxu0 0.0
      %2090 = vmatpush1.msra.mxu0 0.0
      %2091 = vmatprep.subr.mxu0 0.0
      %2092 = vmatpush1.msra.mxu0 0.0
      %2093 = vmatprep.subr.mxu0 0.0
      %2094 = vmatpush1.msra.mxu0 0.0
      %2095 = vmatprep.subr.mxu0 0.0
      %2096 = vmatpush1.msra.mxu0 0.0
      %2097 = vmatprep.subr.mxu0 0.0
      %2098 = vmatpush1.msra.mxu0 0.0
      %2099 = vmatprep.subr.mxu0 0.0
      %2100 = vmatpush1.msra.mxu0 0.0
      %2101 = vmatprep.subr.mxu0 0.0
      %2102 = vmatpush1.msra.mxu0 0.0
      %2103 = vmatprep.subr.mxu0 0.0
      %2104 = vmatpush1.msra.mxu0 0.0
      %2105 = vmatprep.subr.mxu0 0.0
      %2106 = vmatpush1.msra.mxu0 0.0
      %2107 = vmatprep.subr.mxu0 0.0
      %2108 = vmatpush1.msra.mxu0 0.0
      %2109 = vmatprep.subr.mxu0 0.0
      %2110 = vmatpush1.msra.mxu0 0.0
      %2111 = vmatprep.subr.mxu0 0.0
      %2112 = vmatpush1.msra.mxu0 0.0
      %2113 = vmatprep.subr.mxu0 0.0
      %2114 = vmatpush1.msra.mxu0 0.0
      %2115 = vmatprep.subr.mxu0 0.0
      %2116 = vmatpush1.msra.mxu0 0.0
      %2117 = vmatprep.subr.mxu0 0.0
      %2118 = vmatpush1.msra.mxu0 0.0
      %2119 = vmatprep.subr.mxu0 0.0
      %2120 = vmatpush1.msra.mxu0 0.0
      %2121 = vmatprep.subr.mxu0 0.0
      %2122 = vmatpush1.msra.mxu0 0.0
      %2123 = vmatprep.subr.mxu0 0.0
      %2124 = vmatpush1.msra.mxu0 0.0
      %2125 = vmatprep.subr.mxu0 0.0
      %2126 = vmatpush1.msra.mxu0 0.0
      %2127 = vmatprep.subr.mxu0 0.0
      %2128 = vmatpush1.msra.mxu0 0.0
      %2129 = vmatprep.subr.mxu0 0.0
      %2130 = vmatpush1.msra.mxu0 0.0
      %2131 = vmatprep.subr.mxu0 0.0
      %2132 = vmatpush1.msra.mxu0 0.0
      %2133 = vmatprep.subr.mxu0 0.0
      %2134 = vmatpush1.msra.mxu0 0.0
      %2135 = vmatprep.subr.mxu0 0.0
      %2136 = vmatpush1.msra.mxu0 0.0
      %2137 = vmatprep.mubr.f32.mxu0 0.0
      %2138 = vmatmul.mubr.f32.gmra.mrb[0].mxu0 %v2050
      %v2139 = vpop.f32.mrb[0].mxu0
      %v2140 = vadd.f32 0.0, %v2139
      %v2141 = vpop.f32.mrb[0].mxu0
      %2142 = vmatprep.mubr.f32.mxu0 0.0
      %2143 = vmatmul.mubr.f32.gmra.mrb[0].mxu0 %v2053
      %v2144 = vpop.f32.mrb[0].mxu0
      %v2145 = vadd.f32 0.0, %v2144
      %v2146 = vpop.f32.mrb[0].mxu0
      %2147 = vmatprep.mubr.f32.mxu0 0.0
      %2148 = vmatmul.mubr.f32.gmra.mrb[0].mxu0 %v2056
      %v2149 = vpop.f32.mrb[0].mxu0
      %v2150 = vadd.f32 0.0, %v2149
      %v2151 = vpop.f32.mrb[0].mxu0
      %2152 = vmatprep.mubr.f32.mxu0 0.0
      %2153 = vmatmul.mubr.f32.gmra.mrb[0].mxu0 %v2059
      %v2154 = vpop.f32.mrb[0].mxu0
      %v2155 = vadd.f32 0.0, %v2154
      %v2156 = vpop.f32.mrb[0].mxu0
      %2157 = vmatprep.mubr.f32.mxu0 0.0
      %2158 = vmatmul.mubr.f32.gmra.mrb[0].mxu0 %v2062
      %v2159 = vpop.f32.mrb[0].mxu0
      %v2160 = vadd.f32 0.0, %v2159
      %v2161 = vpop.f32.mrb[0].mxu0
      %2162 = vmatprep.mubr.f32.mxu0 0.0
      %2163 = vmatmul.mubr.f32.gmra.mrb[0].mxu0 %v2065
      %v2164 = vpop.f32.mrb[0].mxu0
      %v2165 = vadd.f32 0.0, %v2164
      %v2166 = vpop.f32.mrb[0].mxu0
      %2167 = vmatprep.mubr.f32.mxu0 0.0
      %2168 = vmatmul.mubr.f32.gmra.mrb[0].mxu0 %v2068
      %v2169 = vpop.f32.mrb[0].mxu0
      %v2170 = vadd.f32 0.0, %v2169
      %v2171 = vpop.f32.mrb[0].mxu0
      %2172 = vmatprep.mubr.f32.mxu0 0.0
      %2173 = vmatmul.mubr.f32.gmra.mrb[0].mxu0 %v2071
      %v2174 = vpop.f32.mrb[0].mxu0
      %v2175 = vadd.f32 0.0, %v2174
      %v2176 = vpop.f32.mrb[0].mxu0
      %2177 = vdwg.mxu0
      %2178 = vrot.lane.b32.xlu0 %v954, 104
      %v2179 = vpop.permute.xlu0 %2178
      %2180 = vrot.lane.b32.xlu0 %v955, 104
      %v2181 = vpop.permute.xlu0 %2180
      %2182 = vrot.lane.b32.xlu0 %v956, 104
      %v2183 = vpop.permute.xlu0 %2182
      %2184 = vrot.lane.b32.xlu0 %v957, 104
      %v2185 = vpop.permute.xlu0 %2184
      %2186 = vrot.lane.b32.xlu0 %v958, 104
      %v2187 = vpop.permute.xlu0 %2186
      %2188 = vrot.lane.b32.xlu0 %v959, 104
      %v2189 = vpop.permute.xlu0 %2188
      %2190 = vrot.lane.b32.xlu0 %v960, 104
      %v2191 = vpop.permute.xlu0 %2190
      %2192 = vrot.lane.b32.xlu0 %v961, 104
      %v2193 = vpop.permute.xlu0 %2192
      %2194 = vrot.lane.b32.xlu0 %v916, 104
      %v2195 = vpop.permute.xlu0 %2194
      %2196 = vrot.lane.b32.xlu0 %v921, 104
      %v2197 = vpop.permute.xlu0 %2196
      %2198 = vrot.lane.b32.xlu0 %v926, 104
      %v2199 = vpop.permute.xlu0 %2198
      %2200 = vrot.lane.b32.xlu0 %v931, 104
      %v2201 = vpop.permute.xlu0 %2200
      %2202 = vrot.lane.b32.xlu0 %v936, 104
      %v2203 = vpop.permute.xlu0 %2202
      %2204 = vrot.lane.b32.xlu0 %v941, 104
      %v2205 = vpop.permute.xlu0 %2204
      %2206 = vrot.lane.b32.xlu0 %v946, 104
      %v2207 = vpop.permute.xlu0 %2206
      %2208 = vrot.lane.b32.xlu0 %v951, 104
      %v2209 = vpop.permute.xlu0 %2208
      %v2210 = vsel %vm962, %v2179, 0
      %v2212 = vsel %vm962, %v2181, 0
      %v2214 = vsel %vm962, %v2183, 0
      %v2216 = vsel %vm962, %v2185, 0
      %v2218 = vsel %vm962, %v2187, 0
      %v2220 = vsel %vm962, %v2189, 0
      %v2222 = vsel %vm962, %v2191, 0
      %v2224 = vsel %vm962, %v2193, 0
      %v2226 = vsel %vm962, %v2195, 0
      %v2228 = vsel %vm962, %v2197, 0
      %v2230 = vsel %vm962, %v2199, 0
      %v2232 = vsel %vm962, %v2201, 0
      %v2234 = vsel %vm962, %v2203, 0
      %v2236 = vsel %vm962, %v2205, 0
      %v2238 = vsel %vm962, %v2207, 0
      %v2240 = vsel %vm962, %v2209, 0
      %2242 = vmatprep.subr.mxu0 0.0
      %2243 = vmatpush1.xpose.msra.mxu0 %v2226
      %2244 = vmatprep.subr.mxu0 0.0
      %2245 = vmatpush1.xpose.msra.mxu0 %v2228
      %2246 = vmatprep.subr.mxu0 0.0
      %2247 = vmatpush1.xpose.msra.mxu0 %v2230
      %2248 = vmatprep.subr.mxu0 0.0
      %2249 = vmatpush1.xpose.msra.mxu0 %v2232
      %2250 = vmatprep.subr.mxu0 0.0
      %2251 = vmatpush1.xpose.msra.mxu0 %v2234
      %2252 = vmatprep.subr.mxu0 0.0
      %2253 = vmatpush1.xpose.msra.mxu0 %v2236
      %2254 = vmatprep.subr.mxu0 0.0
      %2255 = vmatpush1.xpose.msra.mxu0 %v2238
      %2256 = vmatprep.subr.mxu0 0.0
      %2257 = vmatpush1.xpose.msra.mxu0 %v2240
      %2258 = vmatprep.subr.mxu0 0.0
      %2259 = vmatpush1.xpose.msra.mxu0 0.0
      %2260 = vmatprep.subr.mxu0 0.0
      %2261 = vmatpush1.xpose.msra.mxu0 0.0
      %2262 = vmatprep.subr.mxu0 0.0
      %2263 = vmatpush1.xpose.msra.mxu0 0.0
      %2264 = vmatprep.subr.mxu0 0.0
      %2265 = vmatpush1.xpose.msra.mxu0 0.0
      %2266 = vmatprep.subr.mxu0 0.0
      %2267 = vmatpush1.xpose.msra.mxu0 0.0
      %2268 = vmatprep.subr.mxu0 0.0
      %2269 = vmatpush1.xpose.msra.mxu0 0.0
      %2270 = vmatprep.subr.mxu0 0.0
      %2271 = vmatpush1.xpose.msra.mxu0 0.0
      %2272 = vmatprep.subr.mxu0 0.0
      %2273 = vmatpush1.xpose.msra.mxu0 0.0
      %2274 = vmatprep.subr.mxu0 0.0
      %2275 = vmatpush1.xpose.msra.mxu0 0.0
      %2276 = vmatprep.subr.mxu0 0.0
      %2277 = vmatpush1.xpose.msra.mxu0 0.0
      %2278 = vmatprep.subr.mxu0 0.0
      %2279 = vmatpush1.xpose.msra.mxu0 0.0
      %2280 = vmatprep.subr.mxu0 0.0
      %2281 = vmatpush1.xpose.msra.mxu0 0.0
      %2282 = vmatprep.subr.mxu0 0.0
      %2283 = vmatpush1.xpose.msra.mxu0 0.0
      %2284 = vmatprep.subr.mxu0 0.0
      %2285 = vmatpush1.xpose.msra.mxu0 0.0
      %2286 = vmatprep.subr.mxu0 0.0
      %2287 = vmatpush1.xpose.msra.mxu0 0.0
      %2288 = vmatprep.subr.mxu0 0.0
      %2289 = vmatpush1.xpose.msra.mxu0 0.0
      %2290 = vmatprep.subr.mxu0 0.0
      %2291 = vmatpush1.xpose.msra.mxu0 0.0
      %2292 = vmatprep.subr.mxu0 0.0
      %2293 = vmatpush1.xpose.msra.mxu0 0.0
      %2294 = vmatprep.subr.mxu0 0.0
      %2295 = vmatpush1.xpose.msra.mxu0 0.0
      %2296 = vmatprep.subr.mxu0 0.0
      %2297 = vmatpush1.xpose.msra.mxu0 0.0
      %2298 = vmatprep.subr.mxu0 0.0
      %2299 = vmatpush1.xpose.msra.mxu0 0.0
      %2300 = vmatprep.subr.mxu0 0.0
      %2301 = vmatpush1.xpose.msra.mxu0 0.0
      %2302 = vmatprep.subr.mxu0 0.0
      %2303 = vmatpush1.xpose.msra.mxu0 0.0
      %2304 = vmatprep.subr.mxu0 0.0
      %2305 = vmatpush1.xpose.msra.mxu0 0.0
      %2306 = vmatprep.mubr.f32.mxu0 0.0
      %2307 = vmatmul.mubr.f32.gmra.mrb[0].mxu0 %v2210
      %v2308 = vpop.f32.mrb[0].mxu0
      %v2309 = vadd.f32 0.0, %v2308
      %v2310 = vpop.f32.mrb[0].mxu0
      %2311 = vmatprep.mubr.f32.mxu0 0.0
      %2312 = vmatmul.mubr.f32.gmra.mrb[0].mxu0 %v2212
      %v2313 = vpop.f32.mrb[0].mxu0
      %v2314 = vadd.f32 0.0, %v2313
      %v2315 = vpop.f32.mrb[0].mxu0
      %2316 = vmatprep.mubr.f32.mxu0 0.0
      %2317 = vmatmul.mubr.f32.gmra.mrb[0].mxu0 %v2214
      %v2318 = vpop.f32.mrb[0].mxu0
      %v2319 = vadd.f32 0.0, %v2318
      %v2320 = vpop.f32.mrb[0].mxu0
      %2321 = vmatprep.mubr.f32.mxu0 0.0
      %2322 = vmatmul.mubr.f32.gmra.mrb[0].mxu0 %v2216
      %v2323 = vpop.f32.mrb[0].mxu0
      %v2324 = vadd.f32 0.0, %v2323
      %v2325 = vpop.f32.mrb[0].mxu0
      %2326 = vmatprep.mubr.f32.mxu0 0.0
      %2327 = vmatmul.mubr.f32.gmra.mrb[0].mxu0 %v2218
      %v2328 = vpop.f32.mrb[0].mxu0
      %v2329 = vadd.f32 0.0, %v2328
      %v2330 = vpop.f32.mrb[0].mxu0
      %2331 = vmatprep.mubr.f32.mxu0 0.0
      %2332 = vmatmul.mubr.f32.gmra.mrb[0].mxu0 %v2220
      %v2333 = vpop.f32.mrb[0].mxu0
      %v2334 = vadd.f32 0.0, %v2333
      %v2335 = vpop.f32.mrb[0].mxu0
      %2336 = vmatprep.mubr.f32.mxu0 0.0
      %2337 = vmatmul.mubr.f32.gmra.mrb[0].mxu0 %v2222
      %v2338 = vpop.f32.mrb[0].mxu0
      %v2339 = vadd.f32 0.0, %v2338
      %v2340 = vpop.f32.mrb[0].mxu0
      %2341 = vmatprep.mubr.f32.mxu0 0.0
      %2342 = vmatmul.mubr.f32.gmra.mrb[0].mxu0 %v2224
      %v2343 = vpop.f32.mrb[0].mxu0
      %v2344 = vadd.f32 0.0, %v2343
      %v2345 = vpop.f32.mrb[0].mxu0
      %2346 = vdwg.mxu0
      %v2347 = vsel %vm1116, %v2309, -inf
      %2348 = vmax.xlane.f32.xlu0 %v2347
      %v2349 = vpop.xlane.xlu0 %2348
      %v2350 = vsel %vm1116, %v2314, -inf
      %2351 = vmax.xlane.f32.xlu0 %v2350
      %v2352 = vpop.xlane.xlu0 %2351
      %v2353 = vsel %vm1116, %v2319, -inf
      %2354 = vmax.xlane.f32.xlu0 %v2353
      %v2355 = vpop.xlane.xlu0 %2354
      %v2356 = vsel %vm1116, %v2324, -inf
      %2357 = vmax.xlane.f32.xlu0 %v2356
      %v2358 = vpop.xlane.xlu0 %2357
      %v2359 = vsel %vm1116, %v2329, -inf
      %2360 = vmax.xlane.f32.xlu0 %v2359
      %v2361 = vpop.xlane.xlu0 %2360
      %v2362 = vsel %vm1116, %v2334, -inf
      %2363 = vmax.xlane.f32.xlu0 %v2362
      %v2364 = vpop.xlane.xlu0 %2363
      %v2365 = vsel %vm1116, %v2339, -inf
      %2366 = vmax.xlane.f32.xlu0 %v2365
      %v2367 = vpop.xlane.xlu0 %2366
      %v2368 = vsel %vm1116, %v2344, -inf
      %2369 = vmax.xlane.f32.xlu0 %v2368
      %v2370 = vpop.xlane.xlu0 %2369
      %v2371 = vsub.f32 %v2309, %v2349
      %v2372 = vsub.f32 %v2314, %v2352
      %v2373 = vsub.f32 %v2319, %v2355
      %v2374 = vsub.f32 %v2324, %v2358
      %v2375 = vsub.f32 %v2329, %v2361
      %v2376 = vsub.f32 %v2334, %v2364
      %v2377 = vsub.f32 %v2339, %v2367
      %v2378 = vsub.f32 %v2344, %v2370
      %v2379 = vmul.f32 %v2371, 1.442695
      %v2380 = vpow.pop %v2379
      %v2381 = vmul.f32 %v2372, 1.442695
      %v2382 = vpow.pop %v2381
      %v2383 = vmul.f32 %v2373, 1.442695
      %v2384 = vpow.pop %v2383
      %v2385 = vmul.f32 %v2374, 1.442695
      %v2386 = vpow.pop %v2385
      %v2387 = vmul.f32 %v2375, 1.442695
      %v2388 = vpow.pop %v2387
      %v2389 = vmul.f32 %v2376, 1.442695
      %v2390 = vpow.pop %v2389
      %v2391 = vmul.f32 %v2377, 1.442695
      %v2392 = vpow.pop %v2391
      %v2393 = vmul.f32 %v2378, 1.442695
      %v2394 = vpow.pop %v2393
      %v2395 = vsel %vm1116, %v2380, 0.0
      %2396 = vadd.xlane.f32.xlu0 %v2395
      %v2397 = vpop.xlane.xlu0 %2396
      %v2398 = vsel %vm1116, %v2382, 0.0
      %2399 = vadd.xlane.f32.xlu0 %v2398
      %v2400 = vpop.xlane.xlu0 %2399
      %v2401 = vsel %vm1116, %v2384, 0.0
      %2402 = vadd.xlane.f32.xlu0 %v2401
      %v2403 = vpop.xlane.xlu0 %2402
      %v2404 = vsel %vm1116, %v2386, 0.0
      %2405 = vadd.xlane.f32.xlu0 %v2404
      %v2406 = vpop.xlane.xlu0 %2405
      %v2407 = vsel %vm1116, %v2388, 0.0
      %2408 = vadd.xlane.f32.xlu0 %v2407
      %v2409 = vpop.xlane.xlu0 %2408
      %v2410 = vsel %vm1116, %v2390, 0.0
      %2411 = vadd.xlane.f32.xlu0 %v2410
      %v2412 = vpop.xlane.xlu0 %2411
      %v2413 = vsel %vm1116, %v2392, 0.0
      %2414 = vadd.xlane.f32.xlu0 %v2413
      %v2415 = vpop.xlane.xlu0 %2414
      %v2416 = vsel %vm1116, %v2394, 0.0
      %2417 = vadd.xlane.f32.xlu0 %v2416
      %v2418 = vpop.xlane.xlu0 %2417
      %v2419 = vrcp.pop %v2397
      %v2420 = vrcp.pop %v2400
      %v2421 = vrcp.pop %v2403
      %v2422 = vrcp.pop %v2406
      %v2423 = vrcp.pop %v2409
      %v2424 = vrcp.pop %v2412
      %v2425 = vrcp.pop %v2415
      %v2426 = vrcp.pop %v2418
      %v2427 = vmul.f32 %v2380, %v2419
      %v2428 = vmul.f32 %v2382, %v2420
      %v2429 = vmul.f32 %v2384, %v2421
      %v2430 = vmul.f32 %v2386, %v2422
      %v2431 = vmul.f32 %v2388, %v2423
      %v2432 = vmul.f32 %v2390, %v2424
      %v2433 = vmul.f32 %v2392, %v2425
      %v2434 = vmul.f32 %v2394, %v2426
      %2435 = vrot.lane.b32.xlu0 %v916, 72
      %v2436 = vpop.permute.xlu0 %2435
      %2437 = vrot.lane.b32.xlu0 %v921, 72
      %v2438 = vpop.permute.xlu0 %2437
      %2439 = vrot.lane.b32.xlu0 %v926, 72
      %v2440 = vpop.permute.xlu0 %2439
      %2441 = vrot.lane.b32.xlu0 %v931, 72
      %v2442 = vpop.permute.xlu0 %2441
      %2443 = vrot.lane.b32.xlu0 %v936, 72
      %v2444 = vpop.permute.xlu0 %2443
      %2445 = vrot.lane.b32.xlu0 %v941, 72
      %v2446 = vpop.permute.xlu0 %2445
      %2447 = vrot.lane.b32.xlu0 %v946, 72
      %v2448 = vpop.permute.xlu0 %2447
      %2449 = vrot.lane.b32.xlu0 %v951, 72
      %v2450 = vpop.permute.xlu0 %2449
      %v2460 = vsel %vm1116, %v2427, 0
      %v2463 = vsel %vm1116, %v2428, 0
      %v2466 = vsel %vm1116, %v2429, 0
      %v2469 = vsel %vm1116, %v2430, 0
      %v2472 = vsel %vm1116, %v2431, 0
      %v2475 = vsel %vm1116, %v2432, 0
      %v2478 = vsel %vm1116, %v2433, 0
      %v2481 = vsel %vm1116, %v2434, 0
      %2483 = vmatprep.subr.mxu0 0.0
      %2484 = vmatpush1.msra.mxu0 %v2436
      %2485 = vmatprep.subr.mxu0 0.0
      %2486 = vmatpush1.msra.mxu0 %v2438
      %2487 = vmatprep.subr.mxu0 0.0
      %2488 = vmatpush1.msra.mxu0 %v2440
      %2489 = vmatprep.subr.mxu0 0.0
      %2490 = vmatpush1.msra.mxu0 %v2442
      %2491 = vmatprep.subr.mxu0 0.0
      %2492 = vmatpush1.msra.mxu0 %v2444
      %2493 = vmatprep.subr.mxu0 0.0
      %2494 = vmatpush1.msra.mxu0 %v2446
      %2495 = vmatprep.subr.mxu0 0.0
      %2496 = vmatpush1.msra.mxu0 %v2448
      %2497 = vmatprep.subr.mxu0 0.0
      %2498 = vmatpush1.msra.mxu0 %v2450
      %2499 = vmatprep.subr.mxu0 0.0
      %2500 = vmatpush1.msra.mxu0 0.0
      %2501 = vmatprep.subr.mxu0 0.0
      %2502 = vmatpush1.msra.mxu0 0.0
      %2503 = vmatprep.subr.mxu0 0.0
      %2504 = vmatpush1.msra.mxu0 0.0
      %2505 = vmatprep.subr.mxu0 0.0
      %2506 = vmatpush1.msra.mxu0 0.0
      %2507 = vmatprep.subr.mxu0 0.0
      %2508 = vmatpush1.msra.mxu0 0.0
      %2509 = vmatprep.subr.mxu0 0.0
      %2510 = vmatpush1.msra.mxu0 0.0
      %2511 = vmatprep.subr.mxu0 0.0
      %2512 = vmatpush1.msra.mxu0 0.0
      %2513 = vmatprep.subr.mxu0 0.0
      %2514 = vmatpush1.msra.mxu0 0.0
      %2515 = vmatprep.subr.mxu0 0.0
      %2516 = vmatpush1.msra.mxu0 0.0
      %2517 = vmatprep.subr.mxu0 0.0
      %2518 = vmatpush1.msra.mxu0 0.0
      %2519 = vmatprep.subr.mxu0 0.0
      %2520 = vmatpush1.msra.mxu0 0.0
      %2521 = vmatprep.subr.mxu0 0.0
      %2522 = vmatpush1.msra.mxu0 0.0
      %2523 = vmatprep.subr.mxu0 0.0
      %2524 = vmatpush1.msra.mxu0 0.0
      %2525 = vmatprep.subr.mxu0 0.0
      %2526 = vmatpush1.msra.mxu0 0.0
      %2527 = vmatprep.subr.mxu0 0.0
      %2528 = vmatpush1.msra.mxu0 0.0
      %2529 = vmatprep.subr.mxu0 0.0
      %2530 = vmatpush1.msra.mxu0 0.0
      %2531 = vmatprep.subr.mxu0 0.0
      %2532 = vmatpush1.msra.mxu0 0.0
      %2533 = vmatprep.subr.mxu0 0.0
      %2534 = vmatpush1.msra.mxu0 0.0
      %2535 = vmatprep.subr.mxu0 0.0
      %2536 = vmatpush1.msra.mxu0 0.0
      %2537 = vmatprep.subr.mxu0 0.0
      %2538 = vmatpush1.msra.mxu0 0.0
      %2539 = vmatprep.subr.mxu0 0.0
      %2540 = vmatpush1.msra.mxu0 0.0
      %2541 = vmatprep.subr.mxu0 0.0
      %2542 = vmatpush1.msra.mxu0 0.0
      %2543 = vmatprep.subr.mxu0 0.0
      %2544 = vmatpush1.msra.mxu0 0.0
      %2545 = vmatprep.subr.mxu0 0.0
      %2546 = vmatpush1.msra.mxu0 0.0
      %2547 = vmatprep.mubr.f32.mxu0 0.0
      %2548 = vmatmul.mubr.f32.gmra.mrb[0].mxu0 %v2460
      %v2549 = vpop.f32.mrb[0].mxu0
      %v2550 = vadd.f32 0.0, %v2549
      %v2551 = vpop.f32.mrb[0].mxu0
      %2552 = vmatprep.mubr.f32.mxu0 0.0
      %2553 = vmatmul.mubr.f32.gmra.mrb[0].mxu0 %v2463
      %v2554 = vpop.f32.mrb[0].mxu0
      %v2555 = vadd.f32 0.0, %v2554
      %v2556 = vpop.f32.mrb[0].mxu0
      %2557 = vmatprep.mubr.f32.mxu0 0.0
      %2558 = vmatmul.mubr.f32.gmra.mrb[0].mxu0 %v2466
      %v2559 = vpop.f32.mrb[0].mxu0
      %v2560 = vadd.f32 0.0, %v2559
      %v2561 = vpop.f32.mrb[0].mxu0
      %2562 = vmatprep.mubr.f32.mxu0 0.0
      %2563 = vmatmul.mubr.f32.gmra.mrb[0].mxu0 %v2469
      %v2564 = vpop.f32.mrb[0].mxu0
      %v2565 = vadd.f32 0.0, %v2564
      %v2566 = vpop.f32.mrb[0].mxu0
      %2567 = vmatprep.mubr.f32.mxu0 0.0
      %2568 = vmatmul.mubr.f32.gmra.mrb[0].mxu0 %v2472
      %v2569 = vpop.f32.mrb[0].mxu0
      %v2570 = vadd.f32 0.0, %v2569
      %v2571 = vpop.f32.mrb[0].mxu0
      %2572 = vmatprep.mubr.f32.mxu0 0.0
      %2573 = vmatmul.mubr.f32.gmra.mrb[0].mxu0 %v2475
      %v2574 = vpop.f32.mrb[0].mxu0
      %v2575 = vadd.f32 0.0, %v2574
      %v2576 = vpop.f32.mrb[0].mxu0
      %2577 = vmatprep.mubr.f32.mxu0 0.0
      %2578 = vmatmul.mubr.f32.gmra.mrb[0].mxu0 %v2478
      %v2579 = vpop.f32.mrb[0].mxu0
      %v2580 = vadd.f32 0.0, %v2579
      %v2581 = vpop.f32.mrb[0].mxu0
      %2582 = vmatprep.mubr.f32.mxu0 0.0
      %2583 = vmatmul.mubr.f32.gmra.mrb[0].mxu0 %v2481
      %v2584 = vpop.f32.mrb[0].mxu0
      %v2585 = vadd.f32 0.0, %v2584
      %v2586 = vpop.f32.mrb[0].mxu0
      %2587 = vdwg.mxu0
      %2596 = vrot.lane.b32.xlu0 %v1730, 8
      %v2597 = vpop.permute.xlu0 %2596
      %2598 = vrot.lane.b32.xlu0 %v1735, 8
      %v2599 = vpop.permute.xlu0 %2598
      %2600 = vrot.lane.b32.xlu0 %v1740, 8
      %v2601 = vpop.permute.xlu0 %2600
      %2602 = vrot.lane.b32.xlu0 %v1745, 8
      %v2603 = vpop.permute.xlu0 %2602
      %2604 = vrot.lane.b32.xlu0 %v1750, 8
      %v2605 = vpop.permute.xlu0 %2604
      %2606 = vrot.lane.b32.xlu0 %v1755, 8
      %v2607 = vpop.permute.xlu0 %2606
      %2608 = vrot.lane.b32.xlu0 %v1760, 8
      %v2609 = vpop.permute.xlu0 %2608
      %2610 = vrot.lane.b32.xlu0 %v1765, 8
      %v2611 = vpop.permute.xlu0 %2610
      %2628 = vrot.lane.b32.xlu0 %v2140, 16
      %v2629 = vpop.permute.xlu0 %2628
      %2630 = vrot.lane.b32.xlu0 %v2145, 16
      %v2631 = vpop.permute.xlu0 %2630
      %2632 = vrot.lane.b32.xlu0 %v2150, 16
      %v2633 = vpop.permute.xlu0 %2632
      %2634 = vrot.lane.b32.xlu0 %v2155, 16
      %v2635 = vpop.permute.xlu0 %2634
      %2636 = vrot.lane.b32.xlu0 %v2160, 16
      %v2637 = vpop.permute.xlu0 %2636
      %2638 = vrot.lane.b32.xlu0 %v2165, 16
      %v2639 = vpop.permute.xlu0 %2638
      %2640 = vrot.lane.b32.xlu0 %v2170, 16
      %v2641 = vpop.permute.xlu0 %2640
      %2642 = vrot.lane.b32.xlu0 %v2175, 16
      %v2643 = vpop.permute.xlu0 %2642
      %2660 = vrot.lane.b32.xlu0 %v2550, 24
      %v2661 = vpop.permute.xlu0 %2660
      %2662 = vrot.lane.b32.xlu0 %v2555, 24
      %v2663 = vpop.permute.xlu0 %2662
      %2664 = vrot.lane.b32.xlu0 %v2560, 24
      %v2665 = vpop.permute.xlu0 %2664
      %2666 = vrot.lane.b32.xlu0 %v2565, 24
      %v2667 = vpop.permute.xlu0 %2666
      %2668 = vrot.lane.b32.xlu0 %v2570, 24
      %v2669 = vpop.permute.xlu0 %2668
      %2670 = vrot.lane.b32.xlu0 %v2575, 24
      %v2671 = vpop.permute.xlu0 %2670
      %2672 = vrot.lane.b32.xlu0 %v2580, 24
      %v2673 = vpop.permute.xlu0 %2672
      %2674 = vrot.lane.b32.xlu0 %v2585, 24
      %v2675 = vpop.permute.xlu0 %2674
      %v2684 = vsel %vm962, %v1320, %v2597
      %v2685 = vsel %vm962, %v1325, %v2599
      %v2686 = vsel %vm962, %v1330, %v2601
      %v2687 = vsel %vm962, %v1335, %v2603
      %v2688 = vsel %vm962, %v1340, %v2605
      %v2689 = vsel %vm962, %v1345, %v2607
      %v2690 = vsel %vm962, %v1350, %v2609
      %v2691 = vsel %vm962, %v1355, %v2611
      %vm2692 = vcmask 130048
      %v2693 = vsel %vm2692, %v2684, %v2629
      %v2694 = vsel %vm2692, %v2685, %v2631
      %v2695 = vsel %vm2692, %v2686, %v2633
      %v2696 = vsel %vm2692, %v2687, %v2635
      %v2697 = vsel %vm2692, %v2688, %v2637
      %v2698 = vsel %vm2692, %v2689, %v2639
      %v2699 = vsel %vm2692, %v2690, %v2641
      %v2700 = vsel %vm2692, %v2691, %v2643
      %vm2701 = vcmask 195584
      %v2702 = vsel %vm2701, %v2693, %v2661
      %v2703 = vsel %vm2701, %v2694, %v2663
      %v2704 = vsel %vm2701, %v2695, %v2665
      %v2705 = vsel %vm2701, %v2696, %v2667
      %v2706 = vsel %vm2701, %v2697, %v2669
      %v2707 = vsel %vm2701, %v2698, %v2671
      %v2708 = vsel %vm2701, %v2699, %v2673
      %v2709 = vsel %vm2701, %v2700, %v2675
      %v2710 = vld [vmem:[%s9] sm:$0xff]
      %v2711 = vld [vmem:[%s9 + $0x8] sm:$0xff]
      %v2712 = vld [vmem:[%s9 + $0x10] sm:$0xff]
      %v2713 = vld [vmem:[%s9 + $0x18] sm:$0xff]
      %v2714 = vld [vmem:[%s10] sm:$0x1]
      %v2716 = vlaneseq
      %v2717 = vshrl.u32 %v2716, 7
      %v2718 = vsub.s32 0, %v2717
      %v2719 = vrot.slane %v2714, %v2718
      %v2722 = vsel %vm684, %v2702, 0
      %v2725 = vsel %vm684, %v2703, 0
      %v2728 = vsel %vm684, %v2704, 0
      %v2731 = vsel %vm684, %v2705, 0
      %v2734 = vsel %vm684, %v2706, 0
      %v2737 = vsel %vm684, %v2707, 0
      %v2740 = vsel %vm684, %v2708, 0
      %v2743 = vsel %vm684, %v2709, 0
      %2745 = vmatprep.subr.mxu0 0.0
      %2746 = vmatpush1.msra.mxu0 %v2710
      %2747 = vmatprep.subr.mxu0 0.0
      %2748 = vmatpush1.msra.mxu0 %v2711
      %2749 = vmatprep.subr.mxu0 0.0
      %2750 = vmatpush1.msra.mxu0 %v2712
      %2751 = vmatprep.subr.mxu0 0.0
      %2752 = vmatpush1.msra.mxu0 %v2713
      %2753 = vmatprep.subr.mxu0 0.0
      %2754 = vmatpush1.msra.mxu0 0.0
      %2755 = vmatprep.subr.mxu0 0.0
      %2756 = vmatpush1.msra.mxu0 0.0
      %2757 = vmatprep.subr.mxu0 0.0
      %2758 = vmatpush1.msra.mxu0 0.0
      %2759 = vmatprep.subr.mxu0 0.0
      %2760 = vmatpush1.msra.mxu0 0.0
      %2761 = vmatprep.subr.mxu0 0.0
      %2762 = vmatpush1.msra.mxu0 0.0
      %2763 = vmatprep.subr.mxu0 0.0
      %2764 = vmatpush1.msra.mxu0 0.0
      %2765 = vmatprep.subr.mxu0 0.0
      %2766 = vmatpush1.msra.mxu0 0.0
      %2767 = vmatprep.subr.mxu0 0.0
      %2768 = vmatpush1.msra.mxu0 0.0
      %2769 = vmatprep.subr.mxu0 0.0
      %2770 = vmatpush1.msra.mxu0 0.0
      %2771 = vmatprep.subr.mxu0 0.0
      %2772 = vmatpush1.msra.mxu0 0.0
      %2773 = vmatprep.subr.mxu0 0.0
      %2774 = vmatpush1.msra.mxu0 0.0
      %2775 = vmatprep.subr.mxu0 0.0
      %2776 = vmatpush1.msra.mxu0 0.0
      %2777 = vmatprep.subr.mxu0 0.0
      %2778 = vmatpush1.msra.mxu0 0.0
      %2779 = vmatprep.subr.mxu0 0.0
      %2780 = vmatpush1.msra.mxu0 0.0
      %2781 = vmatprep.subr.mxu0 0.0
      %2782 = vmatpush1.msra.mxu0 0.0
      %2783 = vmatprep.subr.mxu0 0.0
      %2784 = vmatpush1.msra.mxu0 0.0
      %2785 = vmatprep.subr.mxu0 0.0
      %2786 = vmatpush1.msra.mxu0 0.0
      %2787 = vmatprep.subr.mxu0 0.0
      %2788 = vmatpush1.msra.mxu0 0.0
      %2789 = vmatprep.subr.mxu0 0.0
      %2790 = vmatpush1.msra.mxu0 0.0
      %2791 = vmatprep.subr.mxu0 0.0
      %2792 = vmatpush1.msra.mxu0 0.0
      %2793 = vmatprep.subr.mxu0 0.0
      %2794 = vmatpush1.msra.mxu0 0.0
      %2795 = vmatprep.subr.mxu0 0.0
      %2796 = vmatpush1.msra.mxu0 0.0
      %2797 = vmatprep.subr.mxu0 0.0
      %2798 = vmatpush1.msra.mxu0 0.0
      %2799 = vmatprep.subr.mxu0 0.0
      %2800 = vmatpush1.msra.mxu0 0.0
      %2801 = vmatprep.subr.mxu0 0.0
      %2802 = vmatpush1.msra.mxu0 0.0
      %2803 = vmatprep.subr.mxu0 0.0
      %2804 = vmatpush1.msra.mxu0 0.0
      %2805 = vmatprep.subr.mxu0 0.0
      %2806 = vmatpush1.msra.mxu0 0.0
      %2807 = vmatprep.subr.mxu0 0.0
      %2808 = vmatpush1.msra.mxu0 0.0
      %2809 = vmatprep.mubr.f32.mxu0 0.0
      %2810 = vmatmul.mubr.f32.gmra.mrb[0].mxu0 %v2722
      %v2811 = vpop.f32.mrb[0].mxu0
      %v2812 = vadd.f32 %v2719, %v2811
      %v2813 = vpop.f32.mrb[0].mxu0
      %2814 = vmatprep.mubr.f32.mxu0 0.0
      %2815 = vmatmul.mubr.f32.gmra.mrb[0].mxu0 %v2725
      %v2816 = vpop.f32.mrb[0].mxu0
      %v2817 = vadd.f32 %v2719, %v2816
      %v2818 = vpop.f32.mrb[0].mxu0
      %2819 = vmatprep.mubr.f32.mxu0 0.0
      %2820 = vmatmul.mubr.f32.gmra.mrb[0].mxu0 %v2728
      %v2821 = vpop.f32.mrb[0].mxu0
      %v2822 = vadd.f32 %v2719, %v2821
      %v2823 = vpop.f32.mrb[0].mxu0
      %2824 = vmatprep.mubr.f32.mxu0 0.0
      %2825 = vmatmul.mubr.f32.gmra.mrb[0].mxu0 %v2731
      %v2826 = vpop.f32.mrb[0].mxu0
      %v2827 = vadd.f32 %v2719, %v2826
      %v2828 = vpop.f32.mrb[0].mxu0
      %2829 = vmatprep.mubr.f32.mxu0 0.0
      %2830 = vmatmul.mubr.f32.gmra.mrb[0].mxu0 %v2734
      %v2831 = vpop.f32.mrb[0].mxu0
      %v2832 = vadd.f32 %v2719, %v2831
      %v2833 = vpop.f32.mrb[0].mxu0
      %2834 = vmatprep.mubr.f32.mxu0 0.0
      %2835 = vmatmul.mubr.f32.gmra.mrb[0].mxu0 %v2737
      %v2836 = vpop.f32.mrb[0].mxu0
      %v2837 = vadd.f32 %v2719, %v2836
      %v2838 = vpop.f32.mrb[0].mxu0
      %2839 = vmatprep.mubr.f32.mxu0 0.0
      %2840 = vmatmul.mubr.f32.gmra.mrb[0].mxu0 %v2740
      %v2841 = vpop.f32.mrb[0].mxu0
      %v2842 = vadd.f32 %v2719, %v2841
      %v2843 = vpop.f32.mrb[0].mxu0
      %2844 = vmatprep.mubr.f32.mxu0 0.0
      %2845 = vmatmul.mubr.f32.gmra.mrb[0].mxu0 %v2743
      %v2846 = vpop.f32.mrb[0].mxu0
      %v2847 = vadd.f32 %v2719, %v2846
      %v2848 = vpop.f32.mrb[0].mxu0
      %2849 = vdwg.mxu0
      %v2850 = vadd.f32 %v2812, %v657
      %v2851 = vadd.f32 %v2817, %v658
      %v2852 = vadd.f32 %v2822, %v659
      %v2853 = vadd.f32 %v2827, %v660
      %v2854 = vadd.f32 %v2832, %v661
      %v2855 = vadd.f32 %v2837, %v662
      %v2856 = vadd.f32 %v2842, %v663
      %v2857 = vadd.f32 %v2847, %v664
      %v2858 = vld [vmem:[%s11] sm:$0x1]
      %v2859 = vld [vmem:[%s12] sm:$0x1]
      %v2860 = vsel %vm684, %v2850, 0.0
      %2861 = vadd.xlane.f32.xlu0 %v2860
      %v2862 = vpop.xlane.xlu0 %2861
      %v2863 = vsel %vm684, %v2851, 0.0
      %2864 = vadd.xlane.f32.xlu0 %v2863
      %v2865 = vpop.xlane.xlu0 %2864
      %v2866 = vsel %vm684, %v2852, 0.0
      %2867 = vadd.xlane.f32.xlu0 %v2866
      %v2868 = vpop.xlane.xlu0 %2867
      %v2869 = vsel %vm684, %v2853, 0.0
      %2870 = vadd.xlane.f32.xlu0 %v2869
      %v2871 = vpop.xlane.xlu0 %2870
      %v2872 = vsel %vm684, %v2854, 0.0
      %2873 = vadd.xlane.f32.xlu0 %v2872
      %v2874 = vpop.xlane.xlu0 %2873
      %v2875 = vsel %vm684, %v2855, 0.0
      %2876 = vadd.xlane.f32.xlu0 %v2875
      %v2877 = vpop.xlane.xlu0 %2876
      %v2878 = vsel %vm684, %v2856, 0.0
      %2879 = vadd.xlane.f32.xlu0 %v2878
      %v2880 = vpop.xlane.xlu0 %2879
      %v2881 = vsel %vm684, %v2857, 0.0
      %2882 = vadd.xlane.f32.xlu0 %v2881
      %v2883 = vpop.xlane.xlu0 %2882
      %v2884 = vrcp.pop 32.0
      %v2885 = vmul.f32 %v2862, %v2884
      %v2886 = vmul.f32 %v2865, %v2884
      %v2887 = vmul.f32 %v2868, %v2884
      %v2888 = vmul.f32 %v2871, %v2884
      %v2889 = vmul.f32 %v2874, %v2884
      %v2890 = vmul.f32 %v2877, %v2884
      %v2891 = vmul.f32 %v2880, %v2884
      %v2892 = vmul.f32 %v2883, %v2884
      %v2893 = vsub.f32 %v2850, %v2885
      %v2894 = vsub.f32 %v2851, %v2886
      %v2895 = vsub.f32 %v2852, %v2887
      %v2896 = vsub.f32 %v2853, %v2888
      %v2897 = vsub.f32 %v2854, %v2889
      %v2898 = vsub.f32 %v2855, %v2890
      %v2899 = vsub.f32 %v2856, %v2891
      %v2900 = vsub.f32 %v2857, %v2892
      %v2901 = vmul.f32 %v2893, %v2893
      %v2902 = vmul.f32 %v2894, %v2894
      %v2903 = vmul.f32 %v2895, %v2895
      %v2904 = vmul.f32 %v2896, %v2896
      %v2905 = vmul.f32 %v2897, %v2897
      %v2906 = vmul.f32 %v2898, %v2898
      %v2907 = vmul.f32 %v2899, %v2899
      %v2908 = vmul.f32 %v2900, %v2900
      %v2909 = vsel %vm684, %v2901, 0.0
      %2910 = vadd.xlane.f32.xlu0 %v2909
      %v2911 = vpop.xlane.xlu0 %2910
      %v2912 = vsel %vm684, %v2902, 0.0
      %2913 = vadd.xlane.f32.xlu0 %v2912
      %v2914 = vpop.xlane.xlu0 %2913
      %v2915 = vsel %vm684, %v2903, 0.0
      %2916 = vadd.xlane.f32.xlu0 %v2915
      %v2917 = vpop.xlane.xlu0 %2916
      %v2918 = vsel %vm684, %v2904, 0.0
      %2919 = vadd.xlane.f32.xlu0 %v2918
      %v2920 = vpop.xlane.xlu0 %2919
      %v2921 = vsel %vm684, %v2905, 0.0
      %2922 = vadd.xlane.f32.xlu0 %v2921
      %v2923 = vpop.xlane.xlu0 %2922
      %v2924 = vsel %vm684, %v2906, 0.0
      %2925 = vadd.xlane.f32.xlu0 %v2924
      %v2926 = vpop.xlane.xlu0 %2925
      %v2927 = vsel %vm684, %v2907, 0.0
      %2928 = vadd.xlane.f32.xlu0 %v2927
      %v2929 = vpop.xlane.xlu0 %2928
      %v2930 = vsel %vm684, %v2908, 0.0
      %2931 = vadd.xlane.f32.xlu0 %v2930
      %v2932 = vpop.xlane.xlu0 %2931
      %v2933 = vmul.f32 %v2911, %v2884
      %v2934 = vmul.f32 %v2914, %v2884
      %v2935 = vmul.f32 %v2917, %v2884
      %v2936 = vmul.f32 %v2920, %v2884
      %v2937 = vmul.f32 %v2923, %v2884
      %v2938 = vmul.f32 %v2926, %v2884
      %v2939 = vmul.f32 %v2929, %v2884
      %v2940 = vmul.f32 %v2932, %v2884
      %v2941 = vadd.f32 %v2933, 1e-05
      %v2942 = vadd.f32 %v2934, 1e-05
      %v2943 = vadd.f32 %v2935, 1e-05
      %v2944 = vadd.f32 %v2936, 1e-05
      %v2945 = vadd.f32 %v2937, 1e-05
      %v2946 = vadd.f32 %v2938, 1e-05
      %v2947 = vadd.f32 %v2939, 1e-05
      %v2948 = vadd.f32 %v2940, 1e-05
      %v2949 = vrsqrt.pop %v2941
      %v2950 = vrsqrt.pop %v2942
      %v2951 = vrsqrt.pop %v2943
      %v2952 = vrsqrt.pop %v2944
      %v2953 = vrsqrt.pop %v2945
      %v2954 = vrsqrt.pop %v2946
      %v2955 = vrsqrt.pop %v2947
      %v2956 = vrsqrt.pop %v2948
      %v2957 = vmul.f32 %v2893, %v2949
      %v2958 = vmul.f32 %v2894, %v2950
      %v2959 = vmul.f32 %v2895, %v2951
      %v2960 = vmul.f32 %v2896, %v2952
      %v2961 = vmul.f32 %v2897, %v2953
      %v2962 = vmul.f32 %v2898, %v2954
      %v2963 = vmul.f32 %v2899, %v2955
      %v2964 = vmul.f32 %v2900, %v2956
      %v2966 = vlaneseq
      %v2967 = vshrl.u32 %v2966, 7
      %v2968 = vsub.s32 0, %v2967
      %v2969 = vrot.slane %v2858, %v2968
      %v2971 = vmul.f32 %v2957, %v2969
      %v2972 = vmul.f32 %v2958, %v2969
      %v2973 = vmul.f32 %v2959, %v2969
      %v2974 = vmul.f32 %v2960, %v2969
      %v2975 = vmul.f32 %v2961, %v2969
      %v2976 = vmul.f32 %v2962, %v2969
      %v2977 = vmul.f32 %v2963, %v2969
      %v2978 = vmul.f32 %v2964, %v2969
      %v2980 = vlaneseq
      %v2981 = vshrl.u32 %v2980, 7
      %v2982 = vsub.s32 0, %v2981
      %v2983 = vrot.slane %v2859, %v2982
      %v2985 = vadd.f32 %v2971, %v2983
      %v2986 = vadd.f32 %v2972, %v2983
      %v2987 = vadd.f32 %v2973, %v2983
      %v2988 = vadd.f32 %v2974, %v2983
      %v2989 = vadd.f32 %v2975, %v2983
      %v2990 = vadd.f32 %v2976, %v2983
      %v2991 = vadd.f32 %v2977, %v2983
      %v2992 = vadd.f32 %v2978, %v2983
      %v2993 = vld [vmem:[%s13] sm:$0xff]
      %v2994 = vld [vmem:[%s13 + $0x8] sm:$0xff]
      %v2995 = vld [vmem:[%s13 + $0x10] sm:$0xff]
      %v2996 = vld [vmem:[%s13 + $0x18] sm:$0xff]
      %v2997 = vld [vmem:[%s14] sm:$0x1]
      %v2999 = vlaneseq
      %v3000 = vshrl.u32 %v2999, 7
      %v3001 = vsub.s32 0, %v3000
      %v3002 = vrot.slane %v2997, %v3001
      %v3005 = vsel %vm684, %v2985, 0
      %v3008 = vsel %vm684, %v2986, 0
      %v3011 = vsel %vm684, %v2987, 0
      %v3014 = vsel %vm684, %v2988, 0
      %v3017 = vsel %vm684, %v2989, 0
      %v3020 = vsel %vm684, %v2990, 0
      %v3023 = vsel %vm684, %v2991, 0
      %v3026 = vsel %vm684, %v2992, 0
      %3028 = vmatprep.subr.mxu0 0.0
      %3029 = vmatpush1.msra.mxu0 %v2993
      %3030 = vmatprep.subr.mxu0 0.0
      %3031 = vmatpush1.msra.mxu0 %v2994
      %3032 = vmatprep.subr.mxu0 0.0
      %3033 = vmatpush1.msra.mxu0 %v2995
      %3034 = vmatprep.subr.mxu0 0.0
      %3035 = vmatpush1.msra.mxu0 %v2996
      %3036 = vmatprep.subr.mxu0 0.0
      %3037 = vmatpush1.msra.mxu0 0.0
      %3038 = vmatprep.subr.mxu0 0.0
      %3039 = vmatpush1.msra.mxu0 0.0
      %3040 = vmatprep.subr.mxu0 0.0
      %3041 = vmatpush1.msra.mxu0 0.0
      %3042 = vmatprep.subr.mxu0 0.0
      %3043 = vmatpush1.msra.mxu0 0.0
      %3044 = vmatprep.subr.mxu0 0.0
      %3045 = vmatpush1.msra.mxu0 0.0
      %3046 = vmatprep.subr.mxu0 0.0
      %3047 = vmatpush1.msra.mxu0 0.0
      %3048 = vmatprep.subr.mxu0 0.0
      %3049 = vmatpush1.msra.mxu0 0.0
      %3050 = vmatprep.subr.mxu0 0.0
      %3051 = vmatpush1.msra.mxu0 0.0
      %3052 = vmatprep.subr.mxu0 0.0
      %3053 = vmatpush1.msra.mxu0 0.0
      %3054 = vmatprep.subr.mxu0 0.0
      %3055 = vmatpush1.msra.mxu0 0.0
      %3056 = vmatprep.subr.mxu0 0.0
      %3057 = vmatpush1.msra.mxu0 0.0
      %3058 = vmatprep.subr.mxu0 0.0
      %3059 = vmatpush1.msra.mxu0 0.0
      %3060 = vmatprep.subr.mxu0 0.0
      %3061 = vmatpush1.msra.mxu0 0.0
      %3062 = vmatprep.subr.mxu0 0.0
      %3063 = vmatpush1.msra.mxu0 0.0
      %3064 = vmatprep.subr.mxu0 0.0
      %3065 = vmatpush1.msra.mxu0 0.0
      %3066 = vmatprep.subr.mxu0 0.0
      %3067 = vmatpush1.msra.mxu0 0.0
      %3068 = vmatprep.subr.mxu0 0.0
      %3069 = vmatpush1.msra.mxu0 0.0
      %3070 = vmatprep.subr.mxu0 0.0
      %3071 = vmatpush1.msra.mxu0 0.0
      %3072 = vmatprep.subr.mxu0 0.0
      %3073 = vmatpush1.msra.mxu0 0.0
      %3074 = vmatprep.subr.mxu0 0.0
      %3075 = vmatpush1.msra.mxu0 0.0
      %3076 = vmatprep.subr.mxu0 0.0
      %3077 = vmatpush1.msra.mxu0 0.0
      %3078 = vmatprep.subr.mxu0 0.0
      %3079 = vmatpush1.msra.mxu0 0.0
      %3080 = vmatprep.subr.mxu0 0.0
      %3081 = vmatpush1.msra.mxu0 0.0
      %3082 = vmatprep.subr.mxu0 0.0
      %3083 = vmatpush1.msra.mxu0 0.0
      %3084 = vmatprep.subr.mxu0 0.0
      %3085 = vmatpush1.msra.mxu0 0.0
      %3086 = vmatprep.subr.mxu0 0.0
      %3087 = vmatpush1.msra.mxu0 0.0
      %3088 = vmatprep.subr.mxu0 0.0
      %3089 = vmatpush1.msra.mxu0 0.0
      %3090 = vmatprep.subr.mxu0 0.0
      %3091 = vmatpush1.msra.mxu0 0.0
      %3092 = vmatprep.mubr.f32.mxu0 0.0
      %3093 = vmatmul.mubr.f32.gmra.mrb[0].mxu0 %v3005
      %v3094 = vpop.f32.mrb[0].mxu0
      %v3095 = vadd.f32 %v3002, %v3094
      %v3096 = vpop.f32.mrb[0].mxu0
      %3097 = vmatprep.mubr.f32.mxu0 0.0
      %3098 = vmatmul.mubr.f32.gmra.mrb[0].mxu0 %v3008
      %v3099 = vpop.f32.mrb[0].mxu0
      %v3100 = vadd.f32 %v3002, %v3099
      %v3101 = vpop.f32.mrb[0].mxu0
      %3102 = vmatprep.mubr.f32.mxu0 0.0
      %3103 = vmatmul.mubr.f32.gmra.mrb[0].mxu0 %v3011
      %v3104 = vpop.f32.mrb[0].mxu0
      %v3105 = vadd.f32 %v3002, %v3104
      %v3106 = vpop.f32.mrb[0].mxu0
      %3107 = vmatprep.mubr.f32.mxu0 0.0
      %3108 = vmatmul.mubr.f32.gmra.mrb[0].mxu0 %v3014
      %v3109 = vpop.f32.mrb[0].mxu0
      %v3110 = vadd.f32 %v3002, %v3109
      %v3111 = vpop.f32.mrb[0].mxu0
      %3112 = vmatprep.mubr.f32.mxu0 0.0
      %3113 = vmatmul.mubr.f32.gmra.mrb[0].mxu0 %v3017
      %v3114 = vpop.f32.mrb[0].mxu0
      %v3115 = vadd.f32 %v3002, %v3114
      %v3116 = vpop.f32.mrb[0].mxu0
      %3117 = vmatprep.mubr.f32.mxu0 0.0
      %3118 = vmatmul.mubr.f32.gmra.mrb[0].mxu0 %v3020
      %v3119 = vpop.f32.mrb[0].mxu0
      %v3120 = vadd.f32 %v3002, %v3119
      %v3121 = vpop.f32.mrb[0].mxu0
      %3122 = vmatprep.mubr.f32.mxu0 0.0
      %3123 = vmatmul.mubr.f32.gmra.mrb[0].mxu0 %v3023
      %v3124 = vpop.f32.mrb[0].mxu0
      %v3125 = vadd.f32 %v3002, %v3124
      %v3126 = vpop.f32.mrb[0].mxu0
      %3127 = vmatprep.mubr.f32.mxu0 0.0
      %3128 = vmatmul.mubr.f32.gmra.mrb[0].mxu0 %v3026
      %v3129 = vpop.f32.mrb[0].mxu0
      %v3130 = vadd.f32 %v3002, %v3129
      %v3131 = vpop.f32.mrb[0].mxu0
      %3132 = vdwg.mxu0
      %v3133 = vmax.f32 %v3095, 0.0
      %v3134 = vmax.f32 %v3100, 0.0
      %v3135 = vmax.f32 %v3105, 0.0
      %v3136 = vmax.f32 %v3110, 0.0
      %v3137 = vmax.f32 %v3115, 0.0
      %v3138 = vmax.f32 %v3120, 0.0
      %v3139 = vmax.f32 %v3125, 0.0
      %v3140 = vmax.f32 %v3130, 0.0
      %v3141 = vld [vmem:[%s15] sm:$0xff]
      %v3142 = vld [vmem:[%s15 + $0x8] sm:$0xff]
      %v3143 = vld [vmem:[%s15 + $0x10] sm:$0xff]
      %v3144 = vld [vmem:[%s15 + $0x18] sm:$0xff]
      %v3145 = vld [vmem:[%s15 + $0x20] sm:$0xff]
      %v3146 = vld [vmem:[%s15 + $0x28] sm:$0xff]
      %v3147 = vld [vmem:[%s15 + $0x30] sm:$0xff]
      %v3148 = vld [vmem:[%s15 + $0x38] sm:$0xff]
      %v3149 = vld [vmem:[%s15 + $0x40] sm:$0xff]
      %v3150 = vld [vmem:[%s15 + $0x48] sm:$0xff]
      %v3151 = vld [vmem:[%s15 + $0x50] sm:$0xff]
      %v3152 = vld [vmem:[%s15 + $0x58] sm:$0xff]
      %v3153 = vld [vmem:[%s15 + $0x60] sm:$0xff]
      %v3154 = vld [vmem:[%s15 + $0x68] sm:$0xff]
      %v3155 = vld [vmem:[%s15 + $0x70] sm:$0xff]
      %v3156 = vld [vmem:[%s15 + $0x78] sm:$0xff]
      %v3157 = vld [vmem:[%s16] sm:$0x1]
      %v3159 = vlaneseq
      %v3160 = vshrl.u32 %v3159, 7
      %v3161 = vsub.s32 0, %v3160
      %v3162 = vrot.slane %v3157, %v3161
      %3164 = vmatprep.subr.mxu0 0.0
      %3165 = vmatpush1.msra.mxu0 %v3141
      %3166 = vmatprep.subr.mxu0 0.0
      %3167 = vmatpush1.msra.mxu0 %v3142
      %3168 = vmatprep.subr.mxu0 0.0
      %3169 = vmatpush1.msra.mxu0 %v3143
      %3170 = vmatprep.subr.mxu0 0.0
      %3171 = vmatpush1.msra.mxu0 %v3144
      %3172 = vmatprep.subr.mxu0 0.0
      %3173 = vmatpush1.msra.mxu0 %v3145
      %3174 = vmatprep.subr.mxu0 0.0
      %3175 = vmatpush1.msra.mxu0 %v3146
      %3176 = vmatprep.subr.mxu0 0.0
      %3177 = vmatpush1.msra.mxu0 %v3147
      %3178 = vmatprep.subr.mxu0 0.0
      %3179 = vmatpush1.msra.mxu0 %v3148
      %3180 = vmatprep.subr.mxu0 0.0
      %3181 = vmatpush1.msra.mxu0 %v3149
      %3182 = vmatprep.subr.mxu0 0.0
      %3183 = vmatpush1.msra.mxu0 %v3150
      %3184 = vmatprep.subr.mxu0 0.0
      %3185 = vmatpush1.msra.mxu0 %v3151
      %3186 = vmatprep.subr.mxu0 0.0
      %3187 = vmatpush1.msra.mxu0 %v3152
      %3188 = vmatprep.subr.mxu0 0.0
      %3189 = vmatpush1.msra.mxu0 %v3153
      %3190 = vmatprep.subr.mxu0 0.0
      %3191 = vmatpush1.msra.mxu0 %v3154
      %3192 = vmatprep.subr.mxu0 0.0
      %3193 = vmatpush1.msra.mxu0 %v3155
      %3194 = vmatprep.subr.mxu0 0.0
      %3195 = vmatpush1.msra.mxu0 %v3156
      %3196 = vmatprep.subr.mxu0 0.0
      %3197 = vmatpush1.msra.mxu0 0.0
      %3198 = vmatprep.subr.mxu0 0.0
      %3199 = vmatpush1.msra.mxu0 0.0
      %3200 = vmatprep.subr.mxu0 0.0
      %3201 = vmatpush1.msra.mxu0 0.0
      %3202 = vmatprep.subr.mxu0 0.0
      %3203 = vmatpush1.msra.mxu0 0.0
      %3204 = vmatprep.subr.mxu0 0.0
      %3205 = vmatpush1.msra.mxu0 0.0
      %3206 = vmatprep.subr.mxu0 0.0
      %3207 = vmatpush1.msra.mxu0 0.0
      %3208 = vmatprep.subr.mxu0 0.0
      %3209 = vmatpush1.msra.mxu0 0.0
      %3210 = vmatprep.subr.mxu0 0.0
      %3211 = vmatpush1.msra.mxu0 0.0
      %3212 = vmatprep.subr.mxu0 0.0
      %3213 = vmatpush1.msra.mxu0 0.0
      %3214 = vmatprep.subr.mxu0 0.0
      %3215 = vmatpush1.msra.mxu0 0.0
      %3216 = vmatprep.subr.mxu0 0.0
      %3217 = vmatpush1.msra.mxu0 0.0
      %3218 = vmatprep.subr.mxu0 0.0
      %3219 = vmatpush1.msra.mxu0 0.0
      %3220 = vmatprep.subr.mxu0 0.0
      %3221 = vmatpush1.msra.mxu0 0.0
      %3222 = vmatprep.subr.mxu0 0.0
      %3223 = vmatpush1.msra.mxu0 0.0
      %3224 = vmatprep.subr.mxu0 0.0
      %3225 = vmatpush1.msra.mxu0 0.0
      %3226 = vmatprep.subr.mxu0 0.0
      %3227 = vmatpush1.msra.mxu0 0.0
      %3228 = vmatprep.mubr.f32.mxu0 0.0
      %3229 = vmatmul.mubr.f32.gmra.mrb[0].mxu0 %v3133
      %v3230 = vpop.f32.mrb[0].mxu0
      %v3231 = vadd.f32 %v3162, %v3230
      %v3232 = vpop.f32.mrb[0].mxu0
      %3233 = vmatprep.mubr.f32.mxu0 0.0
      %3234 = vmatmul.mubr.f32.gmra.mrb[0].mxu0 %v3134
      %v3235 = vpop.f32.mrb[0].mxu0
      %v3236 = vadd.f32 %v3162, %v3235
      %v3237 = vpop.f32.mrb[0].mxu0
      %3238 = vmatprep.mubr.f32.mxu0 0.0
      %3239 = vmatmul.mubr.f32.gmra.mrb[0].mxu0 %v3135
      %v3240 = vpop.f32.mrb[0].mxu0
      %v3241 = vadd.f32 %v3162, %v3240
      %v3242 = vpop.f32.mrb[0].mxu0
      %3243 = vmatprep.mubr.f32.mxu0 0.0
      %3244 = vmatmul.mubr.f32.gmra.mrb[0].mxu0 %v3136
      %v3245 = vpop.f32.mrb[0].mxu0
      %v3246 = vadd.f32 %v3162, %v3245
      %v3247 = vpop.f32.mrb[0].mxu0
      %3248 = vmatprep.mubr.f32.mxu0 0.0
      %3249 = vmatmul.mubr.f32.gmra.mrb[0].mxu0 %v3137
      %v3250 = vpop.f32.mrb[0].mxu0
      %v3251 = vadd.f32 %v3162, %v3250
      %v3252 = vpop.f32.mrb[0].mxu0
      %3253 = vmatprep.mubr.f32.mxu0 0.0
      %3254 = vmatmul.mubr.f32.gmra.mrb[0].mxu0 %v3138
      %v3255 = vpop.f32.mrb[0].mxu0
      %v3256 = vadd.f32 %v3162, %v3255
      %v3257 = vpop.f32.mrb[0].mxu0
      %3258 = vmatprep.mubr.f32.mxu0 0.0
      %3259 = vmatmul.mubr.f32.gmra.mrb[0].mxu0 %v3139
      %v3260 = vpop.f32.mrb[0].mxu0
      %v3261 = vadd.f32 %v3162, %v3260
      %v3262 = vpop.f32.mrb[0].mxu0
      %3263 = vmatprep.mubr.f32.mxu0 0.0
      %3264 = vmatmul.mubr.f32.gmra.mrb[0].mxu0 %v3140
      %v3265 = vpop.f32.mrb[0].mxu0
      %v3266 = vadd.f32 %v3162, %v3265
      %v3267 = vpop.f32.mrb[0].mxu0
      %3268 = vdwg.mxu0
      %v3269 = vadd.f32 %v2985, %v3231
      %v3270 = vadd.f32 %v2986, %v3236
      %v3271 = vadd.f32 %v2987, %v3241
      %v3272 = vadd.f32 %v2988, %v3246
      %v3273 = vadd.f32 %v2989, %v3251
      %v3274 = vadd.f32 %v2990, %v3256
      %v3275 = vadd.f32 %v2991, %v3261
      %v3276 = vadd.f32 %v2992, %v3266
      %v3277 = vld [vmem:[%s17] sm:$0x1]
      %v3278 = vld [vmem:[%s18] sm:$0x1]
      %v3279 = vsel %vm684, %v3269, 0.0
      %3280 = vadd.xlane.f32.xlu0 %v3279
      %v3281 = vpop.xlane.xlu0 %3280
      %v3282 = vsel %vm684, %v3270, 0.0
      %3283 = vadd.xlane.f32.xlu0 %v3282
      %v3284 = vpop.xlane.xlu0 %3283
      %v3285 = vsel %vm684, %v3271, 0.0
      %3286 = vadd.xlane.f32.xlu0 %v3285
      %v3287 = vpop.xlane.xlu0 %3286
      %v3288 = vsel %vm684, %v3272, 0.0
      %3289 = vadd.xlane.f32.xlu0 %v3288
      %v3290 = vpop.xlane.xlu0 %3289
      %v3291 = vsel %vm684, %v3273, 0.0
      %3292 = vadd.xlane.f32.xlu0 %v3291
      %v3293 = vpop.xlane.xlu0 %3292
      %v3294 = vsel %vm684, %v3274, 0.0
      %3295 = vadd.xlane.f32.xlu0 %v3294
      %v3296 = vpop.xlane.xlu0 %3295
      %v3297 = vsel %vm684, %v3275, 0.0
      %3298 = vadd.xlane.f32.xlu0 %v3297
      %v3299 = vpop.xlane.xlu0 %3298
      %v3300 = vsel %vm684, %v3276, 0.0
      %3301 = vadd.xlane.f32.xlu0 %v3300
      %v3302 = vpop.xlane.xlu0 %3301
      %v3303 = vmul.f32 %v3281, %v2884
      %v3304 = vmul.f32 %v3284, %v2884
      %v3305 = vmul.f32 %v3287, %v2884
      %v3306 = vmul.f32 %v3290, %v2884
      %v3307 = vmul.f32 %v3293, %v2884
      %v3308 = vmul.f32 %v3296, %v2884
      %v3309 = vmul.f32 %v3299, %v2884
      %v3310 = vmul.f32 %v3302, %v2884
      %v3311 = vsub.f32 %v3269, %v3303
      %v3312 = vsub.f32 %v3270, %v3304
      %v3313 = vsub.f32 %v3271, %v3305
      %v3314 = vsub.f32 %v3272, %v3306
      %v3315 = vsub.f32 %v3273, %v3307
      %v3316 = vsub.f32 %v3274, %v3308
      %v3317 = vsub.f32 %v3275, %v3309
      %v3318 = vsub.f32 %v3276, %v3310
      %v3319 = vmul.f32 %v3311, %v3311
      %v3320 = vmul.f32 %v3312, %v3312
      %v3321 = vmul.f32 %v3313, %v3313
      %v3322 = vmul.f32 %v3314, %v3314
      %v3323 = vmul.f32 %v3315, %v3315
      %v3324 = vmul.f32 %v3316, %v3316
      %v3325 = vmul.f32 %v3317, %v3317
      %v3326 = vmul.f32 %v3318, %v3318
      %v3327 = vsel %vm684, %v3319, 0.0
      %3328 = vadd.xlane.f32.xlu0 %v3327
      %v3329 = vpop.xlane.xlu0 %3328
      %v3330 = vsel %vm684, %v3320, 0.0
      %3331 = vadd.xlane.f32.xlu0 %v3330
      %v3332 = vpop.xlane.xlu0 %3331
      %v3333 = vsel %vm684, %v3321, 0.0
      %3334 = vadd.xlane.f32.xlu0 %v3333
      %v3335 = vpop.xlane.xlu0 %3334
      %v3336 = vsel %vm684, %v3322, 0.0
      %3337 = vadd.xlane.f32.xlu0 %v3336
      %v3338 = vpop.xlane.xlu0 %3337
      %v3339 = vsel %vm684, %v3323, 0.0
      %3340 = vadd.xlane.f32.xlu0 %v3339
      %v3341 = vpop.xlane.xlu0 %3340
      %v3342 = vsel %vm684, %v3324, 0.0
      %3343 = vadd.xlane.f32.xlu0 %v3342
      %v3344 = vpop.xlane.xlu0 %3343
      %v3345 = vsel %vm684, %v3325, 0.0
      %3346 = vadd.xlane.f32.xlu0 %v3345
      %v3347 = vpop.xlane.xlu0 %3346
      %v3348 = vsel %vm684, %v3326, 0.0
      %3349 = vadd.xlane.f32.xlu0 %v3348
      %v3350 = vpop.xlane.xlu0 %3349
      %v3351 = vmul.f32 %v3329, %v2884
      %v3352 = vmul.f32 %v3332, %v2884
      %v3353 = vmul.f32 %v3335, %v2884
      %v3354 = vmul.f32 %v3338, %v2884
      %v3355 = vmul.f32 %v3341, %v2884
      %v3356 = vmul.f32 %v3344, %v2884
      %v3357 = vmul.f32 %v3347, %v2884
      %v3358 = vmul.f32 %v3350, %v2884
      %v3359 = vadd.f32 %v3351, 1e-05
      %v3360 = vadd.f32 %v3352, 1e-05
      %v3361 = vadd.f32 %v3353, 1e-05
      %v3362 = vadd.f32 %v3354, 1e-05
      %v3363 = vadd.f32 %v3355, 1e-05
      %v3364 = vadd.f32 %v3356, 1e-05
      %v3365 = vadd.f32 %v3357, 1e-05
      %v3366 = vadd.f32 %v3358, 1e-05
      %v3367 = vrsqrt.pop %v3359
      %v3368 = vrsqrt.pop %v3360
      %v3369 = vrsqrt.pop %v3361
      %v3370 = vrsqrt.pop %v3362
      %v3371 = vrsqrt.pop %v3363
      %v3372 = vrsqrt.pop %v3364
      %v3373 = vrsqrt.pop %v3365
      %v3374 = vrsqrt.pop %v3366
      %v3375 = vmul.f32 %v3311, %v3367
      %v3376 = vmul.f32 %v3312, %v3368
      %v3377 = vmul.f32 %v3313, %v3369
      %v3378 = vmul.f32 %v3314, %v3370
      %v3379 = vmul.f32 %v3315, %v3371
      %v3380 = vmul.f32 %v3316, %v3372
      %v3381 = vmul.f32 %v3317, %v3373
      %v3382 = vmul.f32 %v3318, %v3374
      %v3384 = vlaneseq
      %v3385 = vshrl.u32 %v3384, 7
      %v3386 = vsub.s32 0, %v3385
      %v3387 = vrot.slane %v3277, %v3386
      %v3389 = vmul.f32 %v3375, %v3387
      %v3390 = vmul.f32 %v3376, %v3387
      %v3391 = vmul.f32 %v3377, %v3387
      %v3392 = vmul.f32 %v3378, %v3387
      %v3393 = vmul.f32 %v3379, %v3387
      %v3394 = vmul.f32 %v3380, %v3387
      %v3395 = vmul.f32 %v3381, %v3387
      %v3396 = vmul.f32 %v3382, %v3387
      %v3398 = vlaneseq
      %v3399 = vshrl.u32 %v3398, 7
      %v3400 = vsub.s32 0, %v3399
      %v3401 = vrot.slane %v3278, %v3400
      %v3403 = vadd.f32 %v3389, %v3401
      %v3404 = vadd.f32 %v3390, %v3401
      %v3405 = vadd.f32 %v3391, %v3401
      %v3406 = vadd.f32 %v3392, %v3401
      %v3407 = vadd.f32 %v3393, %v3401
      %v3408 = vadd.f32 %v3394, %v3401
      %v3409 = vadd.f32 %v3395, %v3401
      %v3410 = vadd.f32 %v3396, %v3401
      %3411 = vst.msk [vmem:[%s602] sm:$0xff] %vm684, %v3403
      %3412 = vst.msk [vmem:[%s602 + $0x8] sm:$0xff] %vm684, %v3404
      %3413 = vst.msk [vmem:[%s602 + $0x10] sm:$0xff] %vm684, %v3405
      %3414 = vst.msk [vmem:[%s602 + $0x18] sm:$0xff] %vm684, %v3406
      %3415 = vst.msk [vmem:[%s602 + $0x20] sm:$0xff] %vm684, %v3407
      %3416 = vst.msk [vmem:[%s602 + $0x28] sm:$0xff] %vm684, %v3408
      %3417 = vst.msk [vmem:[%s602 + $0x30] sm:$0xff] %vm684, %v3409
      %3418 = vst.msk [vmem:[%s602 + $0x38] sm:$0xff] %vm684, %v3410
      %p3419 = scmp.lt.s32.totalorder %s30, 1
      %s3420 = scalar_select %p3419, %s30, 1
      %s3421 = smul.addr %s3420, 8
      %s3422 = smul.addr %s3421, 8
      %s3423 = scalar_lea.vmem %s19, %s3422
      // Predicated region
      $region97: #{scalekd_forward.9} parent=95 // pred_check
        %p3424 = pneg %p452
      $region98: #{scalekd_forward.9} parent=95 // pred_check_branch
        %3426 = sbr.rel (%p3424) target = $region100
      $region99: #{scalekd_forward.9} parent=95 // pred_region
        _
      $region100: #{scalekd_forward.9} parent=95 // pred_fallthru
        _
    $region96: #{scalekd_forward.9} parent=5 // pred_fallthru
      _
    %p3427 = scmp.le.s32.totalorder 2, %s25
    // Predicated region
    $region101: #{scalekd_forward.9} parent=5 // pred_check
      %p3428 = pneg %p3427
    $region102: #{scalekd_forward.9} parent=5 // pred_check_branch
      %3430 = sbr.rel (%p3428) target = $region104
    $region103: #{scalekd_forward.9} parent=5 // pred_region
      %s3431 = ssub.s32 %s25, 2
      // Predicated region
      $region105: #{scalekd_forward.9} parent=103 // pred_check
        %p3432 = pneg %p458
      $region106: #{scalekd_forward.9} parent=103 // pred_check_branch
        %3434 = sbr.rel (%p3432) target = $region108
      $region107: #{scalekd_forward.9} parent=103 // pred_region
        %p3435 = scmp.lt.s32.totalorder %s31, 1
        %s3436 = scalar_select %p3435, %s31, 1
        %s3437 = smul.addr %s3436, 8
        %s3438 = smul.addr %s3437, 8
        %s3439 = scalar_lea.vmem %s19, %s3438
      $region108: #{scalekd_forward.9} parent=103 // pred_fallthru
        _
    $region104: #{scalekd_forward.9} parent=5 // pred_fallthru
      _
  $region6: #{scalekd_forward.9} parent=0 // loop_footer
    %s29 = sadd.s32 1, %s25
  $region7: #{scalekd_forward.9} parent=0 // loop_footer_branch
    %24 = sbr.rel target = $region3
  $region8: #{scalekd_forward.9} parent=0 // loop_exit
    _

</llo_original>
